<compile_context>
chip_gen: v6e
topology: v6e:2x2x1
jax: 0.10.0
libtpu: 0.0.40
codegen_flags: <defaults>
</compile_context>

<pallas_src>
import math

import jax
import jax.numpy as jnp
from jax.experimental import pallas as pl
from jax.experimental.pallas import tpu as pltpu

SELU_ALPHA = 1.6732632423543772848170429916717
SELU_SCALE = 1.0507009873554804934193349852946
BN_EPS = 1e-5


# ---------------------------------------------------------------------------
# Pallas kernels
# ---------------------------------------------------------------------------
def _selu(y):
    # f32 math (v5e has no bf16 VPU/EUP path).
    return SELU_SCALE * jnp.where(y > 0, y, SELU_ALPHA * (jnp.exp(y) - 1.0))


def _store_col_stats(s_ref, y):
    # Per-tile column [sum, sum_of_squares] as two lane-dense row stores
    # (avoids an in-VMEM concatenate/relayout per tile).
    s_ref[0, 0:1, :] = jnp.sum(y, axis=0, keepdims=True)
    s_ref[0, 1:2, :] = jnp.sum(y * y, axis=0, keepdims=True)


def _dual_conv_stats_kernel(x_ref, w_ref, y_ref, s_ref):
    # road1-conv1 and road2-conv fused: one x read, ONE wide MXU dot into the
    # concatenated (tm, 2*GCp) output; merged BN1/BN3 stats.
    y = jnp.dot(x_ref[...], w_ref[...], preferred_element_type=jnp.float32)
    y_ref[...] = y.astype(y_ref.dtype)          # bf16 intermediate to HBM
    _store_col_stats(s_ref, y)


def _act_conv_stats_kernel(y_ref, a_ref, w_ref, o_ref, s_ref):
    # SELU(BN1(y1)) fused as prologue of the road1 second SO3 conv (+BN2 stats).
    h = _selu(y_ref[...].astype(jnp.float32) * a_ref[0:1, :] + a_ref[1:2, :])
    o = jnp.dot(h.astype(jnp.bfloat16), w_ref[...],
                preferred_element_type=jnp.float32)
    o_ref[...] = o.astype(o_ref.dtype)          # bf16 intermediate to HBM
    _store_col_stats(s_ref, o)


def _residual_stats_kernel(y2_ref, y3_ref, a2_ref, a3_ref, s_ref, st_ref):
    # x1 = SELU(BN2(y2)); x2 = SELU(BN3(y3)); s = x1 + x2 (+ BN4 stats).
    x1 = _selu(y2_ref[...].astype(jnp.float32) * a2_ref[0:1, :] + a2_ref[1:2, :])
    x2 = _selu(y3_ref[...].astype(jnp.float32) * a3_ref[0:1, :] + a3_ref[1:2, :])
    s = x1 + x2
    s_ref[...] = s.astype(s_ref.dtype)          # bf16 intermediate to HBM
    _store_col_stats(st_ref, s)


def _affine_selu_kernel(s_ref, a_ref, o_ref):
    # Final road3: SELU(BN4(s)); f32 output.
    o_ref[...] = _selu(s_ref[...].astype(jnp.float32) * a_ref[0:1, :]
                       + a_ref[1:2, :])


# ---------------------------------------------------------------------------
# Tiling / compiler helpers
# ---------------------------------------------------------------------------
_VMEM_LIMIT = None


def _vmem_limit_bytes():
    """Raise the scoped-VMEM limit with headroom, chip aware (v5e/v6e: 128 MiB
    physical, v7x: 64 MiB)."""
    global _VMEM_LIMIT
    if _VMEM_LIMIT is None:
        try:
            phys = pltpu.get_tpu_info().vmem_capacity_bytes
        except Exception:
            phys = 64 << 20                      # conservative (v7x-sized)
        _VMEM_LIMIT = int(max(32 << 20, min(phys - (8 << 20), 100 << 20)))
    return _VMEM_LIMIT


def _cparams():
    return pltpu.CompilerParams(dimension_semantics=("parallel",),
                                vmem_limit_bytes=_vmem_limit_bytes())


def _pick_row_tile(M, bytes_per_row, target=1024, vmem_budget=16 << 20):
    """Largest multiple-of-8 divisor of M that keeps >=2 row tiles (pipelining
    + both TensorCores), fits the per-tile VMEM budget (bytes_per_row already
    includes double-buffering), is <= target, and prefers an EVEN tile count
    so the two v7x TensorCores stay balanced."""
    cap = min(target, vmem_budget // max(bytes_per_row, 1), M // 2)
    cap = (cap // 8) * 8
    if cap < 8:
        return M        # tiny M: single full-height block (still correct)
    best_any = None
    t = cap
    while t >= 8:
        if M % t == 0:
            if (M // t) % 2 == 0:
                return t                      # largest tile, even tile count
            if best_any is None:
                best_any = t
        t -= 8
    return best_any if best_any is not None else M


# ---------------------------------------------------------------------------
# Pallas wrappers
# ---------------------------------------------------------------------------
def dual_conv_so3(x_rows, w13):
    """x_rows: (M, K) bf16; w13: (K, 2*GCp) bf16 (conv1 | conv3 concatenated).
    Returns y13 (M, 2*GCp) bf16 and per-tile column stats (gm, 2, 2*GCp) f32."""
    M, K = x_rows.shape
    N2 = w13.shape[1]
    tm = _pick_row_tile(M, 2 * (2 * K) + 2 * (2 * N2))
    gm = M // tm
    return pl.pallas_call(
        _dual_conv_stats_kernel,
        out_shape=(jax.ShapeDtypeStruct((M, N2), jnp.bfloat16),
                   jax.ShapeDtypeStruct((gm, 2, N2), jnp.float32)),
        grid=(gm,),
        in_specs=[
            pl.BlockSpec((tm, K), lambda i: (i, 0)),
            pl.BlockSpec((K, N2), lambda i: (0, 0)),
        ],
        out_specs=(
            pl.BlockSpec((tm, N2), lambda i: (i, 0)),
            pl.BlockSpec((1, 2, N2), lambda i: (i, 0, 0)),
        ),
        compiler_params=_cparams(),
    )(x_rows, w13)


def act_conv_so3(y13, aff1, w2):
    """SELU(BN1(y1)) -> @ w2 -> y2 (bf16), plus per-tile column stats of y2.
    y1 is sliced out of the concatenated y13 purely via the BlockSpec index."""
    M = y13.shape[0]
    GCp = w2.shape[0]
    tm = _pick_row_tile(M, 2 * (2 * GCp) + 2 * (2 * GCp))
    gm = M // tm
    return pl.pallas_call(
        _act_conv_stats_kernel,
        out_shape=(jax.ShapeDtypeStruct((M, GCp), jnp.bfloat16),
                   jax.ShapeDtypeStruct((gm, 2, GCp), jnp.float32)),
        grid=(gm,),
        in_specs=[
            pl.BlockSpec((tm, GCp), lambda i: (i, 0)),    # y1 = left half of y13
            pl.BlockSpec((2, GCp), lambda i: (0, 0)),
            pl.BlockSpec((GCp, GCp), lambda i: (0, 0)),
        ],
        out_specs=(pl.BlockSpec((tm, GCp), lambda i: (i, 0)),
                   pl.BlockSpec((1, 2, GCp), lambda i: (i, 0, 0))),
        compiler_params=_cparams(),
    )(y13, aff1, w2)


def residual_bn_stats(y2, y13, aff2, aff3):
    """s = SELU(BN2(y2)) + SELU(BN3(y3)) (bf16), plus per-tile column stats.
    y3 is the right half of y13, selected via BlockSpec index_map."""
    M, GCp = y2.shape
    tm = _pick_row_tile(M, 3 * (2 * 2 * GCp))
    gm = M // tm
    return pl.pallas_call(
        _residual_stats_kernel,
        out_shape=(jax.ShapeDtypeStruct((M, GCp), jnp.bfloat16),
                   jax.ShapeDtypeStruct((gm, 2, GCp), jnp.float32)),
        grid=(gm,),
        in_specs=[
            pl.BlockSpec((tm, GCp), lambda i: (i, 0)),
            pl.BlockSpec((tm, GCp), lambda i: (i, 1)),    # y3 = right half of y13
            pl.BlockSpec((2, GCp), lambda i: (0, 0)),
            pl.BlockSpec((2, GCp), lambda i: (0, 0)),
        ],
        out_specs=(pl.BlockSpec((tm, GCp), lambda i: (i, 0)),
                   pl.BlockSpec((1, 2, GCp), lambda i: (i, 0, 0))),
        compiler_params=_cparams(),
    )(y2, y13, aff2, aff3)


def affine_selu(s, aff):
    """out = SELU(BN4(s)) with precomputed per-column scale/shift (f32 out)."""
    M, GCp = s.shape
    tm = _pick_row_tile(M, 2 * (2 + 4) * GCp)
    gm = M // tm
    return pl.pallas_call(
        _affine_selu_kernel,
        out_shape=jax.ShapeDtypeStruct((M, GCp), jnp.float32),
        grid=(gm,),
        in_specs=[pl.BlockSpec((tm, GCp), lambda i: (i, 0)),
                  pl.BlockSpec((2, GCp), lambda i: (0, 0))],
        out_specs=pl.BlockSpec((tm, GCp), lambda i: (i, 0)),
        compiler_params=_cparams(),
    )(s, aff)


# ---------------------------------------------------------------------------
# BN stats -> per-column affine (tiny XLA glue)
# ---------------------------------------------------------------------------
def bn_affine_from_stats(stats, G, C, GCp, count, gamma, beta):
    """stats: (gm, 2, GCp) per-tile column [sum, sumsq]; columns ordered
    (channel-major, gamma-minor) with zero padding at the end.
    Returns (2, GCp) = [scale, shift] implementing training-mode BatchNorm3d
    (per-channel over batch+spatial) folded into a per-(channel, gamma) affine;
    padded columns get (0, 0) so they stay exactly zero downstream."""
    tot = jnp.sum(stats, axis=0)                               # (2, GCp)
    ch = jnp.sum(tot[:, :C * G].reshape(2, C, G), axis=2)      # (2, C)
    mean = ch[0] / count
    var = jnp.maximum(ch[1] / count - mean * mean, 0.0)        # biased (BN train)
    scale = gamma * jax.lax.rsqrt(var + BN_EPS)
    shift = beta - mean * scale
    scale_c = jnp.repeat(scale, G)                             # (C*G,) c-major, g-minor
    shift_c = jnp.repeat(shift, G)
    pad = GCp - C * G
    if pad:
        z = jnp.zeros((pad,), jnp.float32)
        scale_c = jnp.concatenate([scale_c, z])
        shift_c = jnp.concatenate([shift_c, z])
    return jnp.stack([scale_c, shift_c], axis=0)


# ---------------------------------------------------------------------------
# Parameter setup (glue)
# ---------------------------------------------------------------------------
def _round_up(x, m):
    return ((x + m - 1) // m) * m


def build_big_weight(w, scaling, rows_pad=None, cols_pad=None):
    """w: (Cin, Cout, G) SO3 equatorial kernel -> (Kp, Np) bf16 matmul weight.

    Rows ordered (cin-major, gamma'-minor), cols (cout-major, gamma-minor):
      Wbig[ci*G + g', co*G + g] = w[ci, co, (g'-g) % G] * scaling
    Zero-padded to (rows_pad, cols_pad) so the lane dim is a 128 multiple.
    """
    Cin, Cout, G = w.shape
    gp = jnp.arange(G)[:, None]
    g = jnp.arange(G)[None, :]
    k = (gp - g) % G                        # (G', G)
    wk = w[:, :, k]                         # (Cin, Cout, G', G)
    wk = jnp.transpose(wk, (0, 2, 1, 3))    # (Cin, G', Cout, G)
    big = wk.reshape(Cin * G, Cout * G) * scaling
    K0, N0 = Cin * G, Cout * G
    Kp = rows_pad if rows_pad is not None else K0
    Np = cols_pad if cols_pad is not None else N0
    big = jnp.pad(big, ((0, Kp - K0), (0, Np - N0)))
    return big.astype(jnp.bfloat16)


def init_params(key, in_features, num_out_capsules, out_capsule_dim, b_in, b_out):
    Cin = in_features
    Cout = num_out_capsules * out_capsule_dim
    G = 2 * b_in
    GC = Cout * G
    GCp = max(128, _round_up(GC, 128))
    k1, k2, k3 = jax.random.split(key, 3)

    def so3_scaling(nfeat_in):
        return 1.0 / math.sqrt(G * nfeat_in * (b_out ** 3) / (b_in ** 3))

    w1 = jax.random.uniform(k1, (Cin, Cout, G), minval=-1.0, maxval=1.0)
    w2 = jax.random.uniform(k2, (Cout, Cout, G), minval=-1.0, maxval=1.0)
    w3 = jax.random.uniform(k3, (Cin, Cout, G), minval=-1.0, maxval=1.0)

    w1_big = build_big_weight(w1, so3_scaling(Cin), cols_pad=GCp)
    w3_big = build_big_weight(w3, so3_scaling(Cin), cols_pad=GCp)

    # Conv biases are zero-initialised and any per-channel constant is cancelled
    # by the training-mode BN mean subtraction -> omitted entirely.
    return dict(
        Cin=Cin, Cout=Cout, G=G, GC=GC, GCp=GCp,
        num_out_capsules=num_out_capsules, out_capsule_dim=out_capsule_dim,
        # conv1 and conv3 share the input -> concatenated RHS for one wide dot.
        w13_big=jnp.concatenate([w1_big, w3_big], axis=1),      # (Cin*G, 2*GCp)
        w2_big=build_big_weight(w2, so3_scaling(Cout),
                                rows_pad=GCp, cols_pad=GCp),      # (GCp, GCp)
        bn1_g=jnp.ones((Cout,), jnp.float32), bn1_b=jnp.zeros((Cout,), jnp.float32),
        bn2_g=jnp.ones((Cout,), jnp.float32), bn2_b=jnp.zeros((Cout,), jnp.float32),
        bn3_g=jnp.ones((Cout,), jnp.float32), bn3_b=jnp.zeros((Cout,), jnp.float32),
        bn4_g=jnp.ones((Cout,), jnp.float32), bn4_b=jnp.zeros((Cout,), jnp.float32),
    )


# ---------------------------------------------------------------------------
# Forward pass (CapsulePredictionLayer with CapsuleResidualBlock)
# ---------------------------------------------------------------------------
def capsule_prediction_forward(x, params):
    """x: (N, num_in_caps, in_dim, 2b, 2b, 2b) -> (N, num_in, num_out, out_dim, 2b, 2b, 2b)."""
    N, NIC, Cin, A, A1, A2 = x.shape
    assert A == A1 == A2
    NB, G = N * NIC, A
    Cout, GC, GCp = params["Cout"], params["GC"], params["GCp"]
    M = NB * A * A
    count = M * G      # BN element count per channel (N * D * H * W)

    # NCDHW -> rows=(nb, alpha, beta), cols=(cin, gamma); gamma stays the
    # contiguous minor axis so this transpose is near copy-speed in XLA.
    xcl = jnp.transpose(x.reshape(NB, Cin, A, A, G), (0, 2, 3, 1, 4))
    x_rows = xcl.reshape(M, Cin * G).astype(jnp.bfloat16)

    # road1-conv1 + road2-conv: one wide dot per tile + merged BN1/BN3 stats.
    y13, s13 = dual_conv_so3(x_rows, params["w13_big"])
    aff1 = bn_affine_from_stats(s13[:, :, :GCp], G, Cout, GCp, count,
                                params["bn1_g"], params["bn1_b"])
    aff3 = bn_affine_from_stats(s13[:, :, GCp:], G, Cout, GCp, count,
                                params["bn3_g"], params["bn3_b"])

    # road1: SELU(BN1) fused as prologue of the second SO3 conv (+ BN2 stats).
    y2, s2 = act_conv_so3(y13, aff1, params["w2_big"])
    aff2 = bn_affine_from_stats(s2, G, Cout, GCp, count,
                                params["bn2_g"], params["bn2_b"])

    # road3 input: SELU(BN2(y2)) + SELU(BN3(y3)) (+ BN4 stats).
    s, s4 = residual_bn_stats(y2, y13, aff2, aff3)
    aff4 = bn_affine_from_stats(s4, G, Cout, GCp, count,
                                params["bn4_g"], params["bn4_b"])

    # road3: SELU(BN4(s)).
    out = affine_selu(s, aff4)                      # (M, GCp) f32

    # Strip lane padding and go back to NCDHW (gamma kept minor -> cheap).
    out = out[:, :GC].reshape(NB, A, A, Cout, G)
    out = jnp.transpose(out, (0, 3, 1, 2, 4))       # (NB, Cout, A, A, G)
    n_out, od = params["num_out_capsules"], params["out_capsule_dim"]
    return out.reshape(N, NIC, n_out, od, A, A, G)


# ---------------------------------------------------------------------------
# Demo
# ---------------------------------------------------------------------------
if __name__ == "__main__":
    # small shapes: N=2, num_in_caps=2, in_capsule_dim(in_features)=4,
    # num_out_capsules=2, out_capsule_dim=3, b_in=b_out=4 -> spatial 8
    N, NIC, IN_DIM = 2, 2, 4
    NUM_OUT, OUT_DIM = 2, 3
    B_IN = B_OUT = 4
    A = 2 * B_IN

    key = jax.random.PRNGKey(0)
    kx, kp = jax.random.split(key)
    x = jax.random.normal(kx, (N, NIC, IN_DIM, A, A, A), dtype=jnp.float32)

    params = init_params(kp, IN_DIM, NUM_OUT, OUT_DIM, B_IN, B_OUT)

    fwd = jax.jit(lambda xx: capsule_prediction_forward(xx, params))
    u_hat = fwd(x)
    u_hat = jax.block_until_ready(u_hat)

    expected = (N, NIC, NUM_OUT, OUT_DIM, 2 * B_OUT, 2 * B_OUT, 2 * B_OUT)
    assert u_hat.shape == expected, (u_hat.shape, expected)
    assert bool(jnp.all(jnp.isfinite(u_hat)))
    print("KERNEL_OK")
</pallas_src>

<mosaic_0001>
module attributes {stable_mosaic.version = 11 : i64} {
  func.func @_dual_conv_stats_kernel(%arg0: i32, %arg1: memref<128x32xbf16, #tpu.memory_space<vmem>>, %arg2: memref<32x256xbf16, #tpu.memory_space<vmem>>, %arg3: memref<128x256xbf16, #tpu.memory_space<vmem>>, %arg4: memref<1x2x256xf32, #tpu.memory_space<vmem>>) attributes {dimension_semantics = [#tpu.dimension_semantics<parallel>], iteration_bounds = array<i64: 2>, scalar_prefetch = 0 : i64, scratch_operands = 0 : i64, tpu.core_type = #tpu.core_type<tc>, window_params = [{transform_indices = @transform_0, window_bounds = array<i64: 128, 32>}, {pipeline_mode = #tpu.pipeline_mode<synchronous>, transform_indices = @transform_1, window_bounds = array<i64: 32, 256>}, {transform_indices = @transform_2, window_bounds = array<i64: 128, 256>}, {transform_indices = @transform_3, window_bounds = array<i64: 1, 2, 256>}]} {
    %c0 = arith.constant 0 : index
    %c0_0 = arith.constant 0 : index
    %0 = vector.load %arg1[%c0, %c0_0] : memref<128x32xbf16, #tpu.memory_space<vmem>>, vector<128x32xbf16>
    %c0_1 = arith.constant 0 : index
    %c0_2 = arith.constant 0 : index
    %1 = vector.load %arg2[%c0_1, %c0_2] : memref<32x256xbf16, #tpu.memory_space<vmem>>, vector<32x256xbf16>
    %cst = arith.constant dense<0.000000e+00> : vector<128x256xf32>
    %2 = tpu.matmul %0, %1, %cst {dimension_numbers = #tpu.dot_dimension_numbers<[1], [0], [0], [1], [0, 0, 1, 1], [], []>} : vector<128x32xbf16>, vector<32x256xbf16>, vector<128x256xf32> -> vector<128x256xf32>
    %3 = arith.truncf %2 : vector<128x256xf32> to vector<128x256xbf16>
    %c0_3 = arith.constant 0 : index
    %c0_4 = arith.constant 0 : index
    %4 = vector.load %arg3[%c0_3, %c0_4] : memref<128x256xbf16, #tpu.memory_space<vmem>>, vector<128x256xbf16>
    tpu.vector_store %arg3[%c0_3, %c0_4], %3 {strides = array<i32>} : memref<128x256xbf16, #tpu.memory_space<vmem>>, vector<128x256xbf16>,
    %cst_5 = arith.constant dense<0.000000e+00> : vector<256xf32>
    %5 = vector.multi_reduction <add>, %2, %cst_5 [0] : vector<128x256xf32> to vector<256xf32>
    %6 = vector.shape_cast %5 : vector<256xf32> to vector<1x256xf32>
    %c0_6 = arith.constant 0 : index
    %c0_7 = arith.constant 0 : index
    %c0_8 = arith.constant 0 : index
    %7 = vector.load %arg4[%c0_6, %c0_7, %c0_8] : memref<1x2x256xf32, #tpu.memory_space<vmem>>, vector<1x1x256xf32>
    %8 = vector.shape_cast %7 : vector<1x1x256xf32> to vector<1x256xf32>
    %9 = vector.shape_cast %6 : vector<1x256xf32> to vector<1x1x256xf32>
    tpu.vector_store %arg4[%c0_6, %c0_7, %c0_8], %9 {strides = array<i32>} : memref<1x2x256xf32, #tpu.memory_space<vmem>>, vector<1x1x256xf32>,
    %10 = arith.mulf %2, %2 : vector<128x256xf32>
    %cst_9 = arith.constant dense<0.000000e+00> : vector<256xf32>
    %11 = vector.multi_reduction <add>, %10, %cst_9 [0] : vector<128x256xf32> to vector<256xf32>
    %12 = vector.shape_cast %11 : vector<256xf32> to vector<1x256xf32>
    %c0_10 = arith.constant 0 : index
    %c1 = arith.constant 1 : index
    %c0_11 = arith.constant 0 : index
    %13 = vector.load %arg4[%c0_10, %c1, %c0_11] : memref<1x2x256xf32, #tpu.memory_space<vmem>>, vector<1x1x256xf32>
    %14 = vector.shape_cast %13 : vector<1x1x256xf32> to vector<1x256xf32>
    %15 = vector.shape_cast %12 : vector<1x256xf32> to vector<1x1x256xf32>
    tpu.vector_store %arg4[%c0_10, %c1, %c0_11], %15 {strides = array<i32>} : memref<1x2x256xf32, #tpu.memory_space<vmem>>, vector<1x1x256xf32>,
    return
  }
  func.func @transform_0(%arg0: i32) -> (i32, i32) {
    %c0_i32 = arith.constant 0 : i32
    %c0_i32_0 = arith.constant 0 : i32
    return %arg0, %c0_i32 : i32, i32
  }
  func.func @transform_1(%arg0: i32) -> (i32, i32) {
    %c0_i32 = arith.constant 0 : i32
    %c0_i32_0 = arith.constant 0 : i32
    %c0_i32_1 = arith.constant 0 : i32
    return %c0_i32, %c0_i32_0 : i32, i32
  }
  func.func @transform_2(%arg0: i32) -> (i32, i32) {
    %c0_i32 = arith.constant 0 : i32
    %c0_i32_0 = arith.constant 0 : i32
    return %arg0, %c0_i32 : i32, i32
  }
  func.func @transform_3(%arg0: i32) -> (i32, i32, i32) {
    %c0_i32 = arith.constant 0 : i32
    %c0_i32_0 = arith.constant 0 : i32
    %c0_i32_1 = arith.constant 0 : i32
    return %arg0, %c0_i32, %c0_i32_0 : i32, i32, i32
  }
}

module attributes {stable_mosaic.version = 11 : i64} {
  func.func @_act_conv_stats_kernel(%arg0: i32, %arg1: memref<128x128xbf16, #tpu.memory_space<vmem>>, %arg2: memref<2x128xf32, #tpu.memory_space<vmem>>, %arg3: memref<128x128xbf16, #tpu.memory_space<vmem>>, %arg4: memref<128x128xbf16, #tpu.memory_space<vmem>>, %arg5: memref<1x2x128xf32, #tpu.memory_space<vmem>>) attributes {dimension_semantics = [#tpu.dimension_semantics<parallel>], iteration_bounds = array<i64: 2>, scalar_prefetch = 0 : i64, scratch_operands = 0 : i64, tpu.core_type = #tpu.core_type<tc>, window_params = [{transform_indices = @transform_0, window_bounds = array<i64: 128, 128>}, {pipeline_mode = #tpu.pipeline_mode<synchronous>, transform_indices = @transform_1, window_bounds = array<i64: 2, 128>}, {pipeline_mode = #tpu.pipeline_mode<synchronous>, transform_indices = @transform_2, window_bounds = array<i64: 128, 128>}, {transform_indices = @transform_3, window_bounds = array<i64: 128, 128>}, {transform_indices = @transform_4, window_bounds = array<i64: 1, 2, 128>}]} {
    %c0 = arith.constant 0 : index
    %c0_0 = arith.constant 0 : index
    %0 = vector.load %arg1[%c0, %c0_0] : memref<128x128xbf16, #tpu.memory_space<vmem>>, vector<128x128xbf16>
    %1 = arith.extf %0 : vector<128x128xbf16> to vector<128x128xf32>
    %c0_1 = arith.constant 0 : index
    %c0_2 = arith.constant 0 : index
    %2 = vector.load %arg2[%c0_1, %c0_2] : memref<2x128xf32, #tpu.memory_space<vmem>>, vector<1x128xf32>
    %3 = vector.broadcast %2 : vector<1x128xf32> to vector<128x128xf32>
    %4 = arith.mulf %1, %3 : vector<128x128xf32>
    %c1 = arith.constant 1 : index
    %c0_3 = arith.constant 0 : index
    %5 = vector.load %arg2[%c1, %c0_3] : memref<2x128xf32, #tpu.memory_space<vmem>>, vector<1x128xf32>
    %6 = vector.broadcast %5 : vector<1x128xf32> to vector<128x128xf32>
    %7 = arith.addf %4, %6 : vector<128x128xf32>
    %cst = arith.constant 0.000000e+00 : f32
    %8 = vector.broadcast %cst : f32 to vector<128x128xf32>
    %9 = arith.cmpf ogt, %7, %8 : vector<128x128xf32>
    %10 = math.exp %7 : vector<128x128xf32>
    %cst_4 = arith.constant 1.000000e+00 : f32
    %11 = vector.broadcast %cst_4 : f32 to vector<128x128xf32>
    %12 = arith.subf %10, %11 : vector<128x128xf32>
    %cst_5 = arith.constant 1.67326319 : f32
    %13 = vector.broadcast %cst_5 : f32 to vector<128x128xf32>
    %14 = arith.mulf %13, %12 : vector<128x128xf32>
    %15 = arith.select %9, %7, %14 : vector<128x128xi1>, vector<128x128xf32>
    %cst_6 = arith.constant 1.05070102 : f32
    %16 = vector.broadcast %cst_6 : f32 to vector<128x128xf32>
    %17 = arith.mulf %16, %15 : vector<128x128xf32>
    %18 = arith.truncf %17 : vector<128x128xf32> to vector<128x128xbf16>
    %c0_7 = arith.constant 0 : index
    %c0_8 = arith.constant 0 : index
    %19 = vector.load %arg3[%c0_7, %c0_8] : memref<128x128xbf16, #tpu.memory_space<vmem>>, vector<128x128xbf16>
    %cst_9 = arith.constant dense<0.000000e+00> : vector<128x128xf32>
    %20 = tpu.matmul %18, %19, %cst_9 {dimension_numbers = #tpu.dot_dimension_numbers<[1], [0], [0], [1], [0, 0, 1, 1], [], []>} : vector<128x128xbf16>, vector<128x128xbf16>, vector<128x128xf32> -> vector<128x128xf32>
    %21 = arith.truncf %20 : vector<128x128xf32> to vector<128x128xbf16>
    %c0_10 = arith.constant 0 : index
    %c0_11 = arith.constant 0 : index
    %22 = vector.load %arg4[%c0_10, %c0_11] : memref<128x128xbf16, #tpu.memory_space<vmem>>, vector<128x128xbf16>
    tpu.vector_store %arg4[%c0_10, %c0_11], %21 {strides = array<i32>} : memref<128x128xbf16, #tpu.memory_space<vmem>>, vector<128x128xbf16>,
    %cst_12 = arith.constant dense<0.000000e+00> : vector<128xf32>
    %23 = vector.multi_reduction <add>, %20, %cst_12 [0] : vector<128x128xf32> to vector<128xf32>
    %24 = vector.shape_cast %23 : vector<128xf32> to vector<1x128xf32>
    %c0_13 = arith.constant 0 : index
    %c0_14 = arith.constant 0 : index
    %c0_15 = arith.constant 0 : index
    %25 = vector.load %arg5[%c0_13, %c0_14, %c0_15] : memref<1x2x128xf32, #tpu.memory_space<vmem>>, vector<1x1x128xf32>
    %26 = vector.shape_cast %25 : vector<1x1x128xf32> to vector<1x128xf32>
    %27 = vector.shape_cast %24 : vector<1x128xf32> to vector<1x1x128xf32>
    tpu.vector_store %arg5[%c0_13, %c0_14, %c0_15], %27 {strides = array<i32>} : memref<1x2x128xf32, #tpu.memory_space<vmem>>, vector<1x1x128xf32>,
    %28 = arith.mulf %20, %20 : vector<128x128xf32>
    %cst_16 = arith.constant dense<0.000000e+00> : vector<128xf32>
    %29 = vector.multi_reduction <add>, %28, %cst_16 [0] : vector<128x128xf32> to vector<128xf32>
    %30 = vector.shape_cast %29 : vector<128xf32> to vector<1x128xf32>
    %c0_17 = arith.constant 0 : index
    %c1_18 = arith.constant 1 : index
    %c0_19 = arith.constant 0 : index
    %31 = vector.load %arg5[%c0_17, %c1_18, %c0_19] : memref<1x2x128xf32, #tpu.memory_space<vmem>>, vector<1x1x128xf32>
    %32 = vector.shape_cast %31 : vector<1x1x128xf32> to vector<1x128xf32>
    %33 = vector.shape_cast %30 : vector<1x128xf32> to vector<1x1x128xf32>
    tpu.vector_store %arg5[%c0_17, %c1_18, %c0_19], %33 {strides = array<i32>} : memref<1x2x128xf32, #tpu.memory_space<vmem>>, vector<1x1x128xf32>,
    return
  }
  func.func @transform_0(%arg0: i32) -> (i32, i32) {
    %c0_i32 = arith.constant 0 : i32
    %c0_i32_0 = arith.constant 0 : i32
    return %arg0, %c0_i32 : i32, i32
  }
  func.func @transform_1(%arg0: i32) -> (i32, i32) {
    %c0_i32 = arith.constant 0 : i32
    %c0_i32_0 = arith.constant 0 : i32
    %c0_i32_1 = arith.constant 0 : i32
    return %c0_i32, %c0_i32_0 : i32, i32
  }
  func.func @transform_2(%arg0: i32) -> (i32, i32) {
    %c0_i32 = arith.constant 0 : i32
    %c0_i32_0 = arith.constant 0 : i32
    %c0_i32_1 = arith.constant 0 : i32
    return %c0_i32, %c0_i32_0 : i32, i32
  }
  func.func @transform_3(%arg0: i32) -> (i32, i32) {
    %c0_i32 = arith.constant 0 : i32
    %c0_i32_0 = arith.constant 0 : i32
    return %arg0, %c0_i32 : i32, i32
  }
  func.func @transform_4(%arg0: i32) -> (i32, i32, i32) {
    %c0_i32 = arith.constant 0 : i32
    %c0_i32_0 = arith.constant 0 : i32
    %c0_i32_1 = arith.constant 0 : i32
    return %arg0, %c0_i32, %c0_i32_0 : i32, i32, i32
  }
}

module attributes {stable_mosaic.version = 11 : i64} {
  func.func @_affine_selu_kernel(%arg0: i32, %arg1: memref<128x128xbf16, #tpu.memory_space<vmem>>, %arg2: memref<2x128xf32, #tpu.memory_space<vmem>>, %arg3: memref<128x128xf32, #tpu.memory_space<vmem>>) attributes {dimension_semantics = [#tpu.dimension_semantics<parallel>], iteration_bounds = array<i64: 2>, scalar_prefetch = 0 : i64, scratch_operands = 0 : i64, tpu.core_type = #tpu.core_type<tc>, window_params = [{transform_indices = @transform_0, window_bounds = array<i64: 128, 128>}, {pipeline_mode = #tpu.pipeline_mode<synchronous>, transform_indices = @transform_1, window_bounds = array<i64: 2, 128>}, {transform_indices = @transform_2, window_bounds = array<i64: 128, 128>}]} {
    %c0 = arith.constant 0 : index
    %c0_0 = arith.constant 0 : index
    %0 = vector.load %arg1[%c0, %c0_0] : memref<128x128xbf16, #tpu.memory_space<vmem>>, vector<128x128xbf16>
    %1 = arith.extf %0 : vector<128x128xbf16> to vector<128x128xf32>
    %c0_1 = arith.constant 0 : index
    %c0_2 = arith.constant 0 : index
    %2 = vector.load %arg2[%c0_1, %c0_2] : memref<2x128xf32, #tpu.memory_space<vmem>>, vector<1x128xf32>
    %3 = vector.broadcast %2 : vector<1x128xf32> to vector<128x128xf32>
    %4 = arith.mulf %1, %3 : vector<128x128xf32>
    %c1 = arith.constant 1 : index
    %c0_3 = arith.constant 0 : index
    %5 = vector.load %arg2[%c1, %c0_3] : memref<2x128xf32, #tpu.memory_space<vmem>>, vector<1x128xf32>
    %6 = vector.broadcast %5 : vector<1x128xf32> to vector<128x128xf32>
    %7 = arith.addf %4, %6 : vector<128x128xf32>
    %cst = arith.constant 0.000000e+00 : f32
    %8 = vector.broadcast %cst : f32 to vector<128x128xf32>
    %9 = arith.cmpf ogt, %7, %8 : vector<128x128xf32>
    %10 = math.exp %7 : vector<128x128xf32>
    %cst_4 = arith.constant 1.000000e+00 : f32
    %11 = vector.broadcast %cst_4 : f32 to vector<128x128xf32>
    %12 = arith.subf %10, %11 : vector<128x128xf32>
    %cst_5 = arith.constant 1.67326319 : f32
    %13 = vector.broadcast %cst_5 : f32 to vector<128x128xf32>
    %14 = arith.mulf %13, %12 : vector<128x128xf32>
    %15 = arith.select %9, %7, %14 : vector<128x128xi1>, vector<128x128xf32>
    %cst_6 = arith.constant 1.05070102 : f32
    %16 = vector.broadcast %cst_6 : f32 to vector<128x128xf32>
    %17 = arith.mulf %16, %15 : vector<128x128xf32>
    %c0_7 = arith.constant 0 : index
    %c0_8 = arith.constant 0 : index
    %18 = vector.load %arg3[%c0_7, %c0_8] : memref<128x128xf32, #tpu.memory_space<vmem>>, vector<128x128xf32>
    tpu.vector_store %arg3[%c0_7, %c0_8], %17 {strides = array<i32>} : memref<128x128xf32, #tpu.memory_space<vmem>>, vector<128x128xf32>,
    return
  }
  func.func @transform_0(%arg0: i32) -> (i32, i32) {
    %c0_i32 = arith.constant 0 : i32
    %c0_i32_0 = arith.constant 0 : i32
    return %arg0, %c0_i32 : i32, i32
  }
  func.func @transform_1(%arg0: i32) -> (i32, i32) {
    %c0_i32 = arith.constant 0 : i32
    %c0_i32_0 = arith.constant 0 : i32
    %c0_i32_1 = arith.constant 0 : i32
    return %c0_i32, %c0_i32_0 : i32, i32
  }
  func.func @transform_2(%arg0: i32) -> (i32, i32) {
    %c0_i32 = arith.constant 0 : i32
    %c0_i32_0 = arith.constant 0 : i32
    return %arg0, %c0_i32 : i32, i32
  }
}

module attributes {stable_mosaic.version = 11 : i64} {
  func.func @_residual_stats_kernel(%arg0: i32, %arg1: memref<128x128xbf16, #tpu.memory_space<vmem>>, %arg2: memref<128x128xbf16, #tpu.memory_space<vmem>>, %arg3: memref<2x128xf32, #tpu.memory_space<vmem>>, %arg4: memref<2x128xf32, #tpu.memory_space<vmem>>, %arg5: memref<128x128xbf16, #tpu.memory_space<vmem>>, %arg6: memref<1x2x128xf32, #tpu.memory_space<vmem>>) attributes {dimension_semantics = [#tpu.dimension_semantics<parallel>], iteration_bounds = array<i64: 2>, scalar_prefetch = 0 : i64, scratch_operands = 0 : i64, tpu.core_type = #tpu.core_type<tc>, window_params = [{transform_indices = @transform_0, window_bounds = array<i64: 128, 128>}, {transform_indices = @transform_1, window_bounds = array<i64: 128, 128>}, {pipeline_mode = #tpu.pipeline_mode<synchronous>, transform_indices = @transform_2, window_bounds = array<i64: 2, 128>}, {pipeline_mode = #tpu.pipeline_mode<synchronous>, transform_indices = @transform_3, window_bounds = array<i64: 2, 128>}, {transform_indices = @transform_4, window_bounds = array<i64: 128, 128>}, {transform_indices = @transform_5, window_bounds = array<i64: 1, 2, 128>}]} {
    %c0 = arith.constant 0 : index
    %c0_0 = arith.constant 0 : index
    %0 = vector.load %arg1[%c0, %c0_0] : memref<128x128xbf16, #tpu.memory_space<vmem>>, vector<128x128xbf16>
    %1 = arith.extf %0 : vector<128x128xbf16> to vector<128x128xf32>
    %c0_1 = arith.constant 0 : index
    %c0_2 = arith.constant 0 : index
    %2 = vector.load %arg3[%c0_1, %c0_2] : memref<2x128xf32, #tpu.memory_space<vmem>>, vector<1x128xf32>
    %3 = vector.broadcast %2 : vector<1x128xf32> to vector<128x128xf32>
    %4 = arith.mulf %1, %3 : vector<128x128xf32>
    %c1 = arith.constant 1 : index
    %c0_3 = arith.constant 0 : index
    %5 = vector.load %arg3[%c1, %c0_3] : memref<2x128xf32, #tpu.memory_space<vmem>>, vector<1x128xf32>
    %6 = vector.broadcast %5 : vector<1x128xf32> to vector<128x128xf32>
    %7 = arith.addf %4, %6 : vector<128x128xf32>
    %cst = arith.constant 0.000000e+00 : f32
    %8 = vector.broadcast %cst : f32 to vector<128x128xf32>
    %9 = arith.cmpf ogt, %7, %8 : vector<128x128xf32>
    %10 = math.exp %7 : vector<128x128xf32>
    %cst_4 = arith.constant 1.000000e+00 : f32
    %11 = vector.broadcast %cst_4 : f32 to vector<128x128xf32>
    %12 = arith.subf %10, %11 : vector<128x128xf32>
    %cst_5 = arith.constant 1.67326319 : f32
    %13 = vector.broadcast %cst_5 : f32 to vector<128x128xf32>
    %14 = arith.mulf %13, %12 : vector<128x128xf32>
    %15 = arith.select %9, %7, %14 : vector<128x128xi1>, vector<128x128xf32>
    %cst_6 = arith.constant 1.05070102 : f32
    %16 = vector.broadcast %cst_6 : f32 to vector<128x128xf32>
    %17 = arith.mulf %16, %15 : vector<128x128xf32>
    %c0_7 = arith.constant 0 : index
    %c0_8 = arith.constant 0 : index
    %18 = vector.load %arg2[%c0_7, %c0_8] : memref<128x128xbf16, #tpu.memory_space<vmem>>, vector<128x128xbf16>
    %19 = arith.extf %18 : vector<128x128xbf16> to vector<128x128xf32>
    %c0_9 = arith.constant 0 : index
    %c0_10 = arith.constant 0 : index
    %20 = vector.load %arg4[%c0_9, %c0_10] : memref<2x128xf32, #tpu.memory_space<vmem>>, vector<1x128xf32>
    %21 = vector.broadcast %20 : vector<1x128xf32> to vector<128x128xf32>
    %22 = arith.mulf %19, %21 : vector<128x128xf32>
    %c1_11 = arith.constant 1 : index
    %c0_12 = arith.constant 0 : index
    %23 = vector.load %arg4[%c1_11, %c0_12] : memref<2x128xf32, #tpu.memory_space<vmem>>, vector<1x128xf32>
    %24 = vector.broadcast %23 : vector<1x128xf32> to vector<128x128xf32>
    %25 = arith.addf %22, %24 : vector<128x128xf32>
    %cst_13 = arith.constant 0.000000e+00 : f32
    %26 = vector.broadcast %cst_13 : f32 to vector<128x128xf32>
    %27 = arith.cmpf ogt, %25, %26 : vector<128x128xf32>
    %28 = math.exp %25 : vector<128x128xf32>
    %cst_14 = arith.constant 1.000000e+00 : f32
    %29 = vector.broadcast %cst_14 : f32 to vector<128x128xf32>
    %30 = arith.subf %28, %29 : vector<128x128xf32>
    %cst_15 = arith.constant 1.67326319 : f32
    %31 = vector.broadcast %cst_15 : f32 to vector<128x128xf32>
    %32 = arith.mulf %31, %30 : vector<128x128xf32>
    %33 = arith.select %27, %25, %32 : vector<128x128xi1>, vector<128x128xf32>
    %cst_16 = arith.constant 1.05070102 : f32
    %34 = vector.broadcast %cst_16 : f32 to vector<128x128xf32>
    %35 = arith.mulf %34, %33 : vector<128x128xf32>
    %36 = arith.addf %17, %35 : vector<128x128xf32>
    %37 = arith.truncf %36 : vector<128x128xf32> to vector<128x128xbf16>
    %c0_17 = arith.constant 0 : index
    %c0_18 = arith.constant 0 : index
    %38 = vector.load %arg5[%c0_17, %c0_18] : memref<128x128xbf16, #tpu.memory_space<vmem>>, vector<128x128xbf16>
    tpu.vector_store %arg5[%c0_17, %c0_18], %37 {strides = array<i32>} : memref<128x128xbf16, #tpu.memory_space<vmem>>, vector<128x128xbf16>,
    %cst_19 = arith.constant dense<0.000000e+00> : vector<128xf32>
    %39 = vector.multi_reduction <add>, %36, %cst_19 [0] : vector<128x128xf32> to vector<128xf32>
    %40 = vector.shape_cast %39 : vector<128xf32> to vector<1x128xf32>
    %c0_20 = arith.constant 0 : index
    %c0_21 = arith.constant 0 : index
    %c0_22 = arith.constant 0 : index
    %41 = vector.load %arg6[%c0_20, %c0_21, %c0_22] : memref<1x2x128xf32, #tpu.memory_space<vmem>>, vector<1x1x128xf32>
    %42 = vector.shape_cast %41 : vector<1x1x128xf32> to vector<1x128xf32>
    %43 = vector.shape_cast %40 : vector<1x128xf32> to vector<1x1x128xf32>
    tpu.vector_store %arg6[%c0_20, %c0_21, %c0_22], %43 {strides = array<i32>} : memref<1x2x128xf32, #tpu.memory_space<vmem>>, vector<1x1x128xf32>,
    %44 = arith.mulf %36, %36 : vector<128x128xf32>
    %cst_23 = arith.constant dense<0.000000e+00> : vector<128xf32>
    %45 = vector.multi_reduction <add>, %44, %cst_23 [0] : vector<128x128xf32> to vector<128xf32>
    %46 = vector.shape_cast %45 : vector<128xf32> to vector<1x128xf32>
    %c0_24 = arith.constant 0 : index
    %c1_25 = arith.constant 1 : index
    %c0_26 = arith.constant 0 : index
    %47 = vector.load %arg6[%c0_24, %c1_25, %c0_26] : memref<1x2x128xf32, #tpu.memory_space<vmem>>, vector<1x1x128xf32>
    %48 = vector.shape_cast %47 : vector<1x1x128xf32> to vector<1x128xf32>
    %49 = vector.shape_cast %46 : vector<1x128xf32> to vector<1x1x128xf32>
    tpu.vector_store %arg6[%c0_24, %c1_25, %c0_26], %49 {strides = array<i32>} : memref<1x2x128xf32, #tpu.memory_space<vmem>>, vector<1x1x128xf32>,
    return
  }
  func.func @transform_0(%arg0: i32) -> (i32, i32) {
    %c0_i32 = arith.constant 0 : i32
    %c0_i32_0 = arith.constant 0 : i32
    return %arg0, %c0_i32 : i32, i32
  }
  func.func @transform_1(%arg0: i32) -> (i32, i32) {
    %c1_i32 = arith.constant 1 : i32
    %c0_i32 = arith.constant 0 : i32
    return %arg0, %c1_i32 : i32, i32
  }
  func.func @transform_2(%arg0: i32) -> (i32, i32) {
    %c0_i32 = arith.constant 0 : i32
    %c0_i32_0 = arith.constant 0 : i32
    %c0_i32_1 = arith.constant 0 : i32
    return %c0_i32, %c0_i32_0 : i32, i32
  }
  func.func @transform_3(%arg0: i32) -> (i32, i32) {
    %c0_i32 = arith.constant 0 : i32
    %c0_i32_0 = arith.constant 0 : i32
    %c0_i32_1 = arith.constant 0 : i32
    return %c0_i32, %c0_i32_0 : i32, i32
  }
  func.func @transform_4(%arg0: i32) -> (i32, i32) {
    %c0_i32 = arith.constant 0 : i32
    %c0_i32_0 = arith.constant 0 : i32
    return %arg0, %c0_i32 : i32, i32
  }
  func.func @transform_5(%arg0: i32) -> (i32, i32, i32) {
    %c0_i32 = arith.constant 0 : i32
    %c0_i32_0 = arith.constant 0 : i32
    %c0_i32_1 = arith.constant 0 : i32
    return %arg0, %c0_i32, %c0_i32_0 : i32, i32, i32
  }
}

</mosaic_0001>

<llo_original>
// kernel: _lambda_.4
$region0: #{_lambda_.4}
  #allocation0 [shape = 'u32[]', space=smem, size = 0x4, offset = 0x4, fixed_abs, tag = 'smem constant byte address 0x4 - core index']
  #allocation1 [shape = 'u32[144,128]{1,0:T(1,128)}', space=vmem, size = 0x12000, scoped, tag = 'internal scratch']
  %s0 = inlined_call_operand.vmem [shape: bf16[256,32], index: 0, kind: input, shape index: {}]
  %s1 = inlined_call_operand.vmem [shape: bf16[32,256], index: 1, kind: input, shape index: {}]
  %s2 = inlined_call_operand.vmem [shape: bf16[256,256], index: 2, kind: output, shape index: {0}]
  %s3 = inlined_call_operand.vmem [shape: f32[2,2,256], index: 3, kind: output, shape index: {1}]
  %4 = xla_tuple %s2, %s3
  %s5 = sld [smem:[#allocation0]]
  $region49: #{_lambda_.4} parent=0
    _
  %s7 = ssub.s32 1, %s5
  %s8 = scalar_select 0, %s7, %s5
  loop: start=0, step=1, limit=4
  $region2: #{_lambda_.4} parent=0 // loop_pre_header
    _
  $region3: #{_lambda_.4} parent=0 // loop_header
    %s10 = sphi 0, %s14
    %p11 = scmp.ge.s32.totalorder %s10, 4
    %s20 = sphi 0, %s22
    %s23 = sphi 0, %s20
    %s24 = sphi 0, %s23
    %s40 = sphi 0, %s24
    %s44 = sphi 0, %s44
    %s46 = sphi 0, %s44
    %s47 = sphi 0, %s46
    %s61 = sphi 0, %s47
    %s67 = sphi 0, %s69
    %s70 = sphi 0, %s67
    %s71 = sphi 0, %s70
    %s87 = sphi 0, %s71
    %s93 = sphi 0, %s95
    %s96 = sphi 0, %s93
    %s97 = sphi 0, %s96
    %s113 = sphi 0, %s97
  $region4: #{_lambda_.4} parent=0 // loop_header_branch
    %13 = sbr.rel (%p11) target = $region8
  $region5: #{_lambda_.4} parent=0 // loop_body
    %s15 = ssub.s32 %s10, 1
    %s16 = ssub.s32 %s10, 2
    %s17 = sadd.s32 %s10, 1
    %s18 = ssub.s32 %s10, %s17
    %p19 = scmp.eq.s32.totalorder %s18, 0
    %s21 = sadd.s32 %s20, 1
    %s22 = scalar_select %p19, %s20, %s21
    %p25 = pneg %p19
    %p26 = scmp.eq.s32.totalorder %s10, 1
    %p27 = por %p25, %p26
    %p28 = scmp.ne.s32.totalorder %s20, %s23
    %p29 = scmp.eq.s32.totalorder %s10, 0
    %p30 = por %p28, %p29
    %p31 = scmp.ne.s32.totalorder %s20, %s23
    %p32 = scmp.eq.s32.totalorder %s15, 1
    %p33 = por %p31, %p32
    %p34 = scmp.ne.s32.totalorder %s23, %s24
    %p35 = scmp.eq.s32.totalorder %s15, 0
    %p36 = por %p34, %p35
    %p37 = scmp.ne.s32.totalorder %s23, %s24
    %p38 = scmp.eq.s32.totalorder %s16, 1
    %p39 = por %p37, %p38
    %p41 = scmp.ne.s32.totalorder %s24, %s40
    %p42 = scmp.eq.s32.totalorder %s16, 0
    %p43 = por %p41, %p42
    %s45 = sadd.s32 %s44, 1
    %p48 = scmp.eq.s32.totalorder %s10, 1
    %p49 = scmp.ne.s32.totalorder %s44, %s46
    %p50 = scmp.eq.s32.totalorder %s10, 0
    %p51 = por %p49, %p50
    %p52 = scmp.ne.s32.totalorder %s44, %s46
    %p53 = scmp.eq.s32.totalorder %s15, 1
    %p54 = por %p52, %p53
    %p55 = scmp.ne.s32.totalorder %s46, %s47
    %p56 = scmp.eq.s32.totalorder %s15, 0
    %p57 = por %p55, %p56
    %p58 = scmp.ne.s32.totalorder %s46, %s47
    %p59 = scmp.eq.s32.totalorder %s16, 1
    %p60 = por %p58, %p59
    %p62 = scmp.ne.s32.totalorder %s47, %s61
    %p63 = scmp.eq.s32.totalorder %s16, 0
    %p64 = por %p62, %p63
    %s65 = ssub.s32 %s10, %s17
    %p66 = scmp.eq.s32.totalorder %s65, 0
    %s68 = sadd.s32 %s67, 1
    %s69 = scalar_select %p66, %s67, %s68
    %p72 = pneg %p66
    %p73 = scmp.eq.s32.totalorder %s10, 1
    %p74 = por %p72, %p73
    %p75 = scmp.ne.s32.totalorder %s67, %s70
    %p76 = scmp.eq.s32.totalorder %s10, 0
    %p77 = por %p75, %p76
    %p78 = scmp.ne.s32.totalorder %s67, %s70
    %p79 = scmp.eq.s32.totalorder %s15, 1
    %p80 = por %p78, %p79
    %p81 = scmp.ne.s32.totalorder %s70, %s71
    %p82 = scmp.eq.s32.totalorder %s15, 0
    %p83 = por %p81, %p82
    %p84 = scmp.ne.s32.totalorder %s70, %s71
    %p85 = scmp.eq.s32.totalorder %s16, 1
    %p86 = por %p84, %p85
    %p88 = scmp.ne.s32.totalorder %s71, %s87
    %p89 = scmp.eq.s32.totalorder %s16, 0
    %p90 = por %p88, %p89
    %s91 = ssub.s32 %s10, %s17
    %p92 = scmp.eq.s32.totalorder %s91, 0
    %s94 = sadd.s32 %s93, 1
    %s95 = scalar_select %p92, %s93, %s94
    %p98 = pneg %p92
    %p99 = scmp.eq.s32.totalorder %s10, 1
    %p100 = por %p98, %p99
    %p101 = scmp.ne.s32.totalorder %s93, %s96
    %p102 = scmp.eq.s32.totalorder %s10, 0
    %p103 = por %p101, %p102
    %p104 = scmp.ne.s32.totalorder %s93, %s96
    %p105 = scmp.eq.s32.totalorder %s15, 1
    %p106 = por %p104, %p105
    %p107 = scmp.ne.s32.totalorder %s96, %s97
    %p108 = scmp.eq.s32.totalorder %s15, 0
    %p109 = por %p107, %p108
    %p110 = scmp.ne.s32.totalorder %s96, %s97
    %p111 = scmp.eq.s32.totalorder %s16, 1
    %p112 = por %p110, %p111
    %p114 = scmp.ne.s32.totalorder %s97, %s113
    %p115 = scmp.eq.s32.totalorder %s16, 0
    %p116 = por %p114, %p115
    %p117 = scmp.le.s32.totalorder 1, %s10
    %p118 = scmp.lt.s32.totalorder %s10, 3
    %p119 = pnand %p117, %p118
    %p120 = pneg %p119
    // Predicated region
    $region9: #{_lambda_.4} parent=5 // pred_check
      _
    $region10: #{_lambda_.4} parent=5 // pred_check_branch
      %122 = sbr.rel (%p119) target = $region12
    $region11: #{_lambda_.4} parent=5 // pred_region
      %s123 = ssub.s32 %s10, 1
      // Predicated region
      $region13: #{_lambda_.4} parent=11 // pred_check
        %p124 = pneg %p57
      $region14: #{_lambda_.4} parent=11 // pred_check_branch
        %126 = sbr.rel (%p124) target = $region16
      $region15: #{_lambda_.4} parent=11 // pred_region
        _
      $region16: #{_lambda_.4} parent=11 // pred_fallthru
        _
    $region12: #{_lambda_.4} parent=5 // pred_fallthru
      _
    %p127 = scmp.lt.s32.totalorder %s10, 2
    // Predicated region
    $region17: #{_lambda_.4} parent=5 // pred_check
      %p128 = pneg %p127
    $region18: #{_lambda_.4} parent=5 // pred_check_branch
      %130 = sbr.rel (%p128) target = $region20
    $region19: #{_lambda_.4} parent=5 // pred_region
      // Predicated region
      $region21: #{_lambda_.4} parent=19 // pred_check
        %p131 = pneg %p30
      $region22: #{_lambda_.4} parent=19 // pred_check_branch
        %133 = sbr.rel (%p131) target = $region24
      $region23: #{_lambda_.4} parent=19 // pred_region
        %s134 = smul.u32 16, %s10
        %p135 = scmp.lt.s32.totalorder %s134, 31
        %s136 = scalar_select %p135, %s134, 31
        %s137 = smul.addr %s136, 4
        %s138 = scalar_lea.vmem %s0, %s137
        %s139 = smul.u32 16, %s10
      $region24: #{_lambda_.4} parent=19 // pred_fallthru
        _
    $region20: #{_lambda_.4} parent=5 // pred_fallthru
      _
    %p140 = scmp.le.s32.totalorder 1, %s10
    %p141 = scmp.lt.s32.totalorder %s10, 3
    %p142 = pnand %p140, %p141
    %p143 = pneg %p142
    // Predicated region
    $region25: #{_lambda_.4} parent=5 // pred_check
      _
    $region26: #{_lambda_.4} parent=5 // pred_check_branch
      %145 = sbr.rel (%p142) target = $region28
    $region27: #{_lambda_.4} parent=5 // pred_region
      %s146 = ssub.s32 %s10, 1
      %s147 = smul.u32 16, %s15
      %p148 = scmp.lt.s32.totalorder %s147, 31
      %s149 = scalar_select %p148, %s147, 31
      %s150 = smul.addr %s149, 4
      %s151 = scalar_lea.vmem %s0, %s150
      %p152 = pneg %p36
      %p153 = pneg %p33
      %p154 = pneg %p57
      %p155 = pneg %p54
      %p156 = pneg %p83
      %p157 = pneg %p80
      %s158 = smul.u32 16, %s15
      %p159 = scmp.lt.s32.totalorder %s158, 31
      %s160 = scalar_select %p159, %s158, 31
      %s161 = smul.addr %s160, 2
      %s162 = smul.addr %s161, 4
      %s163 = scalar_lea.vmem %s2, %s162
      %p164 = pneg %p109
      %p165 = pneg %p106
      %p166 = scmp.lt.s32.totalorder %s15, 1
      %s167 = scalar_select %p166, %s15, 1
      %s168 = smul.addr %s167, 2
      %s169 = smul.addr %s168, 2
      %s170 = scalar_lea.vmem %s3, %s169
      %s171 = smul.u32 16, %s15
      %p172 = scmp.lt.s32.totalorder %s171, 31
      %s173 = scalar_select %p172, %s171, 31
      %s174 = smul.addr %s173, 4
      %s175 = scalar_lea.vmem %s0, %s174
      %s176 = smul.u32 16, %s15
      %s177 = smul.u32 16, %s15
      %p178 = scmp.lt.s32.totalorder %s177, 31
      %s179 = scalar_select %p178, %s177, 31
      %s180 = smul.addr %s179, 2
      %s181 = smul.addr %s180, 4
      %s182 = scalar_lea.vmem %s2, %s181
      %s183 = smul.u32 16, %s15
      %p184 = scmp.lt.s32.totalorder %s15, 1
      %s185 = scalar_select %p184, %s15, 1
      %s186 = smul.addr %s185, 2
      %s187 = smul.addr %s186, 2
      %s188 = scalar_lea.vmem %s3, %s187
      %v190 = vld [vmem:[%s175] sm:$0xf]
      %v191 = vld [vmem:[%s175 + $0x4] sm:$0xf]
      %v192 = vld [vmem:[%s175 + $0x8] sm:$0xf]
      %v193 = vld [vmem:[%s175 + $0xc] sm:$0xf]
      %v194 = vld [vmem:[%s175 + $0x10] sm:$0xf]
      %v195 = vld [vmem:[%s175 + $0x14] sm:$0xf]
      %v196 = vld [vmem:[%s175 + $0x18] sm:$0xf]
      %v197 = vld [vmem:[%s175 + $0x1c] sm:$0xf]
      %v198 = vld [vmem:[%s175 + $0x20] sm:$0xf]
      %v199 = vld [vmem:[%s175 + $0x24] sm:$0xf]
      %v200 = vld [vmem:[%s175 + $0x28] sm:$0xf]
      %v201 = vld [vmem:[%s175 + $0x2c] sm:$0xf]
      %v202 = vld [vmem:[%s175 + $0x30] sm:$0xf]
      %v203 = vld [vmem:[%s175 + $0x34] sm:$0xf]
      %v204 = vld [vmem:[%s175 + $0x38] sm:$0xf]
      %v205 = vld [vmem:[%s175 + $0x3c] sm:$0xf]
      %v206 = vld [vmem:[%s1] sm:$0xff]
      %v207 = vld [vmem:[%s1 + $0x8] sm:$0xff]
      %v208 = vld [vmem:[%s1 + $0x10] sm:$0xff]
      %v209 = vld [vmem:[%s1 + $0x18] sm:$0xff]
      %v226 = vunpack.c.l.b16 %v190
      %v227 = vunpack.c.l.b16 %v191
      %v228 = vunpack.c.l.b16 %v192
      %v229 = vunpack.c.l.b16 %v193
      %v230 = vunpack.c.l.b16 %v194
      %v231 = vunpack.c.l.b16 %v195
      %v232 = vunpack.c.l.b16 %v196
      %v233 = vunpack.c.l.b16 %v197
      %v234 = vunpack.c.l.b16 %v198
      %v235 = vunpack.c.l.b16 %v199
      %v236 = vunpack.c.l.b16 %v200
      %v237 = vunpack.c.l.b16 %v201
      %v238 = vunpack.c.l.b16 %v202
      %v239 = vunpack.c.l.b16 %v203
      %v240 = vunpack.c.l.b16 %v204
      %v241 = vunpack.c.l.b16 %v205
      %v242 = vpack.c.b16 %v227, %v226
      %v243 = vpack.c.b16 %v229, %v228
      %v244 = vpack.c.b16 %v231, %v230
      %v245 = vpack.c.b16 %v233, %v232
      %v246 = vpack.c.b16 %v235, %v234
      %v247 = vpack.c.b16 %v237, %v236
      %v248 = vpack.c.b16 %v239, %v238
      %v249 = vpack.c.b16 %v241, %v240
      %v254 = vunpack.c.l.b16 %v206
      %v255 = vunpack.c.h.b16 %v206
      %v256 = vunpack.c.l.b16 %v207
      %v257 = vunpack.c.h.b16 %v207
      %v258 = vunpack.c.l.b16 %v208
      %v259 = vunpack.c.h.b16 %v208
      %v260 = vunpack.c.l.b16 %v209
      %v261 = vunpack.c.h.b16 %v209
      %v262 = vpack.c.b16 %v256, %v254
      %v263 = vpack.c.b16 %v257, %v255
      %v264 = vpack.c.b16 %v260, %v258
      %v265 = vpack.c.b16 %v261, %v259
      %vm270 = vcmask 261120
      %v272 = vsel %vm270, %v242, 0
      %v275 = vsel %vm270, %v243, 0
      %v278 = vsel %vm270, %v244, 0
      %v281 = vsel %vm270, %v245, 0
      %v284 = vsel %vm270, %v246, 0
      %v287 = vsel %vm270, %v247, 0
      %v290 = vsel %vm270, %v248, 0
      %v293 = vsel %vm270, %v249, 0
      %295 = vmatprep.subr.bf16.mxu0 0
      %296 = vmatpush1.bf16.msra.mxu0 0
      %297 = vmatprep.subr.bf16.mxu0 0
      %298 = vmatpush1.bf16.msra.mxu0 0
      %299 = vmatprep.subr.bf16.mxu0 0
      %300 = vmatpush1.bf16.msra.mxu0 0
      %301 = vmatprep.subr.bf16.mxu0 0
      %302 = vmatpush1.bf16.msra.mxu0 0
      %303 = vmatprep.subr.bf16.mxu0 0
      %304 = vmatpush1.bf16.msra.mxu0 0
      %305 = vmatprep.subr.bf16.mxu0 0
      %306 = vmatpush1.bf16.msra.mxu0 0
      %307 = vmatprep.subr.bf16.mxu0 %v265
      %308 = vmatpush1.bf16.msra.mxu0 %v264
      %309 = vmatprep.subr.bf16.mxu0 %v263
      %310 = vmatpush1.bf16.msra.mxu0 %v262
      %311 = vmatprep.subr.bf16.mxu0 0
      %312 = vmatpush2.bf16.msra.mxu0 0
      %313 = vmatprep.subr.bf16.mxu0 0
      %314 = vmatpush2.bf16.msra.mxu0 0
      %315 = vmatprep.subr.bf16.mxu0 0
      %316 = vmatpush2.bf16.msra.mxu0 0
      %317 = vmatprep.subr.bf16.mxu0 0
      %318 = vmatpush2.bf16.msra.mxu0 0
      %319 = vmatprep.subr.bf16.mxu0 0
      %320 = vmatpush2.bf16.msra.mxu0 0
      %321 = vmatprep.subr.bf16.mxu0 0
      %322 = vmatpush2.bf16.msra.mxu0 0
      %323 = vmatprep.subr.bf16.mxu0 0
      %324 = vmatpush2.bf16.msra.mxu0 0
      %325 = vmatprep.subr.bf16.mxu0 0
      %326 = vmatpush2.bf16.msra.mxu0 0
      %327 = vmatprep.mubr.bf16.mxu0 0
      %328 = vmatmul.mubr.bf16.gmra.mxu0 %v272
      %v329 = vpop.f32.mrf.mxu0
      %v330 = vadd.f32 0.0, %v329
      %v331 = vpop.f32.mrf.mxu0
      %v332 = vadd.f32 0.0, %v331
      %v333 = vpop.f32.mrf.mxu0
      %v334 = vadd.f32 0.0, %v333
      %v335 = vpop.f32.mrf.mxu0
      %v336 = vadd.f32 0.0, %v335
      %337 = vmatprep.mubr.bf16.mxu0 0
      %338 = vmatmul.mubr.bf16.gmra.mxu0 %v275
      %v339 = vpop.f32.mrf.mxu0
      %v340 = vadd.f32 0.0, %v339
      %v341 = vpop.f32.mrf.mxu0
      %v342 = vadd.f32 0.0, %v341
      %v343 = vpop.f32.mrf.mxu0
      %v344 = vadd.f32 0.0, %v343
      %v345 = vpop.f32.mrf.mxu0
      %v346 = vadd.f32 0.0, %v345
      %347 = vmatprep.mubr.bf16.mxu0 0
      %348 = vmatmul.mubr.bf16.gmra.mxu0 %v278
      %v349 = vpop.f32.mrf.mxu0
      %v350 = vadd.f32 0.0, %v349
      %v351 = vpop.f32.mrf.mxu0
      %v352 = vadd.f32 0.0, %v351
      %v353 = vpop.f32.mrf.mxu0
      %v354 = vadd.f32 0.0, %v353
      %v355 = vpop.f32.mrf.mxu0
      %v356 = vadd.f32 0.0, %v355
      %357 = vmatprep.mubr.bf16.mxu0 0
      %358 = vmatmul.mubr.bf16.gmra.mxu0 %v281
      %v359 = vpop.f32.mrf.mxu0
      %v360 = vadd.f32 0.0, %v359
      %v361 = vpop.f32.mrf.mxu0
      %v362 = vadd.f32 0.0, %v361
      %v363 = vpop.f32.mrf.mxu0
      %v364 = vadd.f32 0.0, %v363
      %v365 = vpop.f32.mrf.mxu0
      %v366 = vadd.f32 0.0, %v365
      %367 = vmatprep.mubr.bf16.mxu0 0
      %368 = vmatmul.mubr.bf16.gmra.mxu0 %v284
      %v369 = vpop.f32.mrf.mxu0
      %v370 = vadd.f32 0.0, %v369
      %v371 = vpop.f32.mrf.mxu0
      %v372 = vadd.f32 0.0, %v371
      %v373 = vpop.f32.mrf.mxu0
      %v374 = vadd.f32 0.0, %v373
      %v375 = vpop.f32.mrf.mxu0
      %v376 = vadd.f32 0.0, %v375
      %377 = vmatprep.mubr.bf16.mxu0 0
      %378 = vmatmul.mubr.bf16.gmra.mxu0 %v287
      %v379 = vpop.f32.mrf.mxu0
      %v380 = vadd.f32 0.0, %v379
      %v381 = vpop.f32.mrf.mxu0
      %v382 = vadd.f32 0.0, %v381
      %v383 = vpop.f32.mrf.mxu0
      %v384 = vadd.f32 0.0, %v383
      %v385 = vpop.f32.mrf.mxu0
      %v386 = vadd.f32 0.0, %v385
      %387 = vmatprep.mubr.bf16.mxu0 0
      %388 = vmatmul.mubr.bf16.gmra.mxu0 %v290
      %v389 = vpop.f32.mrf.mxu0
      %v390 = vadd.f32 0.0, %v389
      %v391 = vpop.f32.mrf.mxu0
      %v392 = vadd.f32 0.0, %v391
      %v393 = vpop.f32.mrf.mxu0
      %v394 = vadd.f32 0.0, %v393
      %v395 = vpop.f32.mrf.mxu0
      %v396 = vadd.f32 0.0, %v395
      %397 = vmatprep.mubr.bf16.mxu0 0
      %398 = vmatmul.mubr.bf16.gmra.mxu0 %v293
      %v399 = vpop.f32.mrf.mxu0
      %v400 = vadd.f32 0.0, %v399
      %v401 = vpop.f32.mrf.mxu0
      %v402 = vadd.f32 0.0, %v401
      %v403 = vpop.f32.mrf.mxu0
      %v404 = vadd.f32 0.0, %v403
      %v405 = vpop.f32.mrf.mxu0
      %v406 = vadd.f32 0.0, %v405
      %407 = vdwg.mxu0
      %v408 = vpack.c.bf16 %v334, %v330
      %v409 = vpack.c.bf16 %v336, %v332
      %v410 = vpack.c.bf16 %v344, %v340
      %v411 = vpack.c.bf16 %v346, %v342
      %v412 = vpack.c.bf16 %v354, %v350
      %v413 = vpack.c.bf16 %v356, %v352
      %v414 = vpack.c.bf16 %v364, %v360
      %v415 = vpack.c.bf16 %v366, %v362
      %v416 = vpack.c.bf16 %v374, %v370
      %v417 = vpack.c.bf16 %v376, %v372
      %v418 = vpack.c.bf16 %v384, %v380
      %v419 = vpack.c.bf16 %v386, %v382
      %v420 = vpack.c.bf16 %v394, %v390
      %v421 = vpack.c.bf16 %v396, %v392
      %v422 = vpack.c.bf16 %v404, %v400
      %v423 = vpack.c.bf16 %v406, %v402
      %v440 = vunpack.c.l.b16 %v408
      %v441 = vunpack.c.l.b16 %v409
      %v442 = vunpack.c.h.b16 %v408
      %v443 = vunpack.c.h.b16 %v409
      %v444 = vunpack.c.l.b16 %v410
      %v445 = vunpack.c.l.b16 %v411
      %v446 = vunpack.c.h.b16 %v410
      %v447 = vunpack.c.h.b16 %v411
      %v448 = vunpack.c.l.b16 %v412
      %v449 = vunpack.c.l.b16 %v413
      %v450 = vunpack.c.h.b16 %v412
      %v451 = vunpack.c.h.b16 %v413
      %v452 = vunpack.c.l.b16 %v414
      %v453 = vunpack.c.l.b16 %v415
      %v454 = vunpack.c.h.b16 %v414
      %v455 = vunpack.c.h.b16 %v415
      %v456 = vunpack.c.l.b16 %v416
      %v457 = vunpack.c.l.b16 %v417
      %v458 = vunpack.c.h.b16 %v416
      %v459 = vunpack.c.h.b16 %v417
      %v460 = vunpack.c.l.b16 %v418
      %v461 = vunpack.c.l.b16 %v419
      %v462 = vunpack.c.h.b16 %v418
      %v463 = vunpack.c.h.b16 %v419
      %v464 = vunpack.c.l.b16 %v420
      %v465 = vunpack.c.l.b16 %v421
      %v466 = vunpack.c.h.b16 %v420
      %v467 = vunpack.c.h.b16 %v421
      %v468 = vunpack.c.l.b16 %v422
      %v469 = vunpack.c.l.b16 %v423
      %v470 = vunpack.c.h.b16 %v422
      %v471 = vunpack.c.h.b16 %v423
      %v472 = vpack.c.b16 %v441, %v440
      %v473 = vpack.c.b16 %v443, %v442
      %v474 = vpack.c.b16 %v445, %v444
      %v475 = vpack.c.b16 %v447, %v446
      %v476 = vpack.c.b16 %v449, %v448
      %v477 = vpack.c.b16 %v451, %v450
      %v478 = vpack.c.b16 %v453, %v452
      %v479 = vpack.c.b16 %v455, %v454
      %v480 = vpack.c.b16 %v457, %v456
      %v481 = vpack.c.b16 %v459, %v458
      %v482 = vpack.c.b16 %v461, %v460
      %v483 = vpack.c.b16 %v463, %v462
      %v484 = vpack.c.b16 %v465, %v464
      %v485 = vpack.c.b16 %v467, %v466
      %v486 = vpack.c.b16 %v469, %v468
      %v487 = vpack.c.b16 %v471, %v470
      %504 = vst [vmem:[%s182] sm:$0xff] %v472
      %505 = vst [vmem:[%s182 + $0x8] sm:$0xff] %v473
      %506 = vst [vmem:[%s182 + $0x10] sm:$0xff] %v474
      %507 = vst [vmem:[%s182 + $0x18] sm:$0xff] %v475
      %508 = vst [vmem:[%s182 + $0x20] sm:$0xff] %v476
      %509 = vst [vmem:[%s182 + $0x28] sm:$0xff] %v477
      %510 = vst [vmem:[%s182 + $0x30] sm:$0xff] %v478
      %511 = vst [vmem:[%s182 + $0x38] sm:$0xff] %v479
      %512 = vst [vmem:[%s182 + $0x40] sm:$0xff] %v480
      %513 = vst [vmem:[%s182 + $0x48] sm:$0xff] %v481
      %514 = vst [vmem:[%s182 + $0x50] sm:$0xff] %v482
      %515 = vst [vmem:[%s182 + $0x58] sm:$0xff] %v483
      %516 = vst [vmem:[%s182 + $0x60] sm:$0xff] %v484
      %517 = vst [vmem:[%s182 + $0x68] sm:$0xff] %v485
      %518 = vst [vmem:[%s182 + $0x70] sm:$0xff] %v486
      %519 = vst [vmem:[%s182 + $0x78] sm:$0xff] %v487
      %v520 = vadd.f32 %v330, %v334
      %v521 = vadd.f32 %v520, %v340
      %v522 = vadd.f32 %v521, %v344
      %v523 = vadd.f32 %v522, %v350
      %v524 = vadd.f32 %v523, %v354
      %v525 = vadd.f32 %v524, %v360
      %v526 = vadd.f32 %v525, %v364
      %v527 = vadd.f32 %v526, %v370
      %v528 = vadd.f32 %v527, %v374
      %v529 = vadd.f32 %v528, %v380
      %v530 = vadd.f32 %v529, %v384
      %v531 = vadd.f32 %v530, %v390
      %v532 = vadd.f32 %v531, %v394
      %v533 = vadd.f32 %v532, %v400
      %v534 = vadd.f32 %v533, %v404
      %v535 = vrot.slane %v534, 4
      %v536 = vadd.f32 %v534, %v535
      %v537 = vrot.slane %v536, 2
      %v538 = vadd.f32 %v536, %v537
      %v539 = vrot.slane %v538, 1
      %v540 = vadd.f32 %v538, %v539
      %v541 = vadd.f32 %v332, %v336
      %v542 = vadd.f32 %v541, %v342
      %v543 = vadd.f32 %v542, %v346
      %v544 = vadd.f32 %v543, %v352
      %v545 = vadd.f32 %v544, %v356
      %v546 = vadd.f32 %v545, %v362
      %v547 = vadd.f32 %v546, %v366
      %v548 = vadd.f32 %v547, %v372
      %v549 = vadd.f32 %v548, %v376
      %v550 = vadd.f32 %v549, %v382
      %v551 = vadd.f32 %v550, %v386
      %v552 = vadd.f32 %v551, %v392
      %v553 = vadd.f32 %v552, %v396
      %v554 = vadd.f32 %v553, %v402
      %v555 = vadd.f32 %v554, %v406
      %v556 = vrot.slane %v555, 4
      %v557 = vadd.f32 %v555, %v556
      %v558 = vrot.slane %v557, 2
      %v559 = vadd.f32 %v557, %v558
      %v560 = vrot.slane %v559, 1
      %v561 = vadd.f32 %v559, %v560
      %v564 = vcombine.low %v540, %v561
      %v566 = vunpack.c.l.s4 1966171168
      %v567 = vunpack.c.0.s8 %v566
      %v568 = vlaneseq
      %v569 = vshrl.u32 %v568, 7
      %v570 = vsub.s32 %v567, %v569
      %v571 = vrot.slane %v564, %v570
      %v573 = vunpack.c.l.s4 1966171168
      %v574 = vunpack.c.0.s8 %v573
      %v575 = vlaneseq
      %v576 = vshrl.u32 %v575, 7
      %v577 = vsub.s32 %v574, %v576
      %v578 = vrot.slane %v571, %v577
      %v580 = vlaneseq
      %vm581 = vcmp.ge.s32.totalorder %v580, 0
      %vm582 = vcmp.lt.s32.totalorder %v580, 256
      %vm583 = vmand %vm581, %vm582
      %584 = vst.msk [vmem:[%s188] ss:$2 sm:$0x3] %vm583, %v578
      %v585 = vmul.f32 %v330, %v330
      %v586 = vmul.f32 %v332, %v332
      %v587 = vmul.f32 %v334, %v334
      %v588 = vmul.f32 %v336, %v336
      %v589 = vmul.f32 %v340, %v340
      %v590 = vmul.f32 %v342, %v342
      %v591 = vmul.f32 %v344, %v344
      %v592 = vmul.f32 %v346, %v346
      %v593 = vmul.f32 %v350, %v350
      %v594 = vmul.f32 %v352, %v352
      %v595 = vmul.f32 %v354, %v354
      %v596 = vmul.f32 %v356, %v356
      %v597 = vmul.f32 %v360, %v360
      %v598 = vmul.f32 %v362, %v362
      %v599 = vmul.f32 %v364, %v364
      %v600 = vmul.f32 %v366, %v366
      %v601 = vmul.f32 %v370, %v370
      %v602 = vmul.f32 %v372, %v372
      %v603 = vmul.f32 %v374, %v374
      %v604 = vmul.f32 %v376, %v376
      %v605 = vmul.f32 %v380, %v380
      %v606 = vmul.f32 %v382, %v382
      %v607 = vmul.f32 %v384, %v384
      %v608 = vmul.f32 %v386, %v386
      %v609 = vmul.f32 %v390, %v390
      %v610 = vmul.f32 %v392, %v392
      %v611 = vmul.f32 %v394, %v394
      %v612 = vmul.f32 %v396, %v396
      %v613 = vmul.f32 %v400, %v400
      %v614 = vmul.f32 %v402, %v402
      %v615 = vmul.f32 %v404, %v404
      %v616 = vmul.f32 %v406, %v406
      %v617 = vadd.f32 %v585, %v587
      %v618 = vadd.f32 %v617, %v589
      %v619 = vadd.f32 %v618, %v591
      %v620 = vadd.f32 %v619, %v593
      %v621 = vadd.f32 %v620, %v595
      %v622 = vadd.f32 %v621, %v597
      %v623 = vadd.f32 %v622, %v599
      %v624 = vadd.f32 %v623, %v601
      %v625 = vadd.f32 %v624, %v603
      %v626 = vadd.f32 %v625, %v605
      %v627 = vadd.f32 %v626, %v607
      %v628 = vadd.f32 %v627, %v609
      %v629 = vadd.f32 %v628, %v611
      %v630 = vadd.f32 %v629, %v613
      %v631 = vadd.f32 %v630, %v615
      %v632 = vrot.slane %v631, 4
      %v633 = vadd.f32 %v631, %v632
      %v634 = vrot.slane %v633, 2
      %v635 = vadd.f32 %v633, %v634
      %v636 = vrot.slane %v635, 1
      %v637 = vadd.f32 %v635, %v636
      %v638 = vadd.f32 %v586, %v588
      %v639 = vadd.f32 %v638, %v590
      %v640 = vadd.f32 %v639, %v592
      %v641 = vadd.f32 %v640, %v594
      %v642 = vadd.f32 %v641, %v596
      %v643 = vadd.f32 %v642, %v598
      %v644 = vadd.f32 %v643, %v600
      %v645 = vadd.f32 %v644, %v602
      %v646 = vadd.f32 %v645, %v604
      %v647 = vadd.f32 %v646, %v606
      %v648 = vadd.f32 %v647, %v608
      %v649 = vadd.f32 %v648, %v610
      %v650 = vadd.f32 %v649, %v612
      %v651 = vadd.f32 %v650, %v614
      %v652 = vadd.f32 %v651, %v616
      %v653 = vrot.slane %v652, 4
      %v654 = vadd.f32 %v652, %v653
      %v655 = vrot.slane %v654, 2
      %v656 = vadd.f32 %v654, %v655
      %v657 = vrot.slane %v656, 1
      %v658 = vadd.f32 %v656, %v657
      %v661 = vcombine.low %v637, %v658
      %v663 = vunpack.c.l.s4 1966171168
      %v664 = vunpack.c.0.s8 %v663
      %v665 = vlaneseq
      %v666 = vshrl.u32 %v665, 7
      %v667 = vsub.s32 %v664, %v666
      %v668 = vrot.slane %v661, %v667
      %v670 = vunpack.c.l.s4 1966171168
      %v671 = vunpack.c.0.s8 %v670
      %v672 = vlaneseq
      %v673 = vshrl.u32 %v672, 7
      %v674 = vsub.s32 %v671, %v673
      %v675 = vrot.slane %v668, %v674
      %s677 = scalar_lea.vmem %s188, 1
      %678 = vst.msk [vmem:[%s677] ss:$2 sm:$0x3] %vm583, %v675
      %s679 = smul.u32 16, %s15
      %p680 = scmp.lt.s32.totalorder %s679, 31
      %s681 = scalar_select %p680, %s679, 31
      %s682 = smul.addr %s681, 2
      %s683 = smul.addr %s682, 4
      %s684 = scalar_lea.vmem %s2, %s683
      %p685 = scmp.lt.s32.totalorder %s15, 1
      %s686 = scalar_select %p685, %s15, 1
      %s687 = smul.addr %s686, 2
      %s688 = smul.addr %s687, 2
      %s689 = scalar_lea.vmem %s3, %s688
      // Predicated region
      $region29: #{_lambda_.4} parent=27 // pred_check
        %p690 = pneg %p80
      $region30: #{_lambda_.4} parent=27 // pred_check_branch
        %692 = sbr.rel (%p690) target = $region32
      $region31: #{_lambda_.4} parent=27 // pred_region
        %s693 = smul.u32 16, %s15
      $region32: #{_lambda_.4} parent=27 // pred_fallthru
        _
      // Predicated region
      $region33: #{_lambda_.4} parent=27 // pred_check
        %p694 = pneg %p106
      $region34: #{_lambda_.4} parent=27 // pred_check_branch
        %696 = sbr.rel (%p694) target = $region36
      $region35: #{_lambda_.4} parent=27 // pred_region
        _
      $region36: #{_lambda_.4} parent=27 // pred_fallthru
        _
    $region28: #{_lambda_.4} parent=5 // pred_fallthru
      _
    %p697 = scmp.le.s32.totalorder 2, %s10
    // Predicated region
    $region37: #{_lambda_.4} parent=5 // pred_check
      %p698 = pneg %p697
    $region38: #{_lambda_.4} parent=5 // pred_check_branch
      %700 = sbr.rel (%p698) target = $region40
    $region39: #{_lambda_.4} parent=5 // pred_region
      %s701 = ssub.s32 %s10, 2
      // Predicated region
      $region41: #{_lambda_.4} parent=39 // pred_check
        %p702 = pneg %p86
      $region42: #{_lambda_.4} parent=39 // pred_check_branch
        %704 = sbr.rel (%p702) target = $region44
      $region43: #{_lambda_.4} parent=39 // pred_region
        %s705 = smul.u32 16, %s16
        %p706 = scmp.lt.s32.totalorder %s705, 31
        %s707 = scalar_select %p706, %s705, 31
        %s708 = smul.addr %s707, 2
        %s709 = smul.addr %s708, 4
        %s710 = scalar_lea.vmem %s2, %s709
      $region44: #{_lambda_.4} parent=39 // pred_fallthru
        _
      // Predicated region
      $region45: #{_lambda_.4} parent=39 // pred_check
        %p711 = pneg %p112
      $region46: #{_lambda_.4} parent=39 // pred_check_branch
        %713 = sbr.rel (%p711) target = $region48
      $region47: #{_lambda_.4} parent=39 // pred_region
        %p714 = scmp.lt.s32.totalorder %s16, 1
        %s715 = scalar_select %p714, %s16, 1
        %s716 = smul.addr %s715, 2
        %s717 = smul.addr %s716, 2
        %s718 = scalar_lea.vmem %s3, %s717
      $region48: #{_lambda_.4} parent=39 // pred_fallthru
        _
    $region40: #{_lambda_.4} parent=5 // pred_fallthru
      _
  $region6: #{_lambda_.4} parent=0 // loop_footer
    %s14 = sadd.s32 1, %s10
  $region7: #{_lambda_.4} parent=0 // loop_footer_branch
    %9 = sbr.rel target = $region3
  $region8: #{_lambda_.4} parent=0 // loop_exit
    _

// kernel: _lambda_.5
$region0: #{_lambda_.5}
  #allocation0 [shape = 'u32[]', space=smem, size = 0x4, offset = 0x4, fixed_abs, tag = 'smem constant byte address 0x4 - core index']
  #allocation1 [shape = 'u32[144,128]{1,0:T(1,128)}', space=vmem, size = 0x12000, scoped, tag = 'internal scratch']
  %s0 = inlined_call_operand.vmem [shape: bf16[256,256], index: 0, kind: input, shape index: {}]
  %s1 = inlined_call_operand.vmem [shape: f32[2,128], index: 1, kind: input, shape index: {}]
  %s2 = inlined_call_operand.vmem [shape: bf16[128,128], index: 2, kind: input, shape index: {}]
  %s3 = inlined_call_operand.vmem [shape: bf16[256,128], index: 3, kind: output, shape index: {0}]
  %s4 = inlined_call_operand.vmem [shape: f32[2,2,128], index: 4, kind: output, shape index: {1}]
  %5 = xla_tuple %s3, %s4
  %s6 = sld [smem:[#allocation0]]
  $region94: #{_lambda_.5} parent=0
    _
  %s8 = ssub.s32 1, %s6
  %s9 = scalar_select 0, %s8, %s6
  $region1: #{_lambda_.5} parent=0
    #allocation2 [shape = 'u8[65536]{0}', space=vmem, size = 0x10000, scoped, tag = 'input window, operand 0']
    loop: start=0, step=1, limit=4
    $region2: #{_lambda_.5} parent=1 // loop_pre_header
      _
    $region3: #{_lambda_.5} parent=1 // loop_header
      %s11 = sphi 0, %s15
      %p12 = scmp.ge.s32.totalorder %s11, 4
      %s21 = sphi 0, %s23
      %s24 = sphi 0, %s21
      %s25 = sphi 0, %s24
      %s41 = sphi 0, %s25
      %s45 = sphi 0, %s45
      %s47 = sphi 0, %s45
      %s48 = sphi 0, %s47
      %s62 = sphi 0, %s48
      %s66 = sphi 0, %s66
      %s68 = sphi 0, %s66
      %s69 = sphi 0, %s68
      %s83 = sphi 0, %s69
      %s89 = sphi 0, %s91
      %s92 = sphi 0, %s89
      %s93 = sphi 0, %s92
      %s109 = sphi 0, %s93
      %s115 = sphi 0, %s117
      %s118 = sphi 0, %s115
      %s119 = sphi 0, %s118
      %s135 = sphi 0, %s119
    $region4: #{_lambda_.5} parent=1 // loop_header_branch
      %14 = sbr.rel (%p12) target = $region8
    $region5: #{_lambda_.5} parent=1 // loop_body
      %s16 = ssub.s32 %s11, 1
      %s17 = ssub.s32 %s11, 2
      %s18 = sadd.s32 %s11, 1
      %s19 = ssub.s32 %s11, %s18
      %p20 = scmp.eq.s32.totalorder %s19, 0
      %s22 = sadd.s32 %s21, 1
      %s23 = scalar_select %p20, %s21, %s22
      %p26 = pneg %p20
      %p27 = scmp.eq.s32.totalorder %s11, 1
      %p28 = por %p26, %p27
      %p29 = scmp.ne.s32.totalorder %s21, %s24
      %p30 = scmp.eq.s32.totalorder %s11, 0
      %p31 = por %p29, %p30
      %p32 = scmp.ne.s32.totalorder %s21, %s24
      %p33 = scmp.eq.s32.totalorder %s16, 1
      %p34 = por %p32, %p33
      %p35 = scmp.ne.s32.totalorder %s24, %s25
      %p36 = scmp.eq.s32.totalorder %s16, 0
      %p37 = por %p35, %p36
      %p38 = scmp.ne.s32.totalorder %s24, %s25
      %p39 = scmp.eq.s32.totalorder %s17, 1
      %p40 = por %p38, %p39
      %p42 = scmp.ne.s32.totalorder %s25, %s41
      %p43 = scmp.eq.s32.totalorder %s17, 0
      %p44 = por %p42, %p43
      %s46 = sadd.s32 %s45, 1
      %p49 = scmp.eq.s32.totalorder %s11, 1
      %p50 = scmp.ne.s32.totalorder %s45, %s47
      %p51 = scmp.eq.s32.totalorder %s11, 0
      %p52 = por %p50, %p51
      %p53 = scmp.ne.s32.totalorder %s45, %s47
      %p54 = scmp.eq.s32.totalorder %s16, 1
      %p55 = por %p53, %p54
      %p56 = scmp.ne.s32.totalorder %s47, %s48
      %p57 = scmp.eq.s32.totalorder %s16, 0
      %p58 = por %p56, %p57
      %p59 = scmp.ne.s32.totalorder %s47, %s48
      %p60 = scmp.eq.s32.totalorder %s17, 1
      %p61 = por %p59, %p60
      %p63 = scmp.ne.s32.totalorder %s48, %s62
      %p64 = scmp.eq.s32.totalorder %s17, 0
      %p65 = por %p63, %p64
      %s67 = sadd.s32 %s66, 1
      %p70 = scmp.eq.s32.totalorder %s11, 1
      %p71 = scmp.ne.s32.totalorder %s66, %s68
      %p72 = scmp.eq.s32.totalorder %s11, 0
      %p73 = por %p71, %p72
      %p74 = scmp.ne.s32.totalorder %s66, %s68
      %p75 = scmp.eq.s32.totalorder %s16, 1
      %p76 = por %p74, %p75
      %p77 = scmp.ne.s32.totalorder %s68, %s69
      %p78 = scmp.eq.s32.totalorder %s16, 0
      %p79 = por %p77, %p78
      %p80 = scmp.ne.s32.totalorder %s68, %s69
      %p81 = scmp.eq.s32.totalorder %s17, 1
      %p82 = por %p80, %p81
      %p84 = scmp.ne.s32.totalorder %s69, %s83
      %p85 = scmp.eq.s32.totalorder %s17, 0
      %p86 = por %p84, %p85
      %s87 = ssub.s32 %s11, %s18
      %p88 = scmp.eq.s32.totalorder %s87, 0
      %s90 = sadd.s32 %s89, 1
      %s91 = scalar_select %p88, %s89, %s90
      %p94 = pneg %p88
      %p95 = scmp.eq.s32.totalorder %s11, 1
      %p96 = por %p94, %p95
      %p97 = scmp.ne.s32.totalorder %s89, %s92
      %p98 = scmp.eq.s32.totalorder %s11, 0
      %p99 = por %p97, %p98
      %p100 = scmp.ne.s32.totalorder %s89, %s92
      %p101 = scmp.eq.s32.totalorder %s16, 1
      %p102 = por %p100, %p101
      %p103 = scmp.ne.s32.totalorder %s92, %s93
      %p104 = scmp.eq.s32.totalorder %s16, 0
      %p105 = por %p103, %p104
      %p106 = scmp.ne.s32.totalorder %s92, %s93
      %p107 = scmp.eq.s32.totalorder %s17, 1
      %p108 = por %p106, %p107
      %p110 = scmp.ne.s32.totalorder %s93, %s109
      %p111 = scmp.eq.s32.totalorder %s17, 0
      %p112 = por %p110, %p111
      %s113 = ssub.s32 %s11, %s18
      %p114 = scmp.eq.s32.totalorder %s113, 0
      %s116 = sadd.s32 %s115, 1
      %s117 = scalar_select %p114, %s115, %s116
      %p120 = pneg %p114
      %p121 = scmp.eq.s32.totalorder %s11, 1
      %p122 = por %p120, %p121
      %p123 = scmp.ne.s32.totalorder %s115, %s118
      %p124 = scmp.eq.s32.totalorder %s11, 0
      %p125 = por %p123, %p124
      %p126 = scmp.ne.s32.totalorder %s115, %s118
      %p127 = scmp.eq.s32.totalorder %s16, 1
      %p128 = por %p126, %p127
      %p129 = scmp.ne.s32.totalorder %s118, %s119
      %p130 = scmp.eq.s32.totalorder %s16, 0
      %p131 = por %p129, %p130
      %p132 = scmp.ne.s32.totalorder %s118, %s119
      %p133 = scmp.eq.s32.totalorder %s17, 1
      %p134 = por %p132, %p133
      %p136 = scmp.ne.s32.totalorder %s119, %s135
      %p137 = scmp.eq.s32.totalorder %s17, 0
      %p138 = por %p136, %p137
      %p139 = scmp.le.s32.totalorder 1, %s11
      %p140 = scmp.lt.s32.totalorder %s11, 3
      %p141 = pnand %p139, %p140
      %p142 = pneg %p141
      // Predicated region
      $region9: #{_lambda_.5} parent=5 // pred_check
        _
      $region10: #{_lambda_.5} parent=5 // pred_check_branch
        %144 = sbr.rel (%p141) target = $region12
      $region11: #{_lambda_.5} parent=5 // pred_region
        %s145 = ssub.s32 %s11, 1
        // Predicated region
        $region13: #{_lambda_.5} parent=11 // pred_check
          %p146 = pneg %p58
        $region14: #{_lambda_.5} parent=11 // pred_check_branch
          %148 = sbr.rel (%p146) target = $region16
        $region15: #{_lambda_.5} parent=11 // pred_region
          _
        $region16: #{_lambda_.5} parent=11 // pred_fallthru
          _
        // Predicated region
        $region17: #{_lambda_.5} parent=11 // pred_check
          %p149 = pneg %p79
        $region18: #{_lambda_.5} parent=11 // pred_check_branch
          %151 = sbr.rel (%p149) target = $region20
        $region19: #{_lambda_.5} parent=11 // pred_region
          _
        $region20: #{_lambda_.5} parent=11 // pred_fallthru
          _
      $region12: #{_lambda_.5} parent=5 // pred_fallthru
        _
      %p152 = scmp.lt.s32.totalorder %s11, 2
      // Predicated region
      $region21: #{_lambda_.5} parent=5 // pred_check
        %p153 = pneg %p152
      $region22: #{_lambda_.5} parent=5 // pred_check_branch
        %155 = sbr.rel (%p153) target = $region24
      $region23: #{_lambda_.5} parent=5 // pred_region
        // Predicated region
        $region25: #{_lambda_.5} parent=23 // pred_check
          %p156 = pneg %p31
        $region26: #{_lambda_.5} parent=23 // pred_check_branch
          %158 = sbr.rel (%p156) target = $region28
        $region27: #{_lambda_.5} parent=23 // pred_region
          %s159 = sand.u32 %s21, 1
          %s160 = sand.u32 %s21, 1
          %s161 = smul.addr %s160, 64
          %s162 = scalar_lea.vmem [#allocation2], %s161
          %s163 = smul.u32 16, %s11
          %s164 = smul.addr %s163, 2
          %s165 = smul.addr %s164, 4
          %s166 = scalar_lea.vmem %s0, %s165
          // Predicated region
          $region29: #{_lambda_.5} parent=27 // pred_check
            _
          $region30: #{_lambda_.5} parent=27 // pred_check_branch
            %168 = sbr.rel (0) target = $region32
          $region31: #{_lambda_.5} parent=27 // pred_region
            // Predicated region
            $region33: #{_lambda_.5} parent=31 // pred_check
              _
            $region34: #{_lambda_.5} parent=31 // pred_check_branch
              %170 = sbr.rel target = $region36
            $region35: #{_lambda_.5} parent=31 // pred_region
              // Predicated region
              $region48: #{_lambda_.5} parent=35 // pred_check
                _
              $region49: #{_lambda_.5} parent=35 // pred_check_branch
                %216 = sbr.rel (0) target = $region51
              $region50: #{_lambda_.5} parent=35 // pred_region
                loop: start=0, step=1, limit=1
                $region52: #{_lambda_.5} parent=50 // loop_pre_header
                  _
                $region53: #{_lambda_.5} parent=50 // loop_header
                  %s218 = sphi 0, %s222
                  %p219 = scmp.ge.s32.totalorder %s218, 1
                  %s223 = sphi %s166, %s166
                  %s224 = sphi %s162, %s162
                $region54: #{_lambda_.5} parent=50 // loop_header_branch
                  %221 = sbr.rel (%p219) target = $region58
                $region55: #{_lambda_.5} parent=50 // loop_body
                  _
                $region56: #{_lambda_.5} parent=50 // loop_footer
                  %s222 = sadd.s32 1, %s218
                $region57: #{_lambda_.5} parent=50 // loop_footer_branch
                  %217 = sbr.rel target = $region53
                $region58: #{_lambda_.5} parent=50 // loop_exit
                  _
                %s226 = ssub.s32 16, 1
                loop: start=0, step=1, limit=1
                $region59: #{_lambda_.5} parent=50 // loop_pre_header
                  _
                $region60: #{_lambda_.5} parent=50 // loop_header
                  %s228 = sphi 0, %s232
                  %p229 = scmp.ge.s32.totalorder %s228, 1
                  %s233 = sphi %s166, %s166
                  %s234 = sphi %s162, %s162
                $region61: #{_lambda_.5} parent=50 // loop_header_branch
                  %231 = sbr.rel (%p229) target = $region65
                $region62: #{_lambda_.5} parent=50 // loop_body
                  %v235 = vld [vmem:[%s233] sm:%s226]
                  %236 = vst [vmem:[%s234] sm:%s226] %v235
                  %v237 = vld [vmem:[%s233 + $0x8] sm:%s226]
                  %238 = vst [vmem:[%s234 + $0x4] sm:%s226] %v237
                  %v239 = vld [vmem:[%s233 + $0x10] sm:%s226]
                  %240 = vst [vmem:[%s234 + $0x8] sm:%s226] %v239
                  %v241 = vld [vmem:[%s233 + $0x18] sm:%s226]
                  %242 = vst [vmem:[%s234 + $0xc] sm:%s226] %v241
                  %v243 = vld [vmem:[%s233 + $0x20] sm:%s226]
                  %244 = vst [vmem:[%s234 + $0x10] sm:%s226] %v243
                  %v245 = vld [vmem:[%s233 + $0x28] sm:%s226]
                  %246 = vst [vmem:[%s234 + $0x14] sm:%s226] %v245
                  %v247 = vld [vmem:[%s233 + $0x30] sm:%s226]
                  %248 = vst [vmem:[%s234 + $0x18] sm:%s226] %v247
                  %v249 = vld [vmem:[%s233 + $0x38] sm:%s226]
                  %250 = vst [vmem:[%s234 + $0x1c] sm:%s226] %v249
                  %v251 = vld [vmem:[%s233 + $0x40] sm:%s226]
                  %252 = vst [vmem:[%s234 + $0x20] sm:%s226] %v251
                  %v253 = vld [vmem:[%s233 + $0x48] sm:%s226]
                  %254 = vst [vmem:[%s234 + $0x24] sm:%s226] %v253
                  %v255 = vld [vmem:[%s233 + $0x50] sm:%s226]
                  %256 = vst [vmem:[%s234 + $0x28] sm:%s226] %v255
                  %v257 = vld [vmem:[%s233 + $0x58] sm:%s226]
                  %258 = vst [vmem:[%s234 + $0x2c] sm:%s226] %v257
                  %v259 = vld [vmem:[%s233 + $0x60] sm:%s226]
                  %260 = vst [vmem:[%s234 + $0x30] sm:%s226] %v259
                  %v261 = vld [vmem:[%s233 + $0x68] sm:%s226]
                  %262 = vst [vmem:[%s234 + $0x34] sm:%s226] %v261
                  %v263 = vld [vmem:[%s233 + $0x70] sm:%s226]
                  %264 = vst [vmem:[%s234 + $0x38] sm:%s226] %v263
                  %v265 = vld [vmem:[%s233 + $0x78] sm:%s226]
                  %266 = vst [vmem:[%s234 + $0x3c] sm:%s226] %v265
                $region63: #{_lambda_.5} parent=50 // loop_footer
                  %s232 = sadd.s32 1, %s228
                $region64: #{_lambda_.5} parent=50 // loop_footer_branch
                  %227 = sbr.rel target = $region60
                $region65: #{_lambda_.5} parent=50 // loop_exit
                  _
              $region51: #{_lambda_.5} parent=35 // pred_fallthru
                _
            $region36: #{_lambda_.5} parent=31 // pred_fallthru
              _
            // Predicated region
            $region37: #{_lambda_.5} parent=31 // pred_check
              _
            $region38: #{_lambda_.5} parent=31 // pred_check_branch
              %172 = sbr.rel (0) target = $region40
            $region39: #{_lambda_.5} parent=31 // pred_region
              %s174 = ssub.s32 16, 1
              loop: start=0, step=1, limit=1
              $region41: #{_lambda_.5} parent=39 // loop_pre_header
                _
              $region42: #{_lambda_.5} parent=39 // loop_header
                %s176 = sphi 0, %s180
                %p177 = scmp.ge.s32.totalorder %s176, 1
                %s181 = sphi %s166, %s166
                %s182 = sphi %s162, %s162
              $region43: #{_lambda_.5} parent=39 // loop_header_branch
                %179 = sbr.rel (%p177) target = $region47
              $region44: #{_lambda_.5} parent=39 // loop_body
                %v183 = vld [vmem:[%s181] sm:%s174]
                %184 = vst [vmem:[%s182] sm:%s174] %v183
                %v185 = vld [vmem:[%s181 + $0x8] sm:%s174]
                %186 = vst [vmem:[%s182 + $0x4] sm:%s174] %v185
                %v187 = vld [vmem:[%s181 + $0x10] sm:%s174]
                %188 = vst [vmem:[%s182 + $0x8] sm:%s174] %v187
                %v189 = vld [vmem:[%s181 + $0x18] sm:%s174]
                %190 = vst [vmem:[%s182 + $0xc] sm:%s174] %v189
                %v191 = vld [vmem:[%s181 + $0x20] sm:%s174]
                %192 = vst [vmem:[%s182 + $0x10] sm:%s174] %v191
                %v193 = vld [vmem:[%s181 + $0x28] sm:%s174]
                %194 = vst [vmem:[%s182 + $0x14] sm:%s174] %v193
                %v195 = vld [vmem:[%s181 + $0x30] sm:%s174]
                %196 = vst [vmem:[%s182 + $0x18] sm:%s174] %v195
                %v197 = vld [vmem:[%s181 + $0x38] sm:%s174]
                %198 = vst [vmem:[%s182 + $0x1c] sm:%s174] %v197
                %v199 = vld [vmem:[%s181 + $0x40] sm:%s174]
                %200 = vst [vmem:[%s182 + $0x20] sm:%s174] %v199
                %v201 = vld [vmem:[%s181 + $0x48] sm:%s174]
                %202 = vst [vmem:[%s182 + $0x24] sm:%s174] %v201
                %v203 = vld [vmem:[%s181 + $0x50] sm:%s174]
                %204 = vst [vmem:[%s182 + $0x28] sm:%s174] %v203
                %v205 = vld [vmem:[%s181 + $0x58] sm:%s174]
                %206 = vst [vmem:[%s182 + $0x2c] sm:%s174] %v205
                %v207 = vld [vmem:[%s181 + $0x60] sm:%s174]
                %208 = vst [vmem:[%s182 + $0x30] sm:%s174] %v207
                %v209 = vld [vmem:[%s181 + $0x68] sm:%s174]
                %210 = vst [vmem:[%s182 + $0x34] sm:%s174] %v209
                %v211 = vld [vmem:[%s181 + $0x70] sm:%s174]
                %212 = vst [vmem:[%s182 + $0x38] sm:%s174] %v211
                %v213 = vld [vmem:[%s181 + $0x78] sm:%s174]
                %214 = vst [vmem:[%s182 + $0x3c] sm:%s174] %v213
              $region45: #{_lambda_.5} parent=39 // loop_footer
                %s180 = sadd.s32 1, %s176
              $region46: #{_lambda_.5} parent=39 // loop_footer_branch
                %175 = sbr.rel target = $region42
              $region47: #{_lambda_.5} parent=39 // loop_exit
                _
            $region40: #{_lambda_.5} parent=31 // pred_fallthru
              _
          $region32: #{_lambda_.5} parent=27 // pred_fallthru
            _
          %267 = vnop
        $region28: #{_lambda_.5} parent=23 // pred_fallthru
          _
      $region24: #{_lambda_.5} parent=5 // pred_fallthru
        _
      %p268 = scmp.le.s32.totalorder 1, %s11
      %p269 = scmp.lt.s32.totalorder %s11, 3
      %p270 = pnand %p268, %p269
      %p271 = pneg %p270
      // Predicated region
      $region66: #{_lambda_.5} parent=5 // pred_check
        _
      $region67: #{_lambda_.5} parent=5 // pred_check_branch
        %273 = sbr.rel (%p270) target = $region69
      $region68: #{_lambda_.5} parent=5 // pred_region
        %s274 = ssub.s32 %s11, 1
        %s275 = sand.u32 %s24, 1
        %s276 = sand.u32 %s24, 1
        %s277 = smul.addr %s276, 64
        %s278 = scalar_lea.vmem [#allocation2], %s277
        // Predicated region
        $region70: #{_lambda_.5} parent=68 // pred_check
          %p279 = pneg %p37
        $region71: #{_lambda_.5} parent=68 // pred_check_branch
          %281 = sbr.rel (%p279) target = $region73
        $region72: #{_lambda_.5} parent=68 // pred_region
          _
        $region73: #{_lambda_.5} parent=68 // pred_fallthru
          _
        %s282 = sand.u32 %s24, 1
        %s283 = sand.u32 %s24, 1
        %s284 = smul.addr %s283, 64
        %s285 = scalar_lea.vmem [#allocation2], %s284
        %p286 = pneg %p37
        %p287 = pneg %p34
        %p288 = pneg %p58
        %p289 = pneg %p55
        %p290 = pneg %p79
        %p291 = pneg %p76
        %p292 = pneg %p105
        %p293 = pneg %p102
        %s294 = smul.u32 16, %s16
        %p295 = scmp.lt.s32.totalorder %s294, 31
        %s296 = scalar_select %p295, %s294, 31
        %s297 = smul.addr %s296, 4
        %s298 = scalar_lea.vmem %s3, %s297
        %p299 = pneg %p131
        %p300 = pneg %p128
        %p301 = scmp.lt.s32.totalorder %s16, 1
        %s302 = scalar_select %p301, %s16, 1
        %s303 = smul.addr %s302, 2
        %s304 = scalar_lea.vmem %s4, %s303
        %s305 = smul.u32 16, %s16
        %s306 = smul.u32 16, %s16
        %p307 = scmp.lt.s32.totalorder %s306, 31
        %s308 = scalar_select %p307, %s306, 31
        %s309 = smul.addr %s308, 4
        %s310 = scalar_lea.vmem %s3, %s309
        %s311 = smul.u32 16, %s16
        %p312 = scmp.lt.s32.totalorder %s16, 1
        %s313 = scalar_select %p312, %s16, 1
        %s314 = smul.addr %s313, 2
        %s315 = scalar_lea.vmem %s4, %s314
        %v317 = vld [vmem:[%s278] sm:$0xf]
        %v318 = vld [vmem:[%s278 + $0x4] sm:$0xf]
        %v319 = vld [vmem:[%s278 + $0x8] sm:$0xf]
        %v320 = vld [vmem:[%s278 + $0xc] sm:$0xf]
        %v321 = vld [vmem:[%s278 + $0x10] sm:$0xf]
        %v322 = vld [vmem:[%s278 + $0x14] sm:$0xf]
        %v323 = vld [vmem:[%s278 + $0x18] sm:$0xf]
        %v324 = vld [vmem:[%s278 + $0x1c] sm:$0xf]
        %v325 = vld [vmem:[%s278 + $0x20] sm:$0xf]
        %v326 = vld [vmem:[%s278 + $0x24] sm:$0xf]
        %v327 = vld [vmem:[%s278 + $0x28] sm:$0xf]
        %v328 = vld [vmem:[%s278 + $0x2c] sm:$0xf]
        %v329 = vld [vmem:[%s278 + $0x30] sm:$0xf]
        %v330 = vld [vmem:[%s278 + $0x34] sm:$0xf]
        %v331 = vld [vmem:[%s278 + $0x38] sm:$0xf]
        %v332 = vld [vmem:[%s278 + $0x3c] sm:$0xf]
        %v333 = vunpack.c.l.bf16 %v317
        %v334 = vunpack.c.l.bf16 %v318
        %v335 = vunpack.c.l.bf16 %v319
        %v336 = vunpack.c.l.bf16 %v320
        %v337 = vunpack.c.l.bf16 %v321
        %v338 = vunpack.c.l.bf16 %v322
        %v339 = vunpack.c.l.bf16 %v323
        %v340 = vunpack.c.l.bf16 %v324
        %v341 = vunpack.c.l.bf16 %v325
        %v342 = vunpack.c.l.bf16 %v326
        %v343 = vunpack.c.l.bf16 %v327
        %v344 = vunpack.c.l.bf16 %v328
        %v345 = vunpack.c.l.bf16 %v329
        %v346 = vunpack.c.l.bf16 %v330
        %v347 = vunpack.c.l.bf16 %v331
        %v348 = vunpack.c.l.bf16 %v332
        %v349 = vld [vmem:[%s1] sm:$0x1]
        %v350 = vlaneseq
        %v351 = vshrl.u32 %v350, 7
        %v352 = vsub.s32 0, %v351
        %v353 = vrot.slane %v349, %v352
        %v354 = vmul.f32 %v333, %v353
        %v355 = vmul.f32 %v334, %v353
        %v356 = vmul.f32 %v335, %v353
        %v357 = vmul.f32 %v336, %v353
        %v358 = vmul.f32 %v337, %v353
        %v359 = vmul.f32 %v338, %v353
        %v360 = vmul.f32 %v339, %v353
        %v361 = vmul.f32 %v340, %v353
        %v362 = vmul.f32 %v341, %v353
        %v363 = vmul.f32 %v342, %v353
        %v364 = vmul.f32 %v343, %v353
        %v365 = vmul.f32 %v344, %v353
        %v366 = vmul.f32 %v345, %v353
        %v367 = vmul.f32 %v346, %v353
        %v368 = vmul.f32 %v347, %v353
        %v369 = vmul.f32 %v348, %v353
        %v370 = vld [vmem:[%s1 + $0x1] sm:$0x1]
        %v371 = vlaneseq
        %v372 = vshrl.u32 %v371, 7
        %v373 = vsub.s32 0, %v372
        %v374 = vrot.slane %v370, %v373
        %v375 = vadd.f32 %v354, %v374
        %v376 = vadd.f32 %v355, %v374
        %v377 = vadd.f32 %v356, %v374
        %v378 = vadd.f32 %v357, %v374
        %v379 = vadd.f32 %v358, %v374
        %v380 = vadd.f32 %v359, %v374
        %v381 = vadd.f32 %v360, %v374
        %v382 = vadd.f32 %v361, %v374
        %v383 = vadd.f32 %v362, %v374
        %v384 = vadd.f32 %v363, %v374
        %v385 = vadd.f32 %v364, %v374
        %v386 = vadd.f32 %v365, %v374
        %v387 = vadd.f32 %v366, %v374
        %v388 = vadd.f32 %v367, %v374
        %v389 = vadd.f32 %v368, %v374
        %v390 = vadd.f32 %v369, %v374
        %vm391 = vcmp.gt.f32.partialorder %v375, 0.0
        %vm392 = vcmp.gt.f32.partialorder %v376, 0.0
        %vm393 = vcmp.gt.f32.partialorder %v377, 0.0
        %vm394 = vcmp.gt.f32.partialorder %v378, 0.0
        %vm395 = vcmp.gt.f32.partialorder %v379, 0.0
        %vm396 = vcmp.gt.f32.partialorder %v380, 0.0
        %vm397 = vcmp.gt.f32.partialorder %v381, 0.0
        %vm398 = vcmp.gt.f32.partialorder %v382, 0.0
        %vm399 = vcmp.gt.f32.partialorder %v383, 0.0
        %vm400 = vcmp.gt.f32.partialorder %v384, 0.0
        %vm401 = vcmp.gt.f32.partialorder %v385, 0.0
        %vm402 = vcmp.gt.f32.partialorder %v386, 0.0
        %vm403 = vcmp.gt.f32.partialorder %v387, 0.0
        %vm404 = vcmp.gt.f32.partialorder %v388, 0.0
        %vm405 = vcmp.gt.f32.partialorder %v389, 0.0
        %vm406 = vcmp.gt.f32.partialorder %v390, 0.0
        %v407 = vmul.f32 %v375, 1.442695
        %v408 = vpow.pop %v407
        %v409 = vmul.f32 %v376, 1.442695
        %v410 = vpow.pop %v409
        %v411 = vmul.f32 %v377, 1.442695
        %v412 = vpow.pop %v411
        %v413 = vmul.f32 %v378, 1.442695
        %v414 = vpow.pop %v413
        %v415 = vmul.f32 %v379, 1.442695
        %v416 = vpow.pop %v415
        %v417 = vmul.f32 %v380, 1.442695
        %v418 = vpow.pop %v417
        %v419 = vmul.f32 %v381, 1.442695
        %v420 = vpow.pop %v419
        %v421 = vmul.f32 %v382, 1.442695
        %v422 = vpow.pop %v421
        %v423 = vmul.f32 %v383, 1.442695
        %v424 = vpow.pop %v423
        %v425 = vmul.f32 %v384, 1.442695
        %v426 = vpow.pop %v425
        %v427 = vmul.f32 %v385, 1.442695
        %v428 = vpow.pop %v427
        %v429 = vmul.f32 %v386, 1.442695
        %v430 = vpow.pop %v429
        %v431 = vmul.f32 %v387, 1.442695
        %v432 = vpow.pop %v431
        %v433 = vmul.f32 %v388, 1.442695
        %v434 = vpow.pop %v433
        %v435 = vmul.f32 %v389, 1.442695
        %v436 = vpow.pop %v435
        %v437 = vmul.f32 %v390, 1.442695
        %v438 = vpow.pop %v437
        %v439 = vsub.f32 %v408, 1.0
        %v440 = vsub.f32 %v410, 1.0
        %v441 = vsub.f32 %v412, 1.0
        %v442 = vsub.f32 %v414, 1.0
        %v443 = vsub.f32 %v416, 1.0
        %v444 = vsub.f32 %v418, 1.0
        %v445 = vsub.f32 %v420, 1.0
        %v446 = vsub.f32 %v422, 1.0
        %v447 = vsub.f32 %v424, 1.0
        %v448 = vsub.f32 %v426, 1.0
        %v449 = vsub.f32 %v428, 1.0
        %v450 = vsub.f32 %v430, 1.0
        %v451 = vsub.f32 %v432, 1.0
        %v452 = vsub.f32 %v434, 1.0
        %v453 = vsub.f32 %v436, 1.0
        %v454 = vsub.f32 %v438, 1.0
        %v455 = vmul.f32 %v439, 1.6732632
        %v456 = vmul.f32 %v440, 1.6732632
        %v457 = vmul.f32 %v441, 1.6732632
        %v458 = vmul.f32 %v442, 1.6732632
        %v459 = vmul.f32 %v443, 1.6732632
        %v460 = vmul.f32 %v444, 1.6732632
        %v461 = vmul.f32 %v445, 1.6732632
        %v462 = vmul.f32 %v446, 1.6732632
        %v463 = vmul.f32 %v447, 1.6732632
        %v464 = vmul.f32 %v448, 1.6732632
        %v465 = vmul.f32 %v449, 1.6732632
        %v466 = vmul.f32 %v450, 1.6732632
        %v467 = vmul.f32 %v451, 1.6732632
        %v468 = vmul.f32 %v452, 1.6732632
        %v469 = vmul.f32 %v453, 1.6732632
        %v470 = vmul.f32 %v454, 1.6732632
        %v471 = vsel %vm391, %v375, %v455
        %v472 = vsel %vm392, %v376, %v456
        %v473 = vsel %vm393, %v377, %v457
        %v474 = vsel %vm394, %v378, %v458
        %v475 = vsel %vm395, %v379, %v459
        %v476 = vsel %vm396, %v380, %v460
        %v477 = vsel %vm397, %v381, %v461
        %v478 = vsel %vm398, %v382, %v462
        %v479 = vsel %vm399, %v383, %v463
        %v480 = vsel %vm400, %v384, %v464
        %v481 = vsel %vm401, %v385, %v465
        %v482 = vsel %vm402, %v386, %v466
        %v483 = vsel %vm403, %v387, %v467
        %v484 = vsel %vm404, %v388, %v468
        %v485 = vsel %vm405, %v389, %v469
        %v486 = vsel %vm406, %v390, %v470
        %v487 = vmul.f32 %v471, 1.050701
        %v488 = vmul.f32 %v472, 1.050701
        %v489 = vmul.f32 %v473, 1.050701
        %v490 = vmul.f32 %v474, 1.050701
        %v491 = vmul.f32 %v475, 1.050701
        %v492 = vmul.f32 %v476, 1.050701
        %v493 = vmul.f32 %v477, 1.050701
        %v494 = vmul.f32 %v478, 1.050701
        %v495 = vmul.f32 %v479, 1.050701
        %v496 = vmul.f32 %v480, 1.050701
        %v497 = vmul.f32 %v481, 1.050701
        %v498 = vmul.f32 %v482, 1.050701
        %v499 = vmul.f32 %v483, 1.050701
        %v500 = vmul.f32 %v484, 1.050701
        %v501 = vmul.f32 %v485, 1.050701
        %v502 = vmul.f32 %v486, 1.050701
        %v503 = vpack.c.bf16 %v488, %v487
        %v504 = vpack.c.bf16 %v490, %v489
        %v505 = vpack.c.bf16 %v492, %v491
        %v506 = vpack.c.bf16 %v494, %v493
        %v507 = vpack.c.bf16 %v496, %v495
        %v508 = vpack.c.bf16 %v498, %v497
        %v509 = vpack.c.bf16 %v500, %v499
        %v510 = vpack.c.bf16 %v502, %v501
        %v511 = vld [vmem:[%s2] sm:$0xf]
        %v512 = vld [vmem:[%s2 + $0x4] sm:$0xf]
        %v513 = vld [vmem:[%s2 + $0x8] sm:$0xf]
        %v514 = vld [vmem:[%s2 + $0xc] sm:$0xf]
        %v515 = vld [vmem:[%s2 + $0x10] sm:$0xf]
        %v516 = vld [vmem:[%s2 + $0x14] sm:$0xf]
        %v517 = vld [vmem:[%s2 + $0x18] sm:$0xf]
        %v518 = vld [vmem:[%s2 + $0x1c] sm:$0xf]
        %v519 = vld [vmem:[%s2 + $0x20] sm:$0xf]
        %v520 = vld [vmem:[%s2 + $0x24] sm:$0xf]
        %v521 = vld [vmem:[%s2 + $0x28] sm:$0xf]
        %v522 = vld [vmem:[%s2 + $0x2c] sm:$0xf]
        %v523 = vld [vmem:[%s2 + $0x30] sm:$0xf]
        %v524 = vld [vmem:[%s2 + $0x34] sm:$0xf]
        %v525 = vld [vmem:[%s2 + $0x38] sm:$0xf]
        %v526 = vld [vmem:[%s2 + $0x3c] sm:$0xf]
        %v543 = vunpack.c.l.b16 %v511
        %v544 = vunpack.c.l.b16 %v512
        %v545 = vunpack.c.l.b16 %v513
        %v546 = vunpack.c.l.b16 %v514
        %v547 = vunpack.c.l.b16 %v515
        %v548 = vunpack.c.l.b16 %v516
        %v549 = vunpack.c.l.b16 %v517
        %v550 = vunpack.c.l.b16 %v518
        %v551 = vunpack.c.l.b16 %v519
        %v552 = vunpack.c.l.b16 %v520
        %v553 = vunpack.c.l.b16 %v521
        %v554 = vunpack.c.l.b16 %v522
        %v555 = vunpack.c.l.b16 %v523
        %v556 = vunpack.c.l.b16 %v524
        %v557 = vunpack.c.l.b16 %v525
        %v558 = vunpack.c.l.b16 %v526
        %v559 = vpack.c.b16 %v544, %v543
        %v560 = vpack.c.b16 %v546, %v545
        %v561 = vpack.c.b16 %v548, %v547
        %v562 = vpack.c.b16 %v550, %v549
        %v563 = vpack.c.b16 %v552, %v551
        %v564 = vpack.c.b16 %v554, %v553
        %v565 = vpack.c.b16 %v556, %v555
        %v566 = vpack.c.b16 %v558, %v557
        %575 = vmatprep.subr.bf16.mxu0 0
        %576 = vmatpush1.bf16.msra.mxu0 %v566
        %577 = vmatprep.subr.bf16.mxu0 0
        %578 = vmatpush1.bf16.msra.mxu0 %v565
        %579 = vmatprep.subr.bf16.mxu0 0
        %580 = vmatpush1.bf16.msra.mxu0 %v564
        %581 = vmatprep.subr.bf16.mxu0 0
        %582 = vmatpush1.bf16.msra.mxu0 %v563
        %583 = vmatprep.subr.bf16.mxu0 0
        %584 = vmatpush1.bf16.msra.mxu0 %v562
        %585 = vmatprep.subr.bf16.mxu0 0
        %586 = vmatpush1.bf16.msra.mxu0 %v561
        %587 = vmatprep.subr.bf16.mxu0 0
        %588 = vmatpush1.bf16.msra.mxu0 %v560
        %589 = vmatprep.subr.bf16.mxu0 0
        %590 = vmatpush1.bf16.msra.mxu0 %v559
        %591 = vmatprep.subr.bf16.mxu0 0
        %592 = vmatpush2.bf16.msra.mxu0 0
        %593 = vmatprep.subr.bf16.mxu0 0
        %594 = vmatpush2.bf16.msra.mxu0 0
        %595 = vmatprep.subr.bf16.mxu0 0
        %596 = vmatpush2.bf16.msra.mxu0 0
        %597 = vmatprep.subr.bf16.mxu0 0
        %598 = vmatpush2.bf16.msra.mxu0 0
        %599 = vmatprep.subr.bf16.mxu0 0
        %600 = vmatpush2.bf16.msra.mxu0 0
        %601 = vmatprep.subr.bf16.mxu0 0
        %602 = vmatpush2.bf16.msra.mxu0 0
        %603 = vmatprep.subr.bf16.mxu0 0
        %604 = vmatpush2.bf16.msra.mxu0 0
        %605 = vmatprep.subr.bf16.mxu0 0
        %606 = vmatpush2.bf16.msra.mxu0 0
        %607 = vmatprep.mubr.bf16.mxu0 0
        %608 = vmatmul.mubr.bf16.gmra.mxu0 %v503
        %v609 = vpop.f32.mrf.mxu0
        %v610 = vadd.f32 0.0, %v609
        %v611 = vpop.f32.mrf.mxu0
        %v612 = vpop.f32.mrf.mxu0
        %v613 = vadd.f32 0.0, %v612
        %v614 = vpop.f32.mrf.mxu0
        %615 = vmatprep.mubr.bf16.mxu0 0
        %616 = vmatmul.mubr.bf16.gmra.mxu0 %v504
        %v617 = vpop.f32.mrf.mxu0
        %v618 = vadd.f32 0.0, %v617
        %v619 = vpop.f32.mrf.mxu0
        %v620 = vpop.f32.mrf.mxu0
        %v621 = vadd.f32 0.0, %v620
        %v622 = vpop.f32.mrf.mxu0
        %623 = vmatprep.mubr.bf16.mxu0 0
        %624 = vmatmul.mubr.bf16.gmra.mxu0 %v505
        %v625 = vpop.f32.mrf.mxu0
        %v626 = vadd.f32 0.0, %v625
        %v627 = vpop.f32.mrf.mxu0
        %v628 = vpop.f32.mrf.mxu0
        %v629 = vadd.f32 0.0, %v628
        %v630 = vpop.f32.mrf.mxu0
        %631 = vmatprep.mubr.bf16.mxu0 0
        %632 = vmatmul.mubr.bf16.gmra.mxu0 %v506
        %v633 = vpop.f32.mrf.mxu0
        %v634 = vadd.f32 0.0, %v633
        %v635 = vpop.f32.mrf.mxu0
        %v636 = vpop.f32.mrf.mxu0
        %v637 = vadd.f32 0.0, %v636
        %v638 = vpop.f32.mrf.mxu0
        %639 = vmatprep.mubr.bf16.mxu0 0
        %640 = vmatmul.mubr.bf16.gmra.mxu0 %v507
        %v641 = vpop.f32.mrf.mxu0
        %v642 = vadd.f32 0.0, %v641
        %v643 = vpop.f32.mrf.mxu0
        %v644 = vpop.f32.mrf.mxu0
        %v645 = vadd.f32 0.0, %v644
        %v646 = vpop.f32.mrf.mxu0
        %647 = vmatprep.mubr.bf16.mxu0 0
        %648 = vmatmul.mubr.bf16.gmra.mxu0 %v508
        %v649 = vpop.f32.mrf.mxu0
        %v650 = vadd.f32 0.0, %v649
        %v651 = vpop.f32.mrf.mxu0
        %v652 = vpop.f32.mrf.mxu0
        %v653 = vadd.f32 0.0, %v652
        %v654 = vpop.f32.mrf.mxu0
        %655 = vmatprep.mubr.bf16.mxu0 0
        %656 = vmatmul.mubr.bf16.gmra.mxu0 %v509
        %v657 = vpop.f32.mrf.mxu0
        %v658 = vadd.f32 0.0, %v657
        %v659 = vpop.f32.mrf.mxu0
        %v660 = vpop.f32.mrf.mxu0
        %v661 = vadd.f32 0.0, %v660
        %v662 = vpop.f32.mrf.mxu0
        %663 = vmatprep.mubr.bf16.mxu0 0
        %664 = vmatmul.mubr.bf16.gmra.mxu0 %v510
        %v665 = vpop.f32.mrf.mxu0
        %v666 = vadd.f32 0.0, %v665
        %v667 = vpop.f32.mrf.mxu0
        %v668 = vpop.f32.mrf.mxu0
        %v669 = vadd.f32 0.0, %v668
        %v670 = vpop.f32.mrf.mxu0
        %671 = vdwg.mxu0
        %v672 = vpack.c.bf16 %v613, %v610
        %v673 = vpack.c.bf16 %v621, %v618
        %v674 = vpack.c.bf16 %v629, %v626
        %v675 = vpack.c.bf16 %v637, %v634
        %v676 = vpack.c.bf16 %v645, %v642
        %v677 = vpack.c.bf16 %v653, %v650
        %v678 = vpack.c.bf16 %v661, %v658
        %v679 = vpack.c.bf16 %v669, %v666
        %v688 = vunpack.c.l.b16 %v672
        %v689 = vunpack.c.h.b16 %v672
        %v690 = vunpack.c.l.b16 %v673
        %v691 = vunpack.c.h.b16 %v673
        %v692 = vunpack.c.l.b16 %v674
        %v693 = vunpack.c.h.b16 %v674
        %v694 = vunpack.c.l.b16 %v675
        %v695 = vunpack.c.h.b16 %v675
        %v696 = vunpack.c.l.b16 %v676
        %v697 = vunpack.c.h.b16 %v676
        %v698 = vunpack.c.l.b16 %v677
        %v699 = vunpack.c.h.b16 %v677
        %v700 = vunpack.c.l.b16 %v678
        %v701 = vunpack.c.h.b16 %v678
        %v702 = vunpack.c.l.b16 %v679
        %v703 = vunpack.c.h.b16 %v679
        %v704 = vpack.c.b16 %v688, %v688
        %v705 = vpack.c.b16 %v689, %v689
        %v706 = vpack.c.b16 %v690, %v690
        %v707 = vpack.c.b16 %v691, %v691
        %v708 = vpack.c.b16 %v692, %v692
        %v709 = vpack.c.b16 %v693, %v693
        %v710 = vpack.c.b16 %v694, %v694
        %v711 = vpack.c.b16 %v695, %v695
        %v712 = vpack.c.b16 %v696, %v696
        %v713 = vpack.c.b16 %v697, %v697
        %v714 = vpack.c.b16 %v698, %v698
        %v715 = vpack.c.b16 %v699, %v699
        %v716 = vpack.c.b16 %v700, %v700
        %v717 = vpack.c.b16 %v701, %v701
        %v718 = vpack.c.b16 %v702, %v702
        %v719 = vpack.c.b16 %v703, %v703
        %736 = vst [vmem:[%s310] sm:$0xf] %v704
        %737 = vst [vmem:[%s310 + $0x4] sm:$0xf] %v705
        %738 = vst [vmem:[%s310 + $0x8] sm:$0xf] %v706
        %739 = vst [vmem:[%s310 + $0xc] sm:$0xf] %v707
        %740 = vst [vmem:[%s310 + $0x10] sm:$0xf] %v708
        %741 = vst [vmem:[%s310 + $0x14] sm:$0xf] %v709
        %742 = vst [vmem:[%s310 + $0x18] sm:$0xf] %v710
        %743 = vst [vmem:[%s310 + $0x1c] sm:$0xf] %v711
        %744 = vst [vmem:[%s310 + $0x20] sm:$0xf] %v712
        %745 = vst [vmem:[%s310 + $0x24] sm:$0xf] %v713
        %746 = vst [vmem:[%s310 + $0x28] sm:$0xf] %v714
        %747 = vst [vmem:[%s310 + $0x2c] sm:$0xf] %v715
        %748 = vst [vmem:[%s310 + $0x30] sm:$0xf] %v716
        %749 = vst [vmem:[%s310 + $0x34] sm:$0xf] %v717
        %750 = vst [vmem:[%s310 + $0x38] sm:$0xf] %v718
        %751 = vst [vmem:[%s310 + $0x3c] sm:$0xf] %v719
        %v752 = vadd.f32 %v610, %v613
        %v753 = vadd.f32 %v752, %v618
        %v754 = vadd.f32 %v753, %v621
        %v755 = vadd.f32 %v754, %v626
        %v756 = vadd.f32 %v755, %v629
        %v757 = vadd.f32 %v756, %v634
        %v758 = vadd.f32 %v757, %v637
        %v759 = vadd.f32 %v758, %v642
        %v760 = vadd.f32 %v759, %v645
        %v761 = vadd.f32 %v760, %v650
        %v762 = vadd.f32 %v761, %v653
        %v763 = vadd.f32 %v762, %v658
        %v764 = vadd.f32 %v763, %v661
        %v765 = vadd.f32 %v764, %v666
        %v766 = vadd.f32 %v765, %v669
        %v767 = vrot.slane %v766, 4
        %v768 = vadd.f32 %v766, %v767
        %v769 = vrot.slane %v768, 2
        %v770 = vadd.f32 %v768, %v769
        %v771 = vrot.slane %v770, 1
        %v772 = vadd.f32 %v770, %v771
        %773 = vst [vmem:[%s315] sm:$0x1] %v772
        %v774 = vmul.f32 %v610, %v610
        %v775 = vmul.f32 %v613, %v613
        %v776 = vmul.f32 %v618, %v618
        %v777 = vmul.f32 %v621, %v621
        %v778 = vmul.f32 %v626, %v626
        %v779 = vmul.f32 %v629, %v629
        %v780 = vmul.f32 %v634, %v634
        %v781 = vmul.f32 %v637, %v637
        %v782 = vmul.f32 %v642, %v642
        %v783 = vmul.f32 %v645, %v645
        %v784 = vmul.f32 %v650, %v650
        %v785 = vmul.f32 %v653, %v653
        %v786 = vmul.f32 %v658, %v658
        %v787 = vmul.f32 %v661, %v661
        %v788 = vmul.f32 %v666, %v666
        %v789 = vmul.f32 %v669, %v669
        %v790 = vadd.f32 %v774, %v775
        %v791 = vadd.f32 %v790, %v776
        %v792 = vadd.f32 %v791, %v777
        %v793 = vadd.f32 %v792, %v778
        %v794 = vadd.f32 %v793, %v779
        %v795 = vadd.f32 %v794, %v780
        %v796 = vadd.f32 %v795, %v781
        %v797 = vadd.f32 %v796, %v782
        %v798 = vadd.f32 %v797, %v783
        %v799 = vadd.f32 %v798, %v784
        %v800 = vadd.f32 %v799, %v785
        %v801 = vadd.f32 %v800, %v786
        %v802 = vadd.f32 %v801, %v787
        %v803 = vadd.f32 %v802, %v788
        %v804 = vadd.f32 %v803, %v789
        %v805 = vrot.slane %v804, 4
        %v806 = vadd.f32 %v804, %v805
        %v807 = vrot.slane %v806, 2
        %v808 = vadd.f32 %v806, %v807
        %v809 = vrot.slane %v808, 1
        %v810 = vadd.f32 %v808, %v809
        %811 = vst [vmem:[%s315 + $0x1] sm:$0x1] %v810
        %s812 = smul.u32 16, %s16
        %p813 = scmp.lt.s32.totalorder %s812, 31
        %s814 = scalar_select %p813, %s812, 31
        %s815 = smul.addr %s814, 4
        %s816 = scalar_lea.vmem %s3, %s815
        %p817 = scmp.lt.s32.totalorder %s16, 1
        %s818 = scalar_select %p817, %s16, 1
        %s819 = smul.addr %s818, 2
        %s820 = scalar_lea.vmem %s4, %s819
        // Predicated region
        $region74: #{_lambda_.5} parent=68 // pred_check
          %p821 = pneg %p102
        $region75: #{_lambda_.5} parent=68 // pred_check_branch
          %823 = sbr.rel (%p821) target = $region77
        $region76: #{_lambda_.5} parent=68 // pred_region
          %s824 = smul.u32 16, %s16
        $region77: #{_lambda_.5} parent=68 // pred_fallthru
          _
        // Predicated region
        $region78: #{_lambda_.5} parent=68 // pred_check
          %p825 = pneg %p128
        $region79: #{_lambda_.5} parent=68 // pred_check_branch
          %827 = sbr.rel (%p825) target = $region81
        $region80: #{_lambda_.5} parent=68 // pred_region
          _
        $region81: #{_lambda_.5} parent=68 // pred_fallthru
          _
      $region69: #{_lambda_.5} parent=5 // pred_fallthru
        _
      %p828 = scmp.le.s32.totalorder 2, %s11
      // Predicated region
      $region82: #{_lambda_.5} parent=5 // pred_check
        %p829 = pneg %p828
      $region83: #{_lambda_.5} parent=5 // pred_check_branch
        %831 = sbr.rel (%p829) target = $region85
      $region84: #{_lambda_.5} parent=5 // pred_region
        %s832 = ssub.s32 %s11, 2
        // Predicated region
        $region86: #{_lambda_.5} parent=84 // pred_check
          %p833 = pneg %p108
        $region87: #{_lambda_.5} parent=84 // pred_check_branch
          %835 = sbr.rel (%p833) target = $region89
        $region88: #{_lambda_.5} parent=84 // pred_region
          %s836 = smul.u32 16, %s17
          %p837 = scmp.lt.s32.totalorder %s836, 31
          %s838 = scalar_select %p837, %s836, 31
          %s839 = smul.addr %s838, 4
          %s840 = scalar_lea.vmem %s3, %s839
        $region89: #{_lambda_.5} parent=84 // pred_fallthru
          _
        // Predicated region
        $region90: #{_lambda_.5} parent=84 // pred_check
          %p841 = pneg %p134
        $region91: #{_lambda_.5} parent=84 // pred_check_branch
          %843 = sbr.rel (%p841) target = $region93
        $region92: #{_lambda_.5} parent=84 // pred_region
          %p844 = scmp.lt.s32.totalorder %s17, 1
          %s845 = scalar_select %p844, %s17, 1
          %s846 = smul.addr %s845, 2
          %s847 = scalar_lea.vmem %s4, %s846
        $region93: #{_lambda_.5} parent=84 // pred_fallthru
          _
      $region85: #{_lambda_.5} parent=5 // pred_fallthru
        _
    $region6: #{_lambda_.5} parent=1 // loop_footer
      %s15 = sadd.s32 1, %s11
    $region7: #{_lambda_.5} parent=1 // loop_footer_branch
      %10 = sbr.rel target = $region3
    $region8: #{_lambda_.5} parent=1 // loop_exit
      _

// kernel: _lambda_.7
$region0: #{_lambda_.7}
  #allocation0 [shape = 'u32[]', space=smem, size = 0x4, offset = 0x4, fixed_abs, tag = 'smem constant byte address 0x4 - core index']
  #allocation1 [shape = 'u32[144,128]{1,0:T(1,128)}', space=vmem, size = 0x12000, scoped, tag = 'internal scratch']
  %s0 = inlined_call_operand.vmem [shape: bf16[256,128], index: 0, kind: input, shape index: {}]
  %s1 = inlined_call_operand.vmem [shape: f32[2,128], index: 1, kind: input, shape index: {}]
  %s2 = inlined_call_operand.vmem [shape: f32[256,128], index: 2, kind: output, shape index: {}]
  %s3 = sld [smem:[#allocation0]]
  $region41: #{_lambda_.7} parent=0
    _
  %s5 = ssub.s32 1, %s3
  %s6 = scalar_select 0, %s5, %s3
  loop: start=0, step=1, limit=4
  $region2: #{_lambda_.7} parent=0 // loop_pre_header
    _
  $region3: #{_lambda_.7} parent=0 // loop_header
    %s8 = sphi 0, %s12
    %p9 = scmp.ge.s32.totalorder %s8, 4
    %s18 = sphi 0, %s20
    %s21 = sphi 0, %s18
    %s22 = sphi 0, %s21
    %s38 = sphi 0, %s22
    %s42 = sphi 0, %s42
    %s44 = sphi 0, %s42
    %s45 = sphi 0, %s44
    %s59 = sphi 0, %s45
    %s65 = sphi 0, %s67
    %s68 = sphi 0, %s65
    %s69 = sphi 0, %s68
    %s85 = sphi 0, %s69
  $region4: #{_lambda_.7} parent=0 // loop_header_branch
    %11 = sbr.rel (%p9) target = $region8
  $region5: #{_lambda_.7} parent=0 // loop_body
    %s13 = ssub.s32 %s8, 1
    %s14 = ssub.s32 %s8, 2
    %s15 = sadd.s32 %s8, 1
    %s16 = ssub.s32 %s8, %s15
    %p17 = scmp.eq.s32.totalorder %s16, 0
    %s19 = sadd.s32 %s18, 1
    %s20 = scalar_select %p17, %s18, %s19
    %p23 = pneg %p17
    %p24 = scmp.eq.s32.totalorder %s8, 1
    %p25 = por %p23, %p24
    %p26 = scmp.ne.s32.totalorder %s18, %s21
    %p27 = scmp.eq.s32.totalorder %s8, 0
    %p28 = por %p26, %p27
    %p29 = scmp.ne.s32.totalorder %s18, %s21
    %p30 = scmp.eq.s32.totalorder %s13, 1
    %p31 = por %p29, %p30
    %p32 = scmp.ne.s32.totalorder %s21, %s22
    %p33 = scmp.eq.s32.totalorder %s13, 0
    %p34 = por %p32, %p33
    %p35 = scmp.ne.s32.totalorder %s21, %s22
    %p36 = scmp.eq.s32.totalorder %s14, 1
    %p37 = por %p35, %p36
    %p39 = scmp.ne.s32.totalorder %s22, %s38
    %p40 = scmp.eq.s32.totalorder %s14, 0
    %p41 = por %p39, %p40
    %s43 = sadd.s32 %s42, 1
    %p46 = scmp.eq.s32.totalorder %s8, 1
    %p47 = scmp.ne.s32.totalorder %s42, %s44
    %p48 = scmp.eq.s32.totalorder %s8, 0
    %p49 = por %p47, %p48
    %p50 = scmp.ne.s32.totalorder %s42, %s44
    %p51 = scmp.eq.s32.totalorder %s13, 1
    %p52 = por %p50, %p51
    %p53 = scmp.ne.s32.totalorder %s44, %s45
    %p54 = scmp.eq.s32.totalorder %s13, 0
    %p55 = por %p53, %p54
    %p56 = scmp.ne.s32.totalorder %s44, %s45
    %p57 = scmp.eq.s32.totalorder %s14, 1
    %p58 = por %p56, %p57
    %p60 = scmp.ne.s32.totalorder %s45, %s59
    %p61 = scmp.eq.s32.totalorder %s14, 0
    %p62 = por %p60, %p61
    %s63 = ssub.s32 %s8, %s15
    %p64 = scmp.eq.s32.totalorder %s63, 0
    %s66 = sadd.s32 %s65, 1
    %s67 = scalar_select %p64, %s65, %s66
    %p70 = pneg %p64
    %p71 = scmp.eq.s32.totalorder %s8, 1
    %p72 = por %p70, %p71
    %p73 = scmp.ne.s32.totalorder %s65, %s68
    %p74 = scmp.eq.s32.totalorder %s8, 0
    %p75 = por %p73, %p74
    %p76 = scmp.ne.s32.totalorder %s65, %s68
    %p77 = scmp.eq.s32.totalorder %s13, 1
    %p78 = por %p76, %p77
    %p79 = scmp.ne.s32.totalorder %s68, %s69
    %p80 = scmp.eq.s32.totalorder %s13, 0
    %p81 = por %p79, %p80
    %p82 = scmp.ne.s32.totalorder %s68, %s69
    %p83 = scmp.eq.s32.totalorder %s14, 1
    %p84 = por %p82, %p83
    %p86 = scmp.ne.s32.totalorder %s69, %s85
    %p87 = scmp.eq.s32.totalorder %s14, 0
    %p88 = por %p86, %p87
    %p89 = scmp.le.s32.totalorder 1, %s8
    %p90 = scmp.lt.s32.totalorder %s8, 3
    %p91 = pnand %p89, %p90
    %p92 = pneg %p91
    // Predicated region
    $region9: #{_lambda_.7} parent=5 // pred_check
      _
    $region10: #{_lambda_.7} parent=5 // pred_check_branch
      %94 = sbr.rel (%p91) target = $region12
    $region11: #{_lambda_.7} parent=5 // pred_region
      %s95 = ssub.s32 %s8, 1
      // Predicated region
      $region13: #{_lambda_.7} parent=11 // pred_check
        %p96 = pneg %p55
      $region14: #{_lambda_.7} parent=11 // pred_check_branch
        %98 = sbr.rel (%p96) target = $region16
      $region15: #{_lambda_.7} parent=11 // pred_region
        _
      $region16: #{_lambda_.7} parent=11 // pred_fallthru
        _
    $region12: #{_lambda_.7} parent=5 // pred_fallthru
      _
    %p99 = scmp.lt.s32.totalorder %s8, 2
    // Predicated region
    $region17: #{_lambda_.7} parent=5 // pred_check
      %p100 = pneg %p99
    $region18: #{_lambda_.7} parent=5 // pred_check_branch
      %102 = sbr.rel (%p100) target = $region20
    $region19: #{_lambda_.7} parent=5 // pred_region
      // Predicated region
      $region21: #{_lambda_.7} parent=19 // pred_check
        %p103 = pneg %p28
      $region22: #{_lambda_.7} parent=19 // pred_check_branch
        %105 = sbr.rel (%p103) target = $region24
      $region23: #{_lambda_.7} parent=19 // pred_region
        %s106 = smul.u32 16, %s8
        %p107 = scmp.lt.s32.totalorder %s106, 31
        %s108 = scalar_select %p107, %s106, 31
        %s109 = smul.addr %s108, 4
        %s110 = scalar_lea.vmem %s0, %s109
        %s111 = smul.u32 16, %s8
      $region24: #{_lambda_.7} parent=19 // pred_fallthru
        _
    $region20: #{_lambda_.7} parent=5 // pred_fallthru
      _
    %p112 = scmp.le.s32.totalorder 1, %s8
    %p113 = scmp.lt.s32.totalorder %s8, 3
    %p114 = pnand %p112, %p113
    %p115 = pneg %p114
    // Predicated region
    $region25: #{_lambda_.7} parent=5 // pred_check
      _
    $region26: #{_lambda_.7} parent=5 // pred_check_branch
      %117 = sbr.rel (%p114) target = $region28
    $region27: #{_lambda_.7} parent=5 // pred_region
      %s118 = ssub.s32 %s8, 1
      %s119 = smul.u32 16, %s13
      %p120 = scmp.lt.s32.totalorder %s119, 31
      %s121 = scalar_select %p120, %s119, 31
      %s122 = smul.addr %s121, 4
      %s123 = scalar_lea.vmem %s0, %s122
      %p124 = pneg %p34
      %p125 = pneg %p31
      %p126 = pneg %p55
      %p127 = pneg %p52
      %p128 = pneg %p81
      %p129 = pneg %p78
      %s130 = smul.u32 16, %s13
      %p131 = scmp.lt.s32.totalorder %s130, 31
      %s132 = scalar_select %p131, %s130, 31
      %s133 = smul.addr %s132, 8
      %s134 = scalar_lea.vmem %s2, %s133
      %s135 = smul.u32 16, %s13
      %p136 = scmp.lt.s32.totalorder %s135, 31
      %s137 = scalar_select %p136, %s135, 31
      %s138 = smul.addr %s137, 4
      %s139 = scalar_lea.vmem %s0, %s138
      %s140 = smul.u32 16, %s13
      %s141 = smul.u32 16, %s13
      %p142 = scmp.lt.s32.totalorder %s141, 31
      %s143 = scalar_select %p142, %s141, 31
      %s144 = smul.addr %s143, 8
      %s145 = scalar_lea.vmem %s2, %s144
      %s146 = smul.u32 16, %s13
      %v147 = vld [vmem:[%s139] sm:$0xf]
      %v148 = vld [vmem:[%s139 + $0x4] sm:$0xf]
      %v149 = vld [vmem:[%s139 + $0x8] sm:$0xf]
      %v150 = vld [vmem:[%s139 + $0xc] sm:$0xf]
      %v151 = vld [vmem:[%s139 + $0x10] sm:$0xf]
      %v152 = vld [vmem:[%s139 + $0x14] sm:$0xf]
      %v153 = vld [vmem:[%s139 + $0x18] sm:$0xf]
      %v154 = vld [vmem:[%s139 + $0x1c] sm:$0xf]
      %v155 = vld [vmem:[%s139 + $0x20] sm:$0xf]
      %v156 = vld [vmem:[%s139 + $0x24] sm:$0xf]
      %v157 = vld [vmem:[%s139 + $0x28] sm:$0xf]
      %v158 = vld [vmem:[%s139 + $0x2c] sm:$0xf]
      %v159 = vld [vmem:[%s139 + $0x30] sm:$0xf]
      %v160 = vld [vmem:[%s139 + $0x34] sm:$0xf]
      %v161 = vld [vmem:[%s139 + $0x38] sm:$0xf]
      %v162 = vld [vmem:[%s139 + $0x3c] sm:$0xf]
      %v163 = vunpack.c.l.bf16 %v147
      %v164 = vunpack.c.l.bf16 %v148
      %v165 = vunpack.c.l.bf16 %v149
      %v166 = vunpack.c.l.bf16 %v150
      %v167 = vunpack.c.l.bf16 %v151
      %v168 = vunpack.c.l.bf16 %v152
      %v169 = vunpack.c.l.bf16 %v153
      %v170 = vunpack.c.l.bf16 %v154
      %v171 = vunpack.c.l.bf16 %v155
      %v172 = vunpack.c.l.bf16 %v156
      %v173 = vunpack.c.l.bf16 %v157
      %v174 = vunpack.c.l.bf16 %v158
      %v175 = vunpack.c.l.bf16 %v159
      %v176 = vunpack.c.l.bf16 %v160
      %v177 = vunpack.c.l.bf16 %v161
      %v178 = vunpack.c.l.bf16 %v162
      %v179 = vld [vmem:[%s1] sm:$0x1]
      %v180 = vlaneseq
      %v181 = vshrl.u32 %v180, 7
      %v182 = vsub.s32 0, %v181
      %v183 = vrot.slane %v179, %v182
      %v184 = vmul.f32 %v163, %v183
      %v185 = vmul.f32 %v164, %v183
      %v186 = vmul.f32 %v165, %v183
      %v187 = vmul.f32 %v166, %v183
      %v188 = vmul.f32 %v167, %v183
      %v189 = vmul.f32 %v168, %v183
      %v190 = vmul.f32 %v169, %v183
      %v191 = vmul.f32 %v170, %v183
      %v192 = vmul.f32 %v171, %v183
      %v193 = vmul.f32 %v172, %v183
      %v194 = vmul.f32 %v173, %v183
      %v195 = vmul.f32 %v174, %v183
      %v196 = vmul.f32 %v175, %v183
      %v197 = vmul.f32 %v176, %v183
      %v198 = vmul.f32 %v177, %v183
      %v199 = vmul.f32 %v178, %v183
      %v200 = vld [vmem:[%s1 + $0x1] sm:$0x1]
      %v201 = vlaneseq
      %v202 = vshrl.u32 %v201, 7
      %v203 = vsub.s32 0, %v202
      %v204 = vrot.slane %v200, %v203
      %v205 = vadd.f32 %v184, %v204
      %v206 = vadd.f32 %v185, %v204
      %v207 = vadd.f32 %v186, %v204
      %v208 = vadd.f32 %v187, %v204
      %v209 = vadd.f32 %v188, %v204
      %v210 = vadd.f32 %v189, %v204
      %v211 = vadd.f32 %v190, %v204
      %v212 = vadd.f32 %v191, %v204
      %v213 = vadd.f32 %v192, %v204
      %v214 = vadd.f32 %v193, %v204
      %v215 = vadd.f32 %v194, %v204
      %v216 = vadd.f32 %v195, %v204
      %v217 = vadd.f32 %v196, %v204
      %v218 = vadd.f32 %v197, %v204
      %v219 = vadd.f32 %v198, %v204
      %v220 = vadd.f32 %v199, %v204
      %vm221 = vcmp.gt.f32.partialorder %v205, 0.0
      %vm222 = vcmp.gt.f32.partialorder %v206, 0.0
      %vm223 = vcmp.gt.f32.partialorder %v207, 0.0
      %vm224 = vcmp.gt.f32.partialorder %v208, 0.0
      %vm225 = vcmp.gt.f32.partialorder %v209, 0.0
      %vm226 = vcmp.gt.f32.partialorder %v210, 0.0
      %vm227 = vcmp.gt.f32.partialorder %v211, 0.0
      %vm228 = vcmp.gt.f32.partialorder %v212, 0.0
      %vm229 = vcmp.gt.f32.partialorder %v213, 0.0
      %vm230 = vcmp.gt.f32.partialorder %v214, 0.0
      %vm231 = vcmp.gt.f32.partialorder %v215, 0.0
      %vm232 = vcmp.gt.f32.partialorder %v216, 0.0
      %vm233 = vcmp.gt.f32.partialorder %v217, 0.0
      %vm234 = vcmp.gt.f32.partialorder %v218, 0.0
      %vm235 = vcmp.gt.f32.partialorder %v219, 0.0
      %vm236 = vcmp.gt.f32.partialorder %v220, 0.0
      %v237 = vmul.f32 %v205, 1.442695
      %v238 = vpow.pop %v237
      %v239 = vmul.f32 %v206, 1.442695
      %v240 = vpow.pop %v239
      %v241 = vmul.f32 %v207, 1.442695
      %v242 = vpow.pop %v241
      %v243 = vmul.f32 %v208, 1.442695
      %v244 = vpow.pop %v243
      %v245 = vmul.f32 %v209, 1.442695
      %v246 = vpow.pop %v245
      %v247 = vmul.f32 %v210, 1.442695
      %v248 = vpow.pop %v247
      %v249 = vmul.f32 %v211, 1.442695
      %v250 = vpow.pop %v249
      %v251 = vmul.f32 %v212, 1.442695
      %v252 = vpow.pop %v251
      %v253 = vmul.f32 %v213, 1.442695
      %v254 = vpow.pop %v253
      %v255 = vmul.f32 %v214, 1.442695
      %v256 = vpow.pop %v255
      %v257 = vmul.f32 %v215, 1.442695
      %v258 = vpow.pop %v257
      %v259 = vmul.f32 %v216, 1.442695
      %v260 = vpow.pop %v259
      %v261 = vmul.f32 %v217, 1.442695
      %v262 = vpow.pop %v261
      %v263 = vmul.f32 %v218, 1.442695
      %v264 = vpow.pop %v263
      %v265 = vmul.f32 %v219, 1.442695
      %v266 = vpow.pop %v265
      %v267 = vmul.f32 %v220, 1.442695
      %v268 = vpow.pop %v267
      %v269 = vsub.f32 %v238, 1.0
      %v270 = vsub.f32 %v240, 1.0
      %v271 = vsub.f32 %v242, 1.0
      %v272 = vsub.f32 %v244, 1.0
      %v273 = vsub.f32 %v246, 1.0
      %v274 = vsub.f32 %v248, 1.0
      %v275 = vsub.f32 %v250, 1.0
      %v276 = vsub.f32 %v252, 1.0
      %v277 = vsub.f32 %v254, 1.0
      %v278 = vsub.f32 %v256, 1.0
      %v279 = vsub.f32 %v258, 1.0
      %v280 = vsub.f32 %v260, 1.0
      %v281 = vsub.f32 %v262, 1.0
      %v282 = vsub.f32 %v264, 1.0
      %v283 = vsub.f32 %v266, 1.0
      %v284 = vsub.f32 %v268, 1.0
      %v285 = vmul.f32 %v269, 1.6732632
      %v286 = vmul.f32 %v270, 1.6732632
      %v287 = vmul.f32 %v271, 1.6732632
      %v288 = vmul.f32 %v272, 1.6732632
      %v289 = vmul.f32 %v273, 1.6732632
      %v290 = vmul.f32 %v274, 1.6732632
      %v291 = vmul.f32 %v275, 1.6732632
      %v292 = vmul.f32 %v276, 1.6732632
      %v293 = vmul.f32 %v277, 1.6732632
      %v294 = vmul.f32 %v278, 1.6732632
      %v295 = vmul.f32 %v279, 1.6732632
      %v296 = vmul.f32 %v280, 1.6732632
      %v297 = vmul.f32 %v281, 1.6732632
      %v298 = vmul.f32 %v282, 1.6732632
      %v299 = vmul.f32 %v283, 1.6732632
      %v300 = vmul.f32 %v284, 1.6732632
      %v301 = vsel %vm221, %v205, %v285
      %v302 = vsel %vm222, %v206, %v286
      %v303 = vsel %vm223, %v207, %v287
      %v304 = vsel %vm224, %v208, %v288
      %v305 = vsel %vm225, %v209, %v289
      %v306 = vsel %vm226, %v210, %v290
      %v307 = vsel %vm227, %v211, %v291
      %v308 = vsel %vm228, %v212, %v292
      %v309 = vsel %vm229, %v213, %v293
      %v310 = vsel %vm230, %v214, %v294
      %v311 = vsel %vm231, %v215, %v295
      %v312 = vsel %vm232, %v216, %v296
      %v313 = vsel %vm233, %v217, %v297
      %v314 = vsel %vm234, %v218, %v298
      %v315 = vsel %vm235, %v219, %v299
      %v316 = vsel %vm236, %v220, %v300
      %v317 = vmul.f32 %v301, 1.050701
      %v318 = vmul.f32 %v302, 1.050701
      %v319 = vmul.f32 %v303, 1.050701
      %v320 = vmul.f32 %v304, 1.050701
      %v321 = vmul.f32 %v305, 1.050701
      %v322 = vmul.f32 %v306, 1.050701
      %v323 = vmul.f32 %v307, 1.050701
      %v324 = vmul.f32 %v308, 1.050701
      %v325 = vmul.f32 %v309, 1.050701
      %v326 = vmul.f32 %v310, 1.050701
      %v327 = vmul.f32 %v311, 1.050701
      %v328 = vmul.f32 %v312, 1.050701
      %v329 = vmul.f32 %v313, 1.050701
      %v330 = vmul.f32 %v314, 1.050701
      %v331 = vmul.f32 %v315, 1.050701
      %v332 = vmul.f32 %v316, 1.050701
      %333 = vst [vmem:[%s145] sm:$0xff] %v317
      %334 = vst [vmem:[%s145 + $0x8] sm:$0xff] %v318
      %335 = vst [vmem:[%s145 + $0x10] sm:$0xff] %v319
      %336 = vst [vmem:[%s145 + $0x18] sm:$0xff] %v320
      %337 = vst [vmem:[%s145 + $0x20] sm:$0xff] %v321
      %338 = vst [vmem:[%s145 + $0x28] sm:$0xff] %v322
      %339 = vst [vmem:[%s145 + $0x30] sm:$0xff] %v323
      %340 = vst [vmem:[%s145 + $0x38] sm:$0xff] %v324
      %341 = vst [vmem:[%s145 + $0x40] sm:$0xff] %v325
      %342 = vst [vmem:[%s145 + $0x48] sm:$0xff] %v326
      %343 = vst [vmem:[%s145 + $0x50] sm:$0xff] %v327
      %344 = vst [vmem:[%s145 + $0x58] sm:$0xff] %v328
      %345 = vst [vmem:[%s145 + $0x60] sm:$0xff] %v329
      %346 = vst [vmem:[%s145 + $0x68] sm:$0xff] %v330
      %347 = vst [vmem:[%s145 + $0x70] sm:$0xff] %v331
      %348 = vst [vmem:[%s145 + $0x78] sm:$0xff] %v332
      %s349 = smul.u32 16, %s13
      %p350 = scmp.lt.s32.totalorder %s349, 31
      %s351 = scalar_select %p350, %s349, 31
      %s352 = smul.addr %s351, 8
      %s353 = scalar_lea.vmem %s2, %s352
      // Predicated region
      $region29: #{_lambda_.7} parent=27 // pred_check
        %p354 = pneg %p78
      $region30: #{_lambda_.7} parent=27 // pred_check_branch
        %356 = sbr.rel (%p354) target = $region32
      $region31: #{_lambda_.7} parent=27 // pred_region
        %s357 = smul.u32 16, %s13
      $region32: #{_lambda_.7} parent=27 // pred_fallthru
        _
    $region28: #{_lambda_.7} parent=5 // pred_fallthru
      _
    %p358 = scmp.le.s32.totalorder 2, %s8
    // Predicated region
    $region33: #{_lambda_.7} parent=5 // pred_check
      %p359 = pneg %p358
    $region34: #{_lambda_.7} parent=5 // pred_check_branch
      %361 = sbr.rel (%p359) target = $region36
    $region35: #{_lambda_.7} parent=5 // pred_region
      %s362 = ssub.s32 %s8, 2
      // Predicated region
      $region37: #{_lambda_.7} parent=35 // pred_check
        %p363 = pneg %p84
      $region38: #{_lambda_.7} parent=35 // pred_check_branch
        %365 = sbr.rel (%p363) target = $region40
      $region39: #{_lambda_.7} parent=35 // pred_region
        %s366 = smul.u32 16, %s14
        %p367 = scmp.lt.s32.totalorder %s366, 31
        %s368 = scalar_select %p367, %s366, 31
        %s369 = smul.addr %s368, 8
        %s370 = scalar_lea.vmem %s2, %s369
      $region40: #{_lambda_.7} parent=35 // pred_fallthru
        _
    $region36: #{_lambda_.7} parent=5 // pred_fallthru
      _
  $region6: #{_lambda_.7} parent=0 // loop_footer
    %s12 = sadd.s32 1, %s8
  $region7: #{_lambda_.7} parent=0 // loop_footer_branch
    %7 = sbr.rel target = $region3
  $region8: #{_lambda_.7} parent=0 // loop_exit
    _

// kernel: _lambda_.6
$region0: #{_lambda_.6}
  #allocation0 [shape = 'u32[]', space=smem, size = 0x4, offset = 0x4, fixed_abs, tag = 'smem constant byte address 0x4 - core index']
  #allocation1 [shape = 'u32[144,128]{1,0:T(1,128)}', space=vmem, size = 0x12000, scoped, tag = 'internal scratch']
  %s0 = inlined_call_operand.vmem [shape: bf16[256,128], index: 0, kind: input, shape index: {}]
  %s1 = inlined_call_operand.vmem [shape: bf16[256,256], index: 1, kind: input, shape index: {}]
  %s2 = inlined_call_operand.vmem [shape: f32[2,128], index: 2, kind: input, shape index: {}]
  %s3 = inlined_call_operand.vmem [shape: f32[2,128], index: 3, kind: input, shape index: {}]
  %s4 = inlined_call_operand.vmem [shape: bf16[256,128], index: 4, kind: output, shape index: {0}]
  %s5 = inlined_call_operand.vmem [shape: f32[2,2,128], index: 5, kind: output, shape index: {1}]
  %6 = xla_tuple %s4, %s5
  %s7 = sld [smem:[#allocation0]]
  $region98: #{_lambda_.6} parent=0
    _
  %s9 = ssub.s32 1, %s7
  %s10 = scalar_select 0, %s9, %s7
  $region1: #{_lambda_.6} parent=0
    #allocation2 [shape = 'u8[65536]{0}', space=vmem, size = 0x10000, scoped, tag = 'input window, operand 1']
    loop: start=0, step=1, limit=4
    $region2: #{_lambda_.6} parent=1 // loop_pre_header
      _
    $region3: #{_lambda_.6} parent=1 // loop_header
      %s12 = sphi 0, %s16
      %p13 = scmp.ge.s32.totalorder %s12, 4
      %s22 = sphi 0, %s24
      %s25 = sphi 0, %s22
      %s26 = sphi 0, %s25
      %s42 = sphi 0, %s26
      %s48 = sphi 0, %s50
      %s51 = sphi 0, %s48
      %s52 = sphi 0, %s51
      %s68 = sphi 0, %s52
      %s72 = sphi 0, %s72
      %s74 = sphi 0, %s72
      %s75 = sphi 0, %s74
      %s89 = sphi 0, %s75
      %s93 = sphi 0, %s93
      %s95 = sphi 0, %s93
      %s96 = sphi 0, %s95
      %s110 = sphi 0, %s96
      %s116 = sphi 0, %s118
      %s119 = sphi 0, %s116
      %s120 = sphi 0, %s119
      %s136 = sphi 0, %s120
      %s142 = sphi 0, %s144
      %s145 = sphi 0, %s142
      %s146 = sphi 0, %s145
      %s162 = sphi 0, %s146
    $region4: #{_lambda_.6} parent=1 // loop_header_branch
      %15 = sbr.rel (%p13) target = $region8
    $region5: #{_lambda_.6} parent=1 // loop_body
      %s17 = ssub.s32 %s12, 1
      %s18 = ssub.s32 %s12, 2
      %s19 = sadd.s32 %s12, 1
      %s20 = ssub.s32 %s12, %s19
      %p21 = scmp.eq.s32.totalorder %s20, 0
      %s23 = sadd.s32 %s22, 1
      %s24 = scalar_select %p21, %s22, %s23
      %p27 = pneg %p21
      %p28 = scmp.eq.s32.totalorder %s12, 1
      %p29 = por %p27, %p28
      %p30 = scmp.ne.s32.totalorder %s22, %s25
      %p31 = scmp.eq.s32.totalorder %s12, 0
      %p32 = por %p30, %p31
      %p33 = scmp.ne.s32.totalorder %s22, %s25
      %p34 = scmp.eq.s32.totalorder %s17, 1
      %p35 = por %p33, %p34
      %p36 = scmp.ne.s32.totalorder %s25, %s26
      %p37 = scmp.eq.s32.totalorder %s17, 0
      %p38 = por %p36, %p37
      %p39 = scmp.ne.s32.totalorder %s25, %s26
      %p40 = scmp.eq.s32.totalorder %s18, 1
      %p41 = por %p39, %p40
      %p43 = scmp.ne.s32.totalorder %s26, %s42
      %p44 = scmp.eq.s32.totalorder %s18, 0
      %p45 = por %p43, %p44
      %s46 = ssub.s32 %s12, %s19
      %p47 = scmp.eq.s32.totalorder %s46, 0
      %s49 = sadd.s32 %s48, 1
      %s50 = scalar_select %p47, %s48, %s49
      %p53 = pneg %p47
      %p54 = scmp.eq.s32.totalorder %s12, 1
      %p55 = por %p53, %p54
      %p56 = scmp.ne.s32.totalorder %s48, %s51
      %p57 = scmp.eq.s32.totalorder %s12, 0
      %p58 = por %p56, %p57
      %p59 = scmp.ne.s32.totalorder %s48, %s51
      %p60 = scmp.eq.s32.totalorder %s17, 1
      %p61 = por %p59, %p60
      %p62 = scmp.ne.s32.totalorder %s51, %s52
      %p63 = scmp.eq.s32.totalorder %s17, 0
      %p64 = por %p62, %p63
      %p65 = scmp.ne.s32.totalorder %s51, %s52
      %p66 = scmp.eq.s32.totalorder %s18, 1
      %p67 = por %p65, %p66
      %p69 = scmp.ne.s32.totalorder %s52, %s68
      %p70 = scmp.eq.s32.totalorder %s18, 0
      %p71 = por %p69, %p70
      %s73 = sadd.s32 %s72, 1
      %p76 = scmp.eq.s32.totalorder %s12, 1
      %p77 = scmp.ne.s32.totalorder %s72, %s74
      %p78 = scmp.eq.s32.totalorder %s12, 0
      %p79 = por %p77, %p78
      %p80 = scmp.ne.s32.totalorder %s72, %s74
      %p81 = scmp.eq.s32.totalorder %s17, 1
      %p82 = por %p80, %p81
      %p83 = scmp.ne.s32.totalorder %s74, %s75
      %p84 = scmp.eq.s32.totalorder %s17, 0
      %p85 = por %p83, %p84
      %p86 = scmp.ne.s32.totalorder %s74, %s75
      %p87 = scmp.eq.s32.totalorder %s18, 1
      %p88 = por %p86, %p87
      %p90 = scmp.ne.s32.totalorder %s75, %s89
      %p91 = scmp.eq.s32.totalorder %s18, 0
      %p92 = por %p90, %p91
      %s94 = sadd.s32 %s93, 1
      %p97 = scmp.eq.s32.totalorder %s12, 1
      %p98 = scmp.ne.s32.totalorder %s93, %s95
      %p99 = scmp.eq.s32.totalorder %s12, 0
      %p100 = por %p98, %p99
      %p101 = scmp.ne.s32.totalorder %s93, %s95
      %p102 = scmp.eq.s32.totalorder %s17, 1
      %p103 = por %p101, %p102
      %p104 = scmp.ne.s32.totalorder %s95, %s96
      %p105 = scmp.eq.s32.totalorder %s17, 0
      %p106 = por %p104, %p105
      %p107 = scmp.ne.s32.totalorder %s95, %s96
      %p108 = scmp.eq.s32.totalorder %s18, 1
      %p109 = por %p107, %p108
      %p111 = scmp.ne.s32.totalorder %s96, %s110
      %p112 = scmp.eq.s32.totalorder %s18, 0
      %p113 = por %p111, %p112
      %s114 = ssub.s32 %s12, %s19
      %p115 = scmp.eq.s32.totalorder %s114, 0
      %s117 = sadd.s32 %s116, 1
      %s118 = scalar_select %p115, %s116, %s117
      %p121 = pneg %p115
      %p122 = scmp.eq.s32.totalorder %s12, 1
      %p123 = por %p121, %p122
      %p124 = scmp.ne.s32.totalorder %s116, %s119
      %p125 = scmp.eq.s32.totalorder %s12, 0
      %p126 = por %p124, %p125
      %p127 = scmp.ne.s32.totalorder %s116, %s119
      %p128 = scmp.eq.s32.totalorder %s17, 1
      %p129 = por %p127, %p128
      %p130 = scmp.ne.s32.totalorder %s119, %s120
      %p131 = scmp.eq.s32.totalorder %s17, 0
      %p132 = por %p130, %p131
      %p133 = scmp.ne.s32.totalorder %s119, %s120
      %p134 = scmp.eq.s32.totalorder %s18, 1
      %p135 = por %p133, %p134
      %p137 = scmp.ne.s32.totalorder %s120, %s136
      %p138 = scmp.eq.s32.totalorder %s18, 0
      %p139 = por %p137, %p138
      %s140 = ssub.s32 %s12, %s19
      %p141 = scmp.eq.s32.totalorder %s140, 0
      %s143 = sadd.s32 %s142, 1
      %s144 = scalar_select %p141, %s142, %s143
      %p147 = pneg %p141
      %p148 = scmp.eq.s32.totalorder %s12, 1
      %p149 = por %p147, %p148
      %p150 = scmp.ne.s32.totalorder %s142, %s145
      %p151 = scmp.eq.s32.totalorder %s12, 0
      %p152 = por %p150, %p151
      %p153 = scmp.ne.s32.totalorder %s142, %s145
      %p154 = scmp.eq.s32.totalorder %s17, 1
      %p155 = por %p153, %p154
      %p156 = scmp.ne.s32.totalorder %s145, %s146
      %p157 = scmp.eq.s32.totalorder %s17, 0
      %p158 = por %p156, %p157
      %p159 = scmp.ne.s32.totalorder %s145, %s146
      %p160 = scmp.eq.s32.totalorder %s18, 1
      %p161 = por %p159, %p160
      %p163 = scmp.ne.s32.totalorder %s146, %s162
      %p164 = scmp.eq.s32.totalorder %s18, 0
      %p165 = por %p163, %p164
      %p166 = scmp.le.s32.totalorder 1, %s12
      %p167 = scmp.lt.s32.totalorder %s12, 3
      %p168 = pnand %p166, %p167
      %p169 = pneg %p168
      // Predicated region
      $region9: #{_lambda_.6} parent=5 // pred_check
        _
      $region10: #{_lambda_.6} parent=5 // pred_check_branch
        %171 = sbr.rel (%p168) target = $region12
      $region11: #{_lambda_.6} parent=5 // pred_region
        %s172 = ssub.s32 %s12, 1
        // Predicated region
        $region13: #{_lambda_.6} parent=11 // pred_check
          %p173 = pneg %p85
        $region14: #{_lambda_.6} parent=11 // pred_check_branch
          %175 = sbr.rel (%p173) target = $region16
        $region15: #{_lambda_.6} parent=11 // pred_region
          _
        $region16: #{_lambda_.6} parent=11 // pred_fallthru
          _
        // Predicated region
        $region17: #{_lambda_.6} parent=11 // pred_check
          %p176 = pneg %p106
        $region18: #{_lambda_.6} parent=11 // pred_check_branch
          %178 = sbr.rel (%p176) target = $region20
        $region19: #{_lambda_.6} parent=11 // pred_region
          _
        $region20: #{_lambda_.6} parent=11 // pred_fallthru
          _
      $region12: #{_lambda_.6} parent=5 // pred_fallthru
        _
      %p179 = scmp.lt.s32.totalorder %s12, 2
      // Predicated region
      $region21: #{_lambda_.6} parent=5 // pred_check
        %p180 = pneg %p179
      $region22: #{_lambda_.6} parent=5 // pred_check_branch
        %182 = sbr.rel (%p180) target = $region24
      $region23: #{_lambda_.6} parent=5 // pred_region
        // Predicated region
        $region25: #{_lambda_.6} parent=23 // pred_check
          %p183 = pneg %p32
        $region26: #{_lambda_.6} parent=23 // pred_check_branch
          %185 = sbr.rel (%p183) target = $region28
        $region27: #{_lambda_.6} parent=23 // pred_region
          %s186 = smul.u32 16, %s12
          %p187 = scmp.lt.s32.totalorder %s186, 31
          %s188 = scalar_select %p187, %s186, 31
          %s189 = smul.addr %s188, 4
          %s190 = scalar_lea.vmem %s0, %s189
          %s191 = smul.u32 16, %s12
        $region28: #{_lambda_.6} parent=23 // pred_fallthru
          _
        // Predicated region
        $region29: #{_lambda_.6} parent=23 // pred_check
          %p192 = pneg %p58
        $region30: #{_lambda_.6} parent=23 // pred_check_branch
          %194 = sbr.rel (%p192) target = $region32
        $region31: #{_lambda_.6} parent=23 // pred_region
          %s195 = sand.u32 %s48, 1
          %s196 = sand.u32 %s48, 1
          %s197 = smul.addr %s196, 64
          %s198 = scalar_lea.vmem [#allocation2], %s197
          %s199 = smul.u32 16, %s12
          %s200 = smul.addr %s199, 2
          %s201 = sadd.s32 1, %s200
          %s202 = smul.addr %s201, 4
          %s203 = scalar_lea.vmem %s1, %s202
          // Predicated region
          $region33: #{_lambda_.6} parent=31 // pred_check
            _
          $region34: #{_lambda_.6} parent=31 // pred_check_branch
            %205 = sbr.rel (0) target = $region36
          $region35: #{_lambda_.6} parent=31 // pred_region
            // Predicated region
            $region37: #{_lambda_.6} parent=35 // pred_check
              _
            $region38: #{_lambda_.6} parent=35 // pred_check_branch
              %207 = sbr.rel target = $region40
            $region39: #{_lambda_.6} parent=35 // pred_region
              // Predicated region
              $region52: #{_lambda_.6} parent=39 // pred_check
                _
              $region53: #{_lambda_.6} parent=39 // pred_check_branch
                %253 = sbr.rel (0) target = $region55
              $region54: #{_lambda_.6} parent=39 // pred_region
                loop: start=0, step=1, limit=1
                $region56: #{_lambda_.6} parent=54 // loop_pre_header
                  _
                $region57: #{_lambda_.6} parent=54 // loop_header
                  %s255 = sphi 0, %s259
                  %p256 = scmp.ge.s32.totalorder %s255, 1
                  %s260 = sphi %s203, %s203
                  %s261 = sphi %s198, %s198
                $region58: #{_lambda_.6} parent=54 // loop_header_branch
                  %258 = sbr.rel (%p256) target = $region62
                $region59: #{_lambda_.6} parent=54 // loop_body
                  _
                $region60: #{_lambda_.6} parent=54 // loop_footer
                  %s259 = sadd.s32 1, %s255
                $region61: #{_lambda_.6} parent=54 // loop_footer_branch
                  %254 = sbr.rel target = $region57
                $region62: #{_lambda_.6} parent=54 // loop_exit
                  _
                %s263 = ssub.s32 16, 1
                loop: start=0, step=1, limit=1
                $region63: #{_lambda_.6} parent=54 // loop_pre_header
                  _
                $region64: #{_lambda_.6} parent=54 // loop_header
                  %s265 = sphi 0, %s269
                  %p266 = scmp.ge.s32.totalorder %s265, 1
                  %s270 = sphi %s203, %s203
                  %s271 = sphi %s198, %s198
                $region65: #{_lambda_.6} parent=54 // loop_header_branch
                  %268 = sbr.rel (%p266) target = $region69
                $region66: #{_lambda_.6} parent=54 // loop_body
                  %v272 = vld [vmem:[%s270] sm:%s263]
                  %273 = vst [vmem:[%s271] sm:%s263] %v272
                  %v274 = vld [vmem:[%s270 + $0x8] sm:%s263]
                  %275 = vst [vmem:[%s271 + $0x4] sm:%s263] %v274
                  %v276 = vld [vmem:[%s270 + $0x10] sm:%s263]
                  %277 = vst [vmem:[%s271 + $0x8] sm:%s263] %v276
                  %v278 = vld [vmem:[%s270 + $0x18] sm:%s263]
                  %279 = vst [vmem:[%s271 + $0xc] sm:%s263] %v278
                  %v280 = vld [vmem:[%s270 + $0x20] sm:%s263]
                  %281 = vst [vmem:[%s271 + $0x10] sm:%s263] %v280
                  %v282 = vld [vmem:[%s270 + $0x28] sm:%s263]
                  %283 = vst [vmem:[%s271 + $0x14] sm:%s263] %v282
                  %v284 = vld [vmem:[%s270 + $0x30] sm:%s263]
                  %285 = vst [vmem:[%s271 + $0x18] sm:%s263] %v284
                  %v286 = vld [vmem:[%s270 + $0x38] sm:%s263]
                  %287 = vst [vmem:[%s271 + $0x1c] sm:%s263] %v286
                  %v288 = vld [vmem:[%s270 + $0x40] sm:%s263]
                  %289 = vst [vmem:[%s271 + $0x20] sm:%s263] %v288
                  %v290 = vld [vmem:[%s270 + $0x48] sm:%s263]
                  %291 = vst [vmem:[%s271 + $0x24] sm:%s263] %v290
                  %v292 = vld [vmem:[%s270 + $0x50] sm:%s263]
                  %293 = vst [vmem:[%s271 + $0x28] sm:%s263] %v292
                  %v294 = vld [vmem:[%s270 + $0x58] sm:%s263]
                  %295 = vst [vmem:[%s271 + $0x2c] sm:%s263] %v294
                  %v296 = vld [vmem:[%s270 + $0x60] sm:%s263]
                  %297 = vst [vmem:[%s271 + $0x30] sm:%s263] %v296
                  %v298 = vld [vmem:[%s270 + $0x68] sm:%s263]
                  %299 = vst [vmem:[%s271 + $0x34] sm:%s263] %v298
                  %v300 = vld [vmem:[%s270 + $0x70] sm:%s263]
                  %301 = vst [vmem:[%s271 + $0x38] sm:%s263] %v300
                  %v302 = vld [vmem:[%s270 + $0x78] sm:%s263]
                  %303 = vst [vmem:[%s271 + $0x3c] sm:%s263] %v302
                $region67: #{_lambda_.6} parent=54 // loop_footer
                  %s269 = sadd.s32 1, %s265
                $region68: #{_lambda_.6} parent=54 // loop_footer_branch
                  %264 = sbr.rel target = $region64
                $region69: #{_lambda_.6} parent=54 // loop_exit
                  _
              $region55: #{_lambda_.6} parent=39 // pred_fallthru
                _
            $region40: #{_lambda_.6} parent=35 // pred_fallthru
              _
            // Predicated region
            $region41: #{_lambda_.6} parent=35 // pred_check
              _
            $region42: #{_lambda_.6} parent=35 // pred_check_branch
              %209 = sbr.rel (0) target = $region44
            $region43: #{_lambda_.6} parent=35 // pred_region
              %s211 = ssub.s32 16, 1
              loop: start=0, step=1, limit=1
              $region45: #{_lambda_.6} parent=43 // loop_pre_header
                _
              $region46: #{_lambda_.6} parent=43 // loop_header
                %s213 = sphi 0, %s217
                %p214 = scmp.ge.s32.totalorder %s213, 1
                %s218 = sphi %s203, %s203
                %s219 = sphi %s198, %s198
              $region47: #{_lambda_.6} parent=43 // loop_header_branch
                %216 = sbr.rel (%p214) target = $region51
              $region48: #{_lambda_.6} parent=43 // loop_body
                %v220 = vld [vmem:[%s218] sm:%s211]
                %221 = vst [vmem:[%s219] sm:%s211] %v220
                %v222 = vld [vmem:[%s218 + $0x8] sm:%s211]
                %223 = vst [vmem:[%s219 + $0x4] sm:%s211] %v222
                %v224 = vld [vmem:[%s218 + $0x10] sm:%s211]
                %225 = vst [vmem:[%s219 + $0x8] sm:%s211] %v224
                %v226 = vld [vmem:[%s218 + $0x18] sm:%s211]
                %227 = vst [vmem:[%s219 + $0xc] sm:%s211] %v226
                %v228 = vld [vmem:[%s218 + $0x20] sm:%s211]
                %229 = vst [vmem:[%s219 + $0x10] sm:%s211] %v228
                %v230 = vld [vmem:[%s218 + $0x28] sm:%s211]
                %231 = vst [vmem:[%s219 + $0x14] sm:%s211] %v230
                %v232 = vld [vmem:[%s218 + $0x30] sm:%s211]
                %233 = vst [vmem:[%s219 + $0x18] sm:%s211] %v232
                %v234 = vld [vmem:[%s218 + $0x38] sm:%s211]
                %235 = vst [vmem:[%s219 + $0x1c] sm:%s211] %v234
                %v236 = vld [vmem:[%s218 + $0x40] sm:%s211]
                %237 = vst [vmem:[%s219 + $0x20] sm:%s211] %v236
                %v238 = vld [vmem:[%s218 + $0x48] sm:%s211]
                %239 = vst [vmem:[%s219 + $0x24] sm:%s211] %v238
                %v240 = vld [vmem:[%s218 + $0x50] sm:%s211]
                %241 = vst [vmem:[%s219 + $0x28] sm:%s211] %v240
                %v242 = vld [vmem:[%s218 + $0x58] sm:%s211]
                %243 = vst [vmem:[%s219 + $0x2c] sm:%s211] %v242
                %v244 = vld [vmem:[%s218 + $0x60] sm:%s211]
                %245 = vst [vmem:[%s219 + $0x30] sm:%s211] %v244
                %v246 = vld [vmem:[%s218 + $0x68] sm:%s211]
                %247 = vst [vmem:[%s219 + $0x34] sm:%s211] %v246
                %v248 = vld [vmem:[%s218 + $0x70] sm:%s211]
                %249 = vst [vmem:[%s219 + $0x38] sm:%s211] %v248
                %v250 = vld [vmem:[%s218 + $0x78] sm:%s211]
                %251 = vst [vmem:[%s219 + $0x3c] sm:%s211] %v250
              $region49: #{_lambda_.6} parent=43 // loop_footer
                %s217 = sadd.s32 1, %s213
              $region50: #{_lambda_.6} parent=43 // loop_footer_branch
                %212 = sbr.rel target = $region46
              $region51: #{_lambda_.6} parent=43 // loop_exit
                _
            $region44: #{_lambda_.6} parent=35 // pred_fallthru
              _
          $region36: #{_lambda_.6} parent=31 // pred_fallthru
            _
          %304 = vnop
        $region32: #{_lambda_.6} parent=23 // pred_fallthru
          _
      $region24: #{_lambda_.6} parent=5 // pred_fallthru
        _
      %p305 = scmp.le.s32.totalorder 1, %s12
      %p306 = scmp.lt.s32.totalorder %s12, 3
      %p307 = pnand %p305, %p306
      %p308 = pneg %p307
      // Predicated region
      $region70: #{_lambda_.6} parent=5 // pred_check
        _
      $region71: #{_lambda_.6} parent=5 // pred_check_branch
        %310 = sbr.rel (%p307) target = $region73
      $region72: #{_lambda_.6} parent=5 // pred_region
        %s311 = ssub.s32 %s12, 1
        %s312 = sand.u32 %s51, 1
        %s313 = sand.u32 %s51, 1
        %s314 = smul.addr %s313, 64
        %s315 = scalar_lea.vmem [#allocation2], %s314
        // Predicated region
        $region74: #{_lambda_.6} parent=72 // pred_check
          %p316 = pneg %p64
        $region75: #{_lambda_.6} parent=72 // pred_check_branch
          %318 = sbr.rel (%p316) target = $region77
        $region76: #{_lambda_.6} parent=72 // pred_region
          _
        $region77: #{_lambda_.6} parent=72 // pred_fallthru
          _
        %s319 = smul.u32 16, %s17
        %p320 = scmp.lt.s32.totalorder %s319, 31
        %s321 = scalar_select %p320, %s319, 31
        %s322 = smul.addr %s321, 4
        %s323 = scalar_lea.vmem %s0, %s322
        %p324 = pneg %p38
        %p325 = pneg %p35
        %s326 = sand.u32 %s51, 1
        %s327 = sand.u32 %s51, 1
        %s328 = smul.addr %s327, 64
        %s329 = scalar_lea.vmem [#allocation2], %s328
        %p330 = pneg %p64
        %p331 = pneg %p61
        %p332 = pneg %p85
        %p333 = pneg %p82
        %p334 = pneg %p106
        %p335 = pneg %p103
        %p336 = pneg %p132
        %p337 = pneg %p129
        %s338 = smul.u32 16, %s17
        %p339 = scmp.lt.s32.totalorder %s338, 31
        %s340 = scalar_select %p339, %s338, 31
        %s341 = smul.addr %s340, 4
        %s342 = scalar_lea.vmem %s4, %s341
        %p343 = pneg %p158
        %p344 = pneg %p155
        %p345 = scmp.lt.s32.totalorder %s17, 1
        %s346 = scalar_select %p345, %s17, 1
        %s347 = smul.addr %s346, 2
        %s348 = scalar_lea.vmem %s5, %s347
        %s349 = smul.u32 16, %s17
        %p350 = scmp.lt.s32.totalorder %s349, 31
        %s351 = scalar_select %p350, %s349, 31
        %s352 = smul.addr %s351, 4
        %s353 = scalar_lea.vmem %s0, %s352
        %s354 = smul.u32 16, %s17
        %s355 = smul.u32 16, %s17
        %s356 = smul.u32 16, %s17
        %p357 = scmp.lt.s32.totalorder %s356, 31
        %s358 = scalar_select %p357, %s356, 31
        %s359 = smul.addr %s358, 4
        %s360 = scalar_lea.vmem %s4, %s359
        %s361 = smul.u32 16, %s17
        %p362 = scmp.lt.s32.totalorder %s17, 1
        %s363 = scalar_select %p362, %s17, 1
        %s364 = smul.addr %s363, 2
        %s365 = scalar_lea.vmem %s5, %s364
        %v366 = vld [vmem:[%s353] sm:$0xf]
        %v367 = vld [vmem:[%s353 + $0x4] sm:$0xf]
        %v368 = vld [vmem:[%s353 + $0x8] sm:$0xf]
        %v369 = vld [vmem:[%s353 + $0xc] sm:$0xf]
        %v370 = vld [vmem:[%s353 + $0x10] sm:$0xf]
        %v371 = vld [vmem:[%s353 + $0x14] sm:$0xf]
        %v372 = vld [vmem:[%s353 + $0x18] sm:$0xf]
        %v373 = vld [vmem:[%s353 + $0x1c] sm:$0xf]
        %v374 = vld [vmem:[%s353 + $0x20] sm:$0xf]
        %v375 = vld [vmem:[%s353 + $0x24] sm:$0xf]
        %v376 = vld [vmem:[%s353 + $0x28] sm:$0xf]
        %v377 = vld [vmem:[%s353 + $0x2c] sm:$0xf]
        %v378 = vld [vmem:[%s353 + $0x30] sm:$0xf]
        %v379 = vld [vmem:[%s353 + $0x34] sm:$0xf]
        %v380 = vld [vmem:[%s353 + $0x38] sm:$0xf]
        %v381 = vld [vmem:[%s353 + $0x3c] sm:$0xf]
        %v382 = vunpack.c.l.bf16 %v366
        %v383 = vunpack.c.l.bf16 %v367
        %v384 = vunpack.c.l.bf16 %v368
        %v385 = vunpack.c.l.bf16 %v369
        %v386 = vunpack.c.l.bf16 %v370
        %v387 = vunpack.c.l.bf16 %v371
        %v388 = vunpack.c.l.bf16 %v372
        %v389 = vunpack.c.l.bf16 %v373
        %v390 = vunpack.c.l.bf16 %v374
        %v391 = vunpack.c.l.bf16 %v375
        %v392 = vunpack.c.l.bf16 %v376
        %v393 = vunpack.c.l.bf16 %v377
        %v394 = vunpack.c.l.bf16 %v378
        %v395 = vunpack.c.l.bf16 %v379
        %v396 = vunpack.c.l.bf16 %v380
        %v397 = vunpack.c.l.bf16 %v381
        %v398 = vld [vmem:[%s2] sm:$0x1]
        %v399 = vlaneseq
        %v400 = vshrl.u32 %v399, 7
        %v401 = vsub.s32 0, %v400
        %v402 = vrot.slane %v398, %v401
        %v403 = vmul.f32 %v382, %v402
        %v404 = vmul.f32 %v383, %v402
        %v405 = vmul.f32 %v384, %v402
        %v406 = vmul.f32 %v385, %v402
        %v407 = vmul.f32 %v386, %v402
        %v408 = vmul.f32 %v387, %v402
        %v409 = vmul.f32 %v388, %v402
        %v410 = vmul.f32 %v389, %v402
        %v411 = vmul.f32 %v390, %v402
        %v412 = vmul.f32 %v391, %v402
        %v413 = vmul.f32 %v392, %v402
        %v414 = vmul.f32 %v393, %v402
        %v415 = vmul.f32 %v394, %v402
        %v416 = vmul.f32 %v395, %v402
        %v417 = vmul.f32 %v396, %v402
        %v418 = vmul.f32 %v397, %v402
        %v419 = vld [vmem:[%s2 + $0x1] sm:$0x1]
        %v420 = vlaneseq
        %v421 = vshrl.u32 %v420, 7
        %v422 = vsub.s32 0, %v421
        %v423 = vrot.slane %v419, %v422
        %v424 = vadd.f32 %v403, %v423
        %v425 = vadd.f32 %v404, %v423
        %v426 = vadd.f32 %v405, %v423
        %v427 = vadd.f32 %v406, %v423
        %v428 = vadd.f32 %v407, %v423
        %v429 = vadd.f32 %v408, %v423
        %v430 = vadd.f32 %v409, %v423
        %v431 = vadd.f32 %v410, %v423
        %v432 = vadd.f32 %v411, %v423
        %v433 = vadd.f32 %v412, %v423
        %v434 = vadd.f32 %v413, %v423
        %v435 = vadd.f32 %v414, %v423
        %v436 = vadd.f32 %v415, %v423
        %v437 = vadd.f32 %v416, %v423
        %v438 = vadd.f32 %v417, %v423
        %v439 = vadd.f32 %v418, %v423
        %vm440 = vcmp.gt.f32.partialorder %v424, 0.0
        %vm441 = vcmp.gt.f32.partialorder %v425, 0.0
        %vm442 = vcmp.gt.f32.partialorder %v426, 0.0
        %vm443 = vcmp.gt.f32.partialorder %v427, 0.0
        %vm444 = vcmp.gt.f32.partialorder %v428, 0.0
        %vm445 = vcmp.gt.f32.partialorder %v429, 0.0
        %vm446 = vcmp.gt.f32.partialorder %v430, 0.0
        %vm447 = vcmp.gt.f32.partialorder %v431, 0.0
        %vm448 = vcmp.gt.f32.partialorder %v432, 0.0
        %vm449 = vcmp.gt.f32.partialorder %v433, 0.0
        %vm450 = vcmp.gt.f32.partialorder %v434, 0.0
        %vm451 = vcmp.gt.f32.partialorder %v435, 0.0
        %vm452 = vcmp.gt.f32.partialorder %v436, 0.0
        %vm453 = vcmp.gt.f32.partialorder %v437, 0.0
        %vm454 = vcmp.gt.f32.partialorder %v438, 0.0
        %vm455 = vcmp.gt.f32.partialorder %v439, 0.0
        %v456 = vmul.f32 %v424, 1.442695
        %v457 = vpow.pop %v456
        %v458 = vmul.f32 %v425, 1.442695
        %v459 = vpow.pop %v458
        %v460 = vmul.f32 %v426, 1.442695
        %v461 = vpow.pop %v460
        %v462 = vmul.f32 %v427, 1.442695
        %v463 = vpow.pop %v462
        %v464 = vmul.f32 %v428, 1.442695
        %v465 = vpow.pop %v464
        %v466 = vmul.f32 %v429, 1.442695
        %v467 = vpow.pop %v466
        %v468 = vmul.f32 %v430, 1.442695
        %v469 = vpow.pop %v468
        %v470 = vmul.f32 %v431, 1.442695
        %v471 = vpow.pop %v470
        %v472 = vmul.f32 %v432, 1.442695
        %v473 = vpow.pop %v472
        %v474 = vmul.f32 %v433, 1.442695
        %v475 = vpow.pop %v474
        %v476 = vmul.f32 %v434, 1.442695
        %v477 = vpow.pop %v476
        %v478 = vmul.f32 %v435, 1.442695
        %v479 = vpow.pop %v478
        %v480 = vmul.f32 %v436, 1.442695
        %v481 = vpow.pop %v480
        %v482 = vmul.f32 %v437, 1.442695
        %v483 = vpow.pop %v482
        %v484 = vmul.f32 %v438, 1.442695
        %v485 = vpow.pop %v484
        %v486 = vmul.f32 %v439, 1.442695
        %v487 = vpow.pop %v486
        %v488 = vsub.f32 %v457, 1.0
        %v489 = vsub.f32 %v459, 1.0
        %v490 = vsub.f32 %v461, 1.0
        %v491 = vsub.f32 %v463, 1.0
        %v492 = vsub.f32 %v465, 1.0
        %v493 = vsub.f32 %v467, 1.0
        %v494 = vsub.f32 %v469, 1.0
        %v495 = vsub.f32 %v471, 1.0
        %v496 = vsub.f32 %v473, 1.0
        %v497 = vsub.f32 %v475, 1.0
        %v498 = vsub.f32 %v477, 1.0
        %v499 = vsub.f32 %v479, 1.0
        %v500 = vsub.f32 %v481, 1.0
        %v501 = vsub.f32 %v483, 1.0
        %v502 = vsub.f32 %v485, 1.0
        %v503 = vsub.f32 %v487, 1.0
        %v504 = vmul.f32 %v488, 1.6732632
        %v505 = vmul.f32 %v489, 1.6732632
        %v506 = vmul.f32 %v490, 1.6732632
        %v507 = vmul.f32 %v491, 1.6732632
        %v508 = vmul.f32 %v492, 1.6732632
        %v509 = vmul.f32 %v493, 1.6732632
        %v510 = vmul.f32 %v494, 1.6732632
        %v511 = vmul.f32 %v495, 1.6732632
        %v512 = vmul.f32 %v496, 1.6732632
        %v513 = vmul.f32 %v497, 1.6732632
        %v514 = vmul.f32 %v498, 1.6732632
        %v515 = vmul.f32 %v499, 1.6732632
        %v516 = vmul.f32 %v500, 1.6732632
        %v517 = vmul.f32 %v501, 1.6732632
        %v518 = vmul.f32 %v502, 1.6732632
        %v519 = vmul.f32 %v503, 1.6732632
        %v520 = vsel %vm440, %v424, %v504
        %v521 = vsel %vm441, %v425, %v505
        %v522 = vsel %vm442, %v426, %v506
        %v523 = vsel %vm443, %v427, %v507
        %v524 = vsel %vm444, %v428, %v508
        %v525 = vsel %vm445, %v429, %v509
        %v526 = vsel %vm446, %v430, %v510
        %v527 = vsel %vm447, %v431, %v511
        %v528 = vsel %vm448, %v432, %v512
        %v529 = vsel %vm449, %v433, %v513
        %v530 = vsel %vm450, %v434, %v514
        %v531 = vsel %vm451, %v435, %v515
        %v532 = vsel %vm452, %v436, %v516
        %v533 = vsel %vm453, %v437, %v517
        %v534 = vsel %vm454, %v438, %v518
        %v535 = vsel %vm455, %v439, %v519
        %v536 = vmul.f32 %v520, 1.050701
        %v537 = vmul.f32 %v521, 1.050701
        %v538 = vmul.f32 %v522, 1.050701
        %v539 = vmul.f32 %v523, 1.050701
        %v540 = vmul.f32 %v524, 1.050701
        %v541 = vmul.f32 %v525, 1.050701
        %v542 = vmul.f32 %v526, 1.050701
        %v543 = vmul.f32 %v527, 1.050701
        %v544 = vmul.f32 %v528, 1.050701
        %v545 = vmul.f32 %v529, 1.050701
        %v546 = vmul.f32 %v530, 1.050701
        %v547 = vmul.f32 %v531, 1.050701
        %v548 = vmul.f32 %v532, 1.050701
        %v549 = vmul.f32 %v533, 1.050701
        %v550 = vmul.f32 %v534, 1.050701
        %v551 = vmul.f32 %v535, 1.050701
        %v552 = vld [vmem:[%s315] sm:$0xf]
        %v553 = vld [vmem:[%s315 + $0x4] sm:$0xf]
        %v554 = vld [vmem:[%s315 + $0x8] sm:$0xf]
        %v555 = vld [vmem:[%s315 + $0xc] sm:$0xf]
        %v556 = vld [vmem:[%s315 + $0x10] sm:$0xf]
        %v557 = vld [vmem:[%s315 + $0x14] sm:$0xf]
        %v558 = vld [vmem:[%s315 + $0x18] sm:$0xf]
        %v559 = vld [vmem:[%s315 + $0x1c] sm:$0xf]
        %v560 = vld [vmem:[%s315 + $0x20] sm:$0xf]
        %v561 = vld [vmem:[%s315 + $0x24] sm:$0xf]
        %v562 = vld [vmem:[%s315 + $0x28] sm:$0xf]
        %v563 = vld [vmem:[%s315 + $0x2c] sm:$0xf]
        %v564 = vld [vmem:[%s315 + $0x30] sm:$0xf]
        %v565 = vld [vmem:[%s315 + $0x34] sm:$0xf]
        %v566 = vld [vmem:[%s315 + $0x38] sm:$0xf]
        %v567 = vld [vmem:[%s315 + $0x3c] sm:$0xf]
        %v568 = vunpack.c.l.bf16 %v552
        %v569 = vunpack.c.l.bf16 %v553
        %v570 = vunpack.c.l.bf16 %v554
        %v571 = vunpack.c.l.bf16 %v555
        %v572 = vunpack.c.l.bf16 %v556
        %v573 = vunpack.c.l.bf16 %v557
        %v574 = vunpack.c.l.bf16 %v558
        %v575 = vunpack.c.l.bf16 %v559
        %v576 = vunpack.c.l.bf16 %v560
        %v577 = vunpack.c.l.bf16 %v561
        %v578 = vunpack.c.l.bf16 %v562
        %v579 = vunpack.c.l.bf16 %v563
        %v580 = vunpack.c.l.bf16 %v564
        %v581 = vunpack.c.l.bf16 %v565
        %v582 = vunpack.c.l.bf16 %v566
        %v583 = vunpack.c.l.bf16 %v567
        %v584 = vld [vmem:[%s3] sm:$0x1]
        %v585 = vlaneseq
        %v586 = vshrl.u32 %v585, 7
        %v587 = vsub.s32 0, %v586
        %v588 = vrot.slane %v584, %v587
        %v589 = vmul.f32 %v568, %v588
        %v590 = vmul.f32 %v569, %v588
        %v591 = vmul.f32 %v570, %v588
        %v592 = vmul.f32 %v571, %v588
        %v593 = vmul.f32 %v572, %v588
        %v594 = vmul.f32 %v573, %v588
        %v595 = vmul.f32 %v574, %v588
        %v596 = vmul.f32 %v575, %v588
        %v597 = vmul.f32 %v576, %v588
        %v598 = vmul.f32 %v577, %v588
        %v599 = vmul.f32 %v578, %v588
        %v600 = vmul.f32 %v579, %v588
        %v601 = vmul.f32 %v580, %v588
        %v602 = vmul.f32 %v581, %v588
        %v603 = vmul.f32 %v582, %v588
        %v604 = vmul.f32 %v583, %v588
        %v605 = vld [vmem:[%s3 + $0x1] sm:$0x1]
        %v606 = vlaneseq
        %v607 = vshrl.u32 %v606, 7
        %v608 = vsub.s32 0, %v607
        %v609 = vrot.slane %v605, %v608
        %v610 = vadd.f32 %v589, %v609
        %v611 = vadd.f32 %v590, %v609
        %v612 = vadd.f32 %v591, %v609
        %v613 = vadd.f32 %v592, %v609
        %v614 = vadd.f32 %v593, %v609
        %v615 = vadd.f32 %v594, %v609
        %v616 = vadd.f32 %v595, %v609
        %v617 = vadd.f32 %v596, %v609
        %v618 = vadd.f32 %v597, %v609
        %v619 = vadd.f32 %v598, %v609
        %v620 = vadd.f32 %v599, %v609
        %v621 = vadd.f32 %v600, %v609
        %v622 = vadd.f32 %v601, %v609
        %v623 = vadd.f32 %v602, %v609
        %v624 = vadd.f32 %v603, %v609
        %v625 = vadd.f32 %v604, %v609
        %vm626 = vcmp.gt.f32.partialorder %v610, 0.0
        %vm627 = vcmp.gt.f32.partialorder %v611, 0.0
        %vm628 = vcmp.gt.f32.partialorder %v612, 0.0
        %vm629 = vcmp.gt.f32.partialorder %v613, 0.0
        %vm630 = vcmp.gt.f32.partialorder %v614, 0.0
        %vm631 = vcmp.gt.f32.partialorder %v615, 0.0
        %vm632 = vcmp.gt.f32.partialorder %v616, 0.0
        %vm633 = vcmp.gt.f32.partialorder %v617, 0.0
        %vm634 = vcmp.gt.f32.partialorder %v618, 0.0
        %vm635 = vcmp.gt.f32.partialorder %v619, 0.0
        %vm636 = vcmp.gt.f32.partialorder %v620, 0.0
        %vm637 = vcmp.gt.f32.partialorder %v621, 0.0
        %vm638 = vcmp.gt.f32.partialorder %v622, 0.0
        %vm639 = vcmp.gt.f32.partialorder %v623, 0.0
        %vm640 = vcmp.gt.f32.partialorder %v624, 0.0
        %vm641 = vcmp.gt.f32.partialorder %v625, 0.0
        %v642 = vmul.f32 %v610, 1.442695
        %v643 = vpow.pop %v642
        %v644 = vmul.f32 %v611, 1.442695
        %v645 = vpow.pop %v644
        %v646 = vmul.f32 %v612, 1.442695
        %v647 = vpow.pop %v646
        %v648 = vmul.f32 %v613, 1.442695
        %v649 = vpow.pop %v648
        %v650 = vmul.f32 %v614, 1.442695
        %v651 = vpow.pop %v650
        %v652 = vmul.f32 %v615, 1.442695
        %v653 = vpow.pop %v652
        %v654 = vmul.f32 %v616, 1.442695
        %v655 = vpow.pop %v654
        %v656 = vmul.f32 %v617, 1.442695
        %v657 = vpow.pop %v656
        %v658 = vmul.f32 %v618, 1.442695
        %v659 = vpow.pop %v658
        %v660 = vmul.f32 %v619, 1.442695
        %v661 = vpow.pop %v660
        %v662 = vmul.f32 %v620, 1.442695
        %v663 = vpow.pop %v662
        %v664 = vmul.f32 %v621, 1.442695
        %v665 = vpow.pop %v664
        %v666 = vmul.f32 %v622, 1.442695
        %v667 = vpow.pop %v666
        %v668 = vmul.f32 %v623, 1.442695
        %v669 = vpow.pop %v668
        %v670 = vmul.f32 %v624, 1.442695
        %v671 = vpow.pop %v670
        %v672 = vmul.f32 %v625, 1.442695
        %v673 = vpow.pop %v672
        %v674 = vsub.f32 %v643, 1.0
        %v675 = vsub.f32 %v645, 1.0
        %v676 = vsub.f32 %v647, 1.0
        %v677 = vsub.f32 %v649, 1.0
        %v678 = vsub.f32 %v651, 1.0
        %v679 = vsub.f32 %v653, 1.0
        %v680 = vsub.f32 %v655, 1.0
        %v681 = vsub.f32 %v657, 1.0
        %v682 = vsub.f32 %v659, 1.0
        %v683 = vsub.f32 %v661, 1.0
        %v684 = vsub.f32 %v663, 1.0
        %v685 = vsub.f32 %v665, 1.0
        %v686 = vsub.f32 %v667, 1.0
        %v687 = vsub.f32 %v669, 1.0
        %v688 = vsub.f32 %v671, 1.0
        %v689 = vsub.f32 %v673, 1.0
        %v690 = vmul.f32 %v674, 1.6732632
        %v691 = vmul.f32 %v675, 1.6732632
        %v692 = vmul.f32 %v676, 1.6732632
        %v693 = vmul.f32 %v677, 1.6732632
        %v694 = vmul.f32 %v678, 1.6732632
        %v695 = vmul.f32 %v679, 1.6732632
        %v696 = vmul.f32 %v680, 1.6732632
        %v697 = vmul.f32 %v681, 1.6732632
        %v698 = vmul.f32 %v682, 1.6732632
        %v699 = vmul.f32 %v683, 1.6732632
        %v700 = vmul.f32 %v684, 1.6732632
        %v701 = vmul.f32 %v685, 1.6732632
        %v702 = vmul.f32 %v686, 1.6732632
        %v703 = vmul.f32 %v687, 1.6732632
        %v704 = vmul.f32 %v688, 1.6732632
        %v705 = vmul.f32 %v689, 1.6732632
        %v706 = vsel %vm626, %v610, %v690
        %v707 = vsel %vm627, %v611, %v691
        %v708 = vsel %vm628, %v612, %v692
        %v709 = vsel %vm629, %v613, %v693
        %v710 = vsel %vm630, %v614, %v694
        %v711 = vsel %vm631, %v615, %v695
        %v712 = vsel %vm632, %v616, %v696
        %v713 = vsel %vm633, %v617, %v697
        %v714 = vsel %vm634, %v618, %v698
        %v715 = vsel %vm635, %v619, %v699
        %v716 = vsel %vm636, %v620, %v700
        %v717 = vsel %vm637, %v621, %v701
        %v718 = vsel %vm638, %v622, %v702
        %v719 = vsel %vm639, %v623, %v703
        %v720 = vsel %vm640, %v624, %v704
        %v721 = vsel %vm641, %v625, %v705
        %v722 = vmul.f32 %v706, 1.050701
        %v723 = vmul.f32 %v707, 1.050701
        %v724 = vmul.f32 %v708, 1.050701
        %v725 = vmul.f32 %v709, 1.050701
        %v726 = vmul.f32 %v710, 1.050701
        %v727 = vmul.f32 %v711, 1.050701
        %v728 = vmul.f32 %v712, 1.050701
        %v729 = vmul.f32 %v713, 1.050701
        %v730 = vmul.f32 %v714, 1.050701
        %v731 = vmul.f32 %v715, 1.050701
        %v732 = vmul.f32 %v716, 1.050701
        %v733 = vmul.f32 %v717, 1.050701
        %v734 = vmul.f32 %v718, 1.050701
        %v735 = vmul.f32 %v719, 1.050701
        %v736 = vmul.f32 %v720, 1.050701
        %v737 = vmul.f32 %v721, 1.050701
        %v738 = vadd.f32 %v536, %v722
        %v739 = vadd.f32 %v537, %v723
        %v740 = vadd.f32 %v538, %v724
        %v741 = vadd.f32 %v539, %v725
        %v742 = vadd.f32 %v540, %v726
        %v743 = vadd.f32 %v541, %v727
        %v744 = vadd.f32 %v542, %v728
        %v745 = vadd.f32 %v543, %v729
        %v746 = vadd.f32 %v544, %v730
        %v747 = vadd.f32 %v545, %v731
        %v748 = vadd.f32 %v546, %v732
        %v749 = vadd.f32 %v547, %v733
        %v750 = vadd.f32 %v548, %v734
        %v751 = vadd.f32 %v549, %v735
        %v752 = vadd.f32 %v550, %v736
        %v753 = vadd.f32 %v551, %v737
        %v754 = vpack.c.bf16 %v739, %v738
        %v755 = vpack.c.bf16 %v741, %v740
        %v756 = vpack.c.bf16 %v743, %v742
        %v757 = vpack.c.bf16 %v745, %v744
        %v758 = vpack.c.bf16 %v747, %v746
        %v759 = vpack.c.bf16 %v749, %v748
        %v760 = vpack.c.bf16 %v751, %v750
        %v761 = vpack.c.bf16 %v753, %v752
        %v770 = vunpack.c.l.b16 %v754
        %v771 = vunpack.c.h.b16 %v754
        %v772 = vunpack.c.l.b16 %v755
        %v773 = vunpack.c.h.b16 %v755
        %v774 = vunpack.c.l.b16 %v756
        %v775 = vunpack.c.h.b16 %v756
        %v776 = vunpack.c.l.b16 %v757
        %v777 = vunpack.c.h.b16 %v757
        %v778 = vunpack.c.l.b16 %v758
        %v779 = vunpack.c.h.b16 %v758
        %v780 = vunpack.c.l.b16 %v759
        %v781 = vunpack.c.h.b16 %v759
        %v782 = vunpack.c.l.b16 %v760
        %v783 = vunpack.c.h.b16 %v760
        %v784 = vunpack.c.l.b16 %v761
        %v785 = vunpack.c.h.b16 %v761
        %v786 = vpack.c.b16 %v770, %v770
        %v787 = vpack.c.b16 %v771, %v771
        %v788 = vpack.c.b16 %v772, %v772
        %v789 = vpack.c.b16 %v773, %v773
        %v790 = vpack.c.b16 %v774, %v774
        %v791 = vpack.c.b16 %v775, %v775
        %v792 = vpack.c.b16 %v776, %v776
        %v793 = vpack.c.b16 %v777, %v777
        %v794 = vpack.c.b16 %v778, %v778
        %v795 = vpack.c.b16 %v779, %v779
        %v796 = vpack.c.b16 %v780, %v780
        %v797 = vpack.c.b16 %v781, %v781
        %v798 = vpack.c.b16 %v782, %v782
        %v799 = vpack.c.b16 %v783, %v783
        %v800 = vpack.c.b16 %v784, %v784
        %v801 = vpack.c.b16 %v785, %v785
        %818 = vst [vmem:[%s360] sm:$0xf] %v786
        %819 = vst [vmem:[%s360 + $0x4] sm:$0xf] %v787
        %820 = vst [vmem:[%s360 + $0x8] sm:$0xf] %v788
        %821 = vst [vmem:[%s360 + $0xc] sm:$0xf] %v789
        %822 = vst [vmem:[%s360 + $0x10] sm:$0xf] %v790
        %823 = vst [vmem:[%s360 + $0x14] sm:$0xf] %v791
        %824 = vst [vmem:[%s360 + $0x18] sm:$0xf] %v792
        %825 = vst [vmem:[%s360 + $0x1c] sm:$0xf] %v793
        %826 = vst [vmem:[%s360 + $0x20] sm:$0xf] %v794
        %827 = vst [vmem:[%s360 + $0x24] sm:$0xf] %v795
        %828 = vst [vmem:[%s360 + $0x28] sm:$0xf] %v796
        %829 = vst [vmem:[%s360 + $0x2c] sm:$0xf] %v797
        %830 = vst [vmem:[%s360 + $0x30] sm:$0xf] %v798
        %831 = vst [vmem:[%s360 + $0x34] sm:$0xf] %v799
        %832 = vst [vmem:[%s360 + $0x38] sm:$0xf] %v800
        %833 = vst [vmem:[%s360 + $0x3c] sm:$0xf] %v801
        %v834 = vadd.f32 %v738, %v739
        %v835 = vadd.f32 %v834, %v740
        %v836 = vadd.f32 %v835, %v741
        %v837 = vadd.f32 %v836, %v742
        %v838 = vadd.f32 %v837, %v743
        %v839 = vadd.f32 %v838, %v744
        %v840 = vadd.f32 %v839, %v745
        %v841 = vadd.f32 %v840, %v746
        %v842 = vadd.f32 %v841, %v747
        %v843 = vadd.f32 %v842, %v748
        %v844 = vadd.f32 %v843, %v749
        %v845 = vadd.f32 %v844, %v750
        %v846 = vadd.f32 %v845, %v751
        %v847 = vadd.f32 %v846, %v752
        %v848 = vadd.f32 %v847, %v753
        %v849 = vrot.slane %v848, 4
        %v850 = vadd.f32 %v848, %v849
        %v851 = vrot.slane %v850, 2
        %v852 = vadd.f32 %v850, %v851
        %v853 = vrot.slane %v852, 1
        %v854 = vadd.f32 %v852, %v853
        %855 = vst [vmem:[%s365] sm:$0x1] %v854
        %v856 = vmul.f32 %v738, %v738
        %v857 = vmul.f32 %v739, %v739
        %v858 = vmul.f32 %v740, %v740
        %v859 = vmul.f32 %v741, %v741
        %v860 = vmul.f32 %v742, %v742
        %v861 = vmul.f32 %v743, %v743
        %v862 = vmul.f32 %v744, %v744
        %v863 = vmul.f32 %v745, %v745
        %v864 = vmul.f32 %v746, %v746
        %v865 = vmul.f32 %v747, %v747
        %v866 = vmul.f32 %v748, %v748
        %v867 = vmul.f32 %v749, %v749
        %v868 = vmul.f32 %v750, %v750
        %v869 = vmul.f32 %v751, %v751
        %v870 = vmul.f32 %v752, %v752
        %v871 = vmul.f32 %v753, %v753
        %v872 = vadd.f32 %v856, %v857
        %v873 = vadd.f32 %v872, %v858
        %v874 = vadd.f32 %v873, %v859
        %v875 = vadd.f32 %v874, %v860
        %v876 = vadd.f32 %v875, %v861
        %v877 = vadd.f32 %v876, %v862
        %v878 = vadd.f32 %v877, %v863
        %v879 = vadd.f32 %v878, %v864
        %v880 = vadd.f32 %v879, %v865
        %v881 = vadd.f32 %v880, %v866
        %v882 = vadd.f32 %v881, %v867
        %v883 = vadd.f32 %v882, %v868
        %v884 = vadd.f32 %v883, %v869
        %v885 = vadd.f32 %v884, %v870
        %v886 = vadd.f32 %v885, %v871
        %v887 = vrot.slane %v886, 4
        %v888 = vadd.f32 %v886, %v887
        %v889 = vrot.slane %v888, 2
        %v890 = vadd.f32 %v888, %v889
        %v891 = vrot.slane %v890, 1
        %v892 = vadd.f32 %v890, %v891
        %893 = vst [vmem:[%s365 + $0x1] sm:$0x1] %v892
        %s894 = smul.u32 16, %s17
        %p895 = scmp.lt.s32.totalorder %s894, 31
        %s896 = scalar_select %p895, %s894, 31
        %s897 = smul.addr %s896, 4
        %s898 = scalar_lea.vmem %s4, %s897
        %p899 = scmp.lt.s32.totalorder %s17, 1
        %s900 = scalar_select %p899, %s17, 1
        %s901 = smul.addr %s900, 2
        %s902 = scalar_lea.vmem %s5, %s901
        // Predicated region
        $region78: #{_lambda_.6} parent=72 // pred_check
          %p903 = pneg %p129
        $region79: #{_lambda_.6} parent=72 // pred_check_branch
          %905 = sbr.rel (%p903) target = $region81
        $region80: #{_lambda_.6} parent=72 // pred_region
          %s906 = smul.u32 16, %s17
        $region81: #{_lambda_.6} parent=72 // pred_fallthru
          _
        // Predicated region
        $region82: #{_lambda_.6} parent=72 // pred_check
          %p907 = pneg %p155
        $region83: #{_lambda_.6} parent=72 // pred_check_branch
          %909 = sbr.rel (%p907) target = $region85
        $region84: #{_lambda_.6} parent=72 // pred_region
          _
        $region85: #{_lambda_.6} parent=72 // pred_fallthru
          _
      $region73: #{_lambda_.6} parent=5 // pred_fallthru
        _
      %p910 = scmp.le.s32.totalorder 2, %s12
      // Predicated region
      $region86: #{_lambda_.6} parent=5 // pred_check
        %p911 = pneg %p910
      $region87: #{_lambda_.6} parent=5 // pred_check_branch
        %913 = sbr.rel (%p911) target = $region89
      $region88: #{_lambda_.6} parent=5 // pred_region
        %s914 = ssub.s32 %s12, 2
        // Predicated region
        $region90: #{_lambda_.6} parent=88 // pred_check
          %p915 = pneg %p135
        $region91: #{_lambda_.6} parent=88 // pred_check_branch
          %917 = sbr.rel (%p915) target = $region93
        $region92: #{_lambda_.6} parent=88 // pred_region
          %s918 = smul.u32 16, %s18
          %p919 = scmp.lt.s32.totalorder %s918, 31
          %s920 = scalar_select %p919, %s918, 31
          %s921 = smul.addr %s920, 4
          %s922 = scalar_lea.vmem %s4, %s921
        $region93: #{_lambda_.6} parent=88 // pred_fallthru
          _
        // Predicated region
        $region94: #{_lambda_.6} parent=88 // pred_check
          %p923 = pneg %p161
        $region95: #{_lambda_.6} parent=88 // pred_check_branch
          %925 = sbr.rel (%p923) target = $region97
        $region96: #{_lambda_.6} parent=88 // pred_region
          %p926 = scmp.lt.s32.totalorder %s18, 1
          %s927 = scalar_select %p926, %s18, 1
          %s928 = smul.addr %s927, 2
          %s929 = scalar_lea.vmem %s5, %s928
        $region97: #{_lambda_.6} parent=88 // pred_fallthru
          _
      $region89: #{_lambda_.6} parent=5 // pred_fallthru
        _
    $region6: #{_lambda_.6} parent=1 // loop_footer
      %s16 = sadd.s32 1, %s12
    $region7: #{_lambda_.6} parent=1 // loop_footer_branch
      %11 = sbr.rel target = $region3
    $region8: #{_lambda_.6} parent=1 // loop_exit
      _

</llo_original>
